<compile_context>
chip_gen: v6e
topology: v6e:2x2x1
jax: 0.10.0
libtpu: 0.0.40
codegen_flags: <defaults>
</compile_context>

<pallas_src>
import functools

import jax
import jax.numpy as jnp
from jax.experimental import pallas as pl
from jax.experimental.pallas import tpu as pltpu


# Tile sizes. 128 is plenty for the small demo; at large N prefer 256-1024
# (bigger A tiles amortize the ~0.35us/step overhead) while keeping
#   2 * tm*tk*2B (double-buffered bf16 A tiles) + tm*2H*4B (acc) + outputs
# under the scoped VMEM limit (v7x has only 64 MiB physical / 32 MiB scoped).
_TM = 128   # node-row tile (output rows of A @ H)
_TK = 128   # node-column tile (K reduction over neighbours)
_TR = 128   # row tile for the feature-matmul / loss kernels


def _round_up(x, m):
    return (x + m - 1) // m * m


def _softplus(x):
    # log(1 + exp(x)) computed stably: max(x,0) + log1p(exp(-|x|))
    return jnp.maximum(x, 0.0) + jnp.log1p(jnp.exp(-jnp.abs(x)))


# ---------------------------------------------------------------------------
# Kernel 1: fused pos/neg feature matmul.
#   HCAT[i, :H] = (x_pos @ W)[i]     HCAT[i, H:] = (x_neg @ W)[i]
# Output is bf16 and lane-concatenated so it feeds the adjacency matmul as a
# single wide RHS.
# ---------------------------------------------------------------------------
def _feat_kernel(xp_ref, xn_ref, w_ref, hcat_ref):
    w = w_ref[...]
    hp = jnp.dot(xp_ref[...], w, preferred_element_type=jnp.float32)
    hn = jnp.dot(xn_ref[...], w, preferred_element_type=jnp.float32)
    hcat_ref[...] = jnp.concatenate([hp, hn], axis=-1).astype(hcat_ref.dtype)


def _feat_matmul(xp, xn, w):
    n_pad, f_pad = xp.shape
    h_pad = w.shape[1]
    return pl.pallas_call(
        _feat_kernel,
        out_shape=jax.ShapeDtypeStruct((n_pad, 2 * h_pad), jnp.bfloat16),
        grid_spec=pltpu.PrefetchScalarGridSpec(
            num_scalar_prefetch=0,
            grid=(n_pad // _TR,),
            in_specs=[
                pl.BlockSpec((_TR, f_pad), lambda i: (i, 0)),
                pl.BlockSpec((_TR, f_pad), lambda i: (i, 0)),
                pl.BlockSpec((f_pad, h_pad), lambda i: (0, 0)),
            ],
            out_specs=pl.BlockSpec((_TR, 2 * h_pad), lambda i: (i, 0)),
        ),
        compiler_params=pltpu.CompilerParams(
            dimension_semantics=("parallel",)),
    )(xp, xn, w)


# ---------------------------------------------------------------------------
# Kernel 2: fused pos/neg graph aggregation (one GCN layer's A-matmul).
#   [pos | neg] = relu(A @ HCAT + [b | b])
# Tiled over (row tile i, K tile k) with a VMEM f32 accumulator (P3 pattern).
# ---------------------------------------------------------------------------
def _aggr_kernel(a_ref, hcat_ref, b_ref, pos_ref, neg_ref, acc_ref):
    k = pl.program_id(1)

    @pl.when(k == 0)
    def _init():
        acc_ref[...] = jnp.zeros_like(acc_ref)

    # Single wide MXU dot: (tm, tk) bf16 @ (tk, 2H) bf16 -> f32 accumulate.
    acc_ref[...] += jnp.dot(a_ref[...], hcat_ref[...],
                            preferred_element_type=jnp.float32)

    @pl.when(k == pl.num_programs(1) - 1)
    def _finalize():
        h = acc_ref[...]
        hdim = pos_ref.shape[-1]
        b = b_ref[...]
        pos_ref[...] = jnp.maximum(h[:, :hdim] + b, 0.0).astype(pos_ref.dtype)
        neg_ref[...] = jnp.maximum(h[:, hdim:] + b, 0.0).astype(neg_ref.dtype)


def _gcn_aggregate(a_bf16, hcat, b):
    n_pad = a_bf16.shape[0]
    h_pad = b.shape[1]
    out_sd = jax.ShapeDtypeStruct((n_pad, h_pad), jnp.float32)
    return pl.pallas_call(
        _aggr_kernel,
        out_shape=(out_sd, out_sd),
        grid_spec=pltpu.PrefetchScalarGridSpec(
            num_scalar_prefetch=0,
            grid=(n_pad // _TM, n_pad // _TK),
            in_specs=[
                pl.BlockSpec((_TM, _TK), lambda i, k: (i, k)),        # A tile
                pl.BlockSpec((_TK, 2 * h_pad), lambda i, k: (k, 0)),  # HCAT
                pl.BlockSpec((1, h_pad), lambda i, k: (0, 0)),        # bias
            ],
            out_specs=(
                pl.BlockSpec((_TM, h_pad), lambda i, k: (i, 0)),      # pos
                pl.BlockSpec((_TM, h_pad), lambda i, k: (i, 0)),      # neg
            ),
            scratch_shapes=[pltpu.VMEM((_TM, 2 * h_pad), jnp.float32)],
        ),
        compiler_params=pltpu.CompilerParams(
            dimension_semantics=("parallel", "arbitrary")),
    )(a_bf16, hcat, b)


# ---------------------------------------------------------------------------
# Kernel 3: DGI readout + discriminator + BCE-with-logits loss.
# Two-phase grid (phase, row tile):
#   phase 0: column sums of pos via a masked ones-row matmul (MXU, not XLU).
#   phase 1: t = W_disc @ sigmoid(colsum / N); per-tile logits and partial
#            softplus sums accumulated in (1,1) VMEM scratch; final mean.
# ---------------------------------------------------------------------------
def _loss_kernel(pos_ref, neg_ref, wd_ref, loss_ref,
                 colsum_ref, t_ref, lpos_ref, lneg_ref, *, n_valid):
    phase = pl.program_id(0)
    r = pl.program_id(1)
    tm = pos_ref.shape[0]

    @pl.when(jnp.logical_and(phase == 0, r == 0))
    def _init():
        colsum_ref[...] = jnp.zeros_like(colsum_ref)

    @pl.when(phase == 0)
    def _colsum():
        # Masked ones-row so zero-padded node rows do not pollute the mean.
        lane_row = r * tm + jax.lax.broadcasted_iota(jnp.int32, (1, tm), 1)
        ones = (lane_row < n_valid).astype(jnp.float32)          # (1, tm)
        colsum_ref[...] += jnp.dot(ones, pos_ref[...],
                                   preferred_element_type=jnp.float32)

    @pl.when(jnp.logical_and(phase == 1, r == 0))
    def _summary():
        summary = jax.nn.sigmoid(colsum_ref[...] * (1.0 / n_valid))  # (1, H)
        # t[0, i] = sum_j W_disc[i, j] * summary[0, j] == (W_disc @ summary)^T
        t_ref[...] = jax.lax.dot_general(
            summary, wd_ref[...], (((1,), (1,)), ((), ())),
            preferred_element_type=jnp.float32)
        lpos_ref[...] = jnp.zeros_like(lpos_ref)
        lneg_ref[...] = jnp.zeros_like(lneg_ref)

    @pl.when(phase == 1)
    def _partial_loss():
        t = t_ref[...]                                               # (1, H)
        row_id = r * tm + jax.lax.broadcasted_iota(jnp.int32, (tm, 1), 0)
        valid = (row_id < n_valid).astype(jnp.float32)               # (tm, 1)
        pos_l = jnp.sum(pos_ref[...] * t, axis=-1, keepdims=True)    # (tm, 1)
        neg_l = jnp.sum(neg_ref[...] * t, axis=-1, keepdims=True)
        # BCEWithLogits: target 1 -> softplus(-x); target 0 -> softplus(x)
        lpos_ref[...] += jnp.sum(valid * _softplus(-pos_l),
                                 axis=0, keepdims=True)
        lneg_ref[...] += jnp.sum(valid * _softplus(neg_l),
                                 axis=0, keepdims=True)

    @pl.when(jnp.logical_and(phase == 1, r == pl.num_programs(1) - 1))
    def _finalize():
        loss_ref[...] = (lpos_ref[...] + lneg_ref[...]) * (1.0 / n_valid)


def _dgi_loss(pos, neg, w_disc_pad, n_valid):
    n_pad, h_pad = pos.shape
    kernel = functools.partial(_loss_kernel, n_valid=n_valid)
    out = pl.pallas_call(
        kernel,
        out_shape=jax.ShapeDtypeStruct((1, 1), jnp.float32),
        grid_spec=pltpu.PrefetchScalarGridSpec(
            num_scalar_prefetch=0,
            grid=(2, n_pad // _TR),
            in_specs=[
                pl.BlockSpec((_TR, h_pad), lambda p, r: (r, 0)),
                pl.BlockSpec((_TR, h_pad), lambda p, r: (r, 0)),
                pl.BlockSpec((h_pad, h_pad), lambda p, r: (0, 0)),
            ],
            out_specs=pl.BlockSpec((1, 1), lambda p, r: (0, 0)),
            scratch_shapes=[
                pltpu.VMEM((1, h_pad), jnp.float32),   # column sums of pos
                pltpu.VMEM((1, h_pad), jnp.float32),   # t = W_disc @ summary
                pltpu.VMEM((1, 1), jnp.float32),       # sum softplus(-pos_logits)
                pltpu.VMEM((1, 1), jnp.float32),       # sum softplus(+neg_logits)
            ],
        ),
        compiler_params=pltpu.CompilerParams(
            dimension_semantics=("arbitrary", "arbitrary")),
    )(pos, neg, w_disc_pad)
    return out[0, 0]


# ---------------------------------------------------------------------------
# Wrapper: pad to MXU/lane-friendly shapes, cast A to bf16, chain the kernels.
# ---------------------------------------------------------------------------
def dgi_forward(a_norm, x, x_corrupt, w1, b1, w2, b2, w_disc):
    """Full DGI forward. Returns the scalar BCE loss (f32)."""
    n, f = x.shape
    h = w1.shape[1]
    n_pad = _round_up(n, max(_TM, _TK, _TR))
    f_pad = _round_up(f, 128)
    h_pad = _round_up(h, 128)

    # Zero padding is exact: padded feature/hidden lanes stay identically zero
    # through both layers, padded W_disc rows/cols zero out the sigmoid(0)=0.5
    # of padded summary lanes, and padded node rows are masked in the loss.
    def pf(m, rows, cols):
        return jnp.pad(m, ((0, rows - m.shape[0]), (0, cols - m.shape[1])))

    a_p = pf(a_norm, n_pad, n_pad).astype(jnp.bfloat16)  # dominant O(N^2) array
    xp_p = pf(x, n_pad, f_pad).astype(jnp.float32)
    xn_p = pf(x_corrupt, n_pad, f_pad).astype(jnp.float32)
    w1_p = pf(w1, f_pad, h_pad)
    w2_p = pf(w2, h_pad, h_pad)
    wd_p = pf(w_disc, h_pad, h_pad)
    b1_p = pf(b1.reshape(1, -1), 1, h_pad)
    b2_p = pf(b2.reshape(1, -1), 1, h_pad)

    # Layer 1:  [pos1 | neg1] = relu(A @ [x@W1 | xc@W1] + b1)
    hcat1 = _feat_matmul(xp_p, xn_p, w1_p)
    pos1, neg1 = _gcn_aggregate(a_p, hcat1, b1_p)
    # (dropout between layers: identity in eval mode)
    # Layer 2:  [pos2 | neg2] = relu(A @ [pos1@W2 | neg1@W2] + b2)
    hcat2 = _feat_matmul(pos1, neg1, w2_p)
    pos2, neg2 = _gcn_aggregate(a_p, hcat2, b2_p)
    # Readout + discriminator + BCE loss.
    return _dgi_loss(pos2, neg2, wd_p, n_valid=n)


# ---------------------------------------------------------------------------
# Glue + reference
# ---------------------------------------------------------------------------
def build_normalized_adjacency(edge_index, num_nodes):
    """Dense GCN normalization: D^-1/2 (A + I) D^-1/2 (undirected graph)."""
    src, dst = edge_index
    A = jnp.zeros((num_nodes, num_nodes), jnp.float32)
    A = A.at[src, dst].set(1.0)
    A = jnp.maximum(A, A.T)                        # symmetrize
    A = A + jnp.eye(num_nodes, dtype=jnp.float32)  # self loops
    deg = jnp.sum(A, axis=1)
    d_inv_sqrt = jnp.where(deg > 0, 1.0 / jnp.sqrt(deg), 0.0)
    return d_inv_sqrt[:, None] * A * d_inv_sqrt[None, :]


def dgi_reference(a_norm, x, x_corrupt, w1, b1, w2, b2, w_disc):
    """Pure-JAX f32 reference for correctness check."""
    def gcn(hh):
        hh = jax.nn.relu(a_norm @ (hh @ w1) + b1)
        hh = jax.nn.relu(a_norm @ (hh @ w2) + b2)
        return hh
    pos = gcn(x)
    neg = gcn(x_corrupt)
    summary = jax.nn.sigmoid(pos.mean(axis=0))
    pos_l = pos @ (w_disc @ summary)
    neg_l = neg @ (w_disc @ summary)
    l1 = jnp.mean(jnp.maximum(-pos_l, 0) + jnp.log1p(jnp.exp(-jnp.abs(pos_l))))
    l2 = jnp.mean(jnp.maximum(neg_l, 0) + jnp.log1p(jnp.exp(-jnp.abs(neg_l))))
    return l1 + l2


if __name__ == "__main__":
    # Small shapes consistent with DGI(in_feats, n_hidden, n_layers=2, dropout).
    # N is deliberately NOT a multiple of 128 to exercise the padding/mask path.
    N_NODES, IN_FEATS, N_HIDDEN = 200, 48, 32

    key = jax.random.PRNGKey(0)
    k_x, k_e, k_perm, k_w1, k_w2, k_wd = jax.random.split(key, 6)

    x = jax.random.normal(k_x, (N_NODES, IN_FEATS), jnp.float32)
    n_edges = 400
    edge_index = jax.random.randint(k_e, (2, n_edges), 0, N_NODES)
    a_norm = build_normalized_adjacency(edge_index, N_NODES)

    # corrupted input: random row permutation (Encoder(corrupt=True))
    perm = jax.random.permutation(k_perm, N_NODES)
    x_corrupt = x[perm]

    def glorot(k, fan_in, fan_out):
        lim = jnp.sqrt(6.0 / (fan_in + fan_out))
        return jax.random.uniform(k, (fan_in, fan_out), jnp.float32, -lim, lim)

    w1 = glorot(k_w1, IN_FEATS, N_HIDDEN)
    b1 = jnp.zeros((N_HIDDEN,), jnp.float32)
    w2 = glorot(k_w2, N_HIDDEN, N_HIDDEN)
    b2 = jnp.zeros((N_HIDDEN,), jnp.float32)
    bound = 1.0 / jnp.sqrt(jnp.float32(N_HIDDEN))
    w_disc = jax.random.uniform(k_wd, (N_HIDDEN, N_HIDDEN), jnp.float32,
                                -bound, bound)

    loss = jax.jit(dgi_forward)(a_norm, x, x_corrupt, w1, b1, w2, b2, w_disc)
    loss = jax.block_until_ready(loss)

    ref = dgi_reference(a_norm, x, x_corrupt, w1, b1, w2, b2, w_disc)
    # bf16 adjacency / hidden path -> relaxed tolerance vs. the f32 reference.
    assert jnp.allclose(loss, ref, rtol=5e-2, atol=5e-2), (loss, ref)

    print("KERNEL_OK")
</pallas_src>

<mosaic_0001>
module attributes {stable_mosaic.version = 11 : i64} {
  func.func @_feat_kernel(%arg0: i32, %arg1: memref<128x128xf32, #tpu.memory_space<vmem>>, %arg2: memref<128x128xf32, #tpu.memory_space<vmem>>, %arg3: memref<128x128xf32, #tpu.memory_space<vmem>>, %arg4: memref<128x256xbf16, #tpu.memory_space<vmem>>) attributes {dimension_semantics = [#tpu.dimension_semantics<parallel>], iteration_bounds = array<i64: 2>, scalar_prefetch = 0 : i64, scratch_operands = 0 : i64, tpu.core_type = #tpu.core_type<tc>, window_params = [{transform_indices = @transform_0, window_bounds = array<i64: 128, 128>}, {transform_indices = @transform_1, window_bounds = array<i64: 128, 128>}, {pipeline_mode = #tpu.pipeline_mode<synchronous>, transform_indices = @transform_2, window_bounds = array<i64: 128, 128>}, {transform_indices = @transform_3, window_bounds = array<i64: 128, 256>}]} {
    %c0 = arith.constant 0 : index
    %c0_0 = arith.constant 0 : index
    %0 = vector.load %arg3[%c0, %c0_0] : memref<128x128xf32, #tpu.memory_space<vmem>>, vector<128x128xf32>
    %c0_1 = arith.constant 0 : index
    %c0_2 = arith.constant 0 : index
    %1 = vector.load %arg1[%c0_1, %c0_2] : memref<128x128xf32, #tpu.memory_space<vmem>>, vector<128x128xf32>
    %cst = arith.constant dense<0.000000e+00> : vector<128x128xf32>
    %2 = tpu.matmul %1, %0, %cst {dimension_numbers = #tpu.dot_dimension_numbers<[1], [0], [0], [1], [0, 0, 1, 1], [], []>} : vector<128x128xf32>, vector<128x128xf32>, vector<128x128xf32> -> vector<128x128xf32>
    %c0_3 = arith.constant 0 : index
    %c0_4 = arith.constant 0 : index
    %3 = vector.load %arg2[%c0_3, %c0_4] : memref<128x128xf32, #tpu.memory_space<vmem>>, vector<128x128xf32>
    %cst_5 = arith.constant dense<0.000000e+00> : vector<128x128xf32>
    %4 = tpu.matmul %3, %0, %cst_5 {dimension_numbers = #tpu.dot_dimension_numbers<[1], [0], [0], [1], [0, 0, 1, 1], [], []>} : vector<128x128xf32>, vector<128x128xf32>, vector<128x128xf32> -> vector<128x128xf32>
    %5 = tpu.concatenate %2, %4 in 1 : vector<128x128xf32>, vector<128x128xf32> -> vector<128x256xf32>
    %6 = arith.truncf %5 : vector<128x256xf32> to vector<128x256xbf16>
    %c0_6 = arith.constant 0 : index
    %c0_7 = arith.constant 0 : index
    %7 = vector.load %arg4[%c0_6, %c0_7] : memref<128x256xbf16, #tpu.memory_space<vmem>>, vector<128x256xbf16>
    tpu.vector_store %arg4[%c0_6, %c0_7], %6 {strides = array<i32>} : memref<128x256xbf16, #tpu.memory_space<vmem>>, vector<128x256xbf16>,
    return
  }
  func.func @transform_0(%arg0: i32) -> (i32, i32) {
    %c0_i32 = arith.constant 0 : i32
    %c0_i32_0 = arith.constant 0 : i32
    return %arg0, %c0_i32 : i32, i32
  }
  func.func @transform_1(%arg0: i32) -> (i32, i32) {
    %c0_i32 = arith.constant 0 : i32
    %c0_i32_0 = arith.constant 0 : i32
    return %arg0, %c0_i32 : i32, i32
  }
  func.func @transform_2(%arg0: i32) -> (i32, i32) {
    %c0_i32 = arith.constant 0 : i32
    %c0_i32_0 = arith.constant 0 : i32
    %c0_i32_1 = arith.constant 0 : i32
    return %c0_i32, %c0_i32_0 : i32, i32
  }
  func.func @transform_3(%arg0: i32) -> (i32, i32) {
    %c0_i32 = arith.constant 0 : i32
    %c0_i32_0 = arith.constant 0 : i32
    return %arg0, %c0_i32 : i32, i32
  }
}

module attributes {stable_mosaic.version = 11 : i64} {
  func.func @_aggr_kernel(%arg0: i32, %arg1: i32, %arg2: memref<128x128xbf16, #tpu.memory_space<vmem>>, %arg3: memref<128x256xbf16, #tpu.memory_space<vmem>>, %arg4: memref<1x128xf32, #tpu.memory_space<vmem>>, %arg5: memref<128x128xf32, #tpu.memory_space<vmem>>, %arg6: memref<128x128xf32, #tpu.memory_space<vmem>>, %arg7: memref<128x256xf32, #tpu.memory_space<vmem>>) attributes {dimension_semantics = [#tpu.dimension_semantics<parallel>, #tpu.dimension_semantics<arbitrary>], iteration_bounds = array<i64: 2, 2>, scalar_prefetch = 0 : i64, scratch_operands = 1 : i64, tpu.core_type = #tpu.core_type<tc>, window_params = [{transform_indices = @transform_0, window_bounds = array<i64: 128, 128>}, {transform_indices = @transform_1, window_bounds = array<i64: 128, 256>}, {pipeline_mode = #tpu.pipeline_mode<synchronous>, transform_indices = @transform_2, window_bounds = array<i64: 1, 128>}, {transform_indices = @transform_3, window_bounds = array<i64: 128, 128>}, {transform_indices = @transform_4, window_bounds = array<i64: 128, 128>}]} {
    %c0_i32 = arith.constant 0 : i32
    %0 = arith.cmpi eq, %arg1, %c0_i32 : i32
    %1 = arith.extui %0 : i1 to i32
    %c0_i32_0 = arith.constant 0 : i32
    %2 = arith.cmpi ne, %1, %c0_i32_0 : i32
    scf.if %2 {
      %cst_9 = arith.constant 0.000000e+00 : f32
      %12 = vector.broadcast %cst_9 : f32 to vector<128x256xf32>
      %c0_10 = arith.constant 0 : index
      %c0_11 = arith.constant 0 : index
      %13 = vector.load %arg7[%c0_10, %c0_11] : memref<128x256xf32, #tpu.memory_space<vmem>>, vector<128x256xf32>
      tpu.vector_store %arg7[%c0_10, %c0_11], %12 {strides = array<i32>} : memref<128x256xf32, #tpu.memory_space<vmem>>, vector<128x256xf32>,
    } else {
    }
    %c0 = arith.constant 0 : index
    %c0_1 = arith.constant 0 : index
    %3 = vector.load %arg7[%c0, %c0_1] : memref<128x256xf32, #tpu.memory_space<vmem>>, vector<128x256xf32>
    %c0_2 = arith.constant 0 : index
    %c0_3 = arith.constant 0 : index
    %4 = vector.load %arg2[%c0_2, %c0_3] : memref<128x128xbf16, #tpu.memory_space<vmem>>, vector<128x128xbf16>
    %c0_4 = arith.constant 0 : index
    %c0_5 = arith.constant 0 : index
    %5 = vector.load %arg3[%c0_4, %c0_5] : memref<128x256xbf16, #tpu.memory_space<vmem>>, vector<128x256xbf16>
    %cst = arith.constant dense<0.000000e+00> : vector<128x256xf32>
    %6 = tpu.matmul %4, %5, %cst {dimension_numbers = #tpu.dot_dimension_numbers<[1], [0], [0], [1], [0, 0, 1, 1], [], []>} : vector<128x128xbf16>, vector<128x256xbf16>, vector<128x256xf32> -> vector<128x256xf32>
    %7 = arith.addf %3, %6 : vector<128x256xf32>
    %c0_6 = arith.constant 0 : index
    %c0_7 = arith.constant 0 : index
    %8 = vector.load %arg7[%c0_6, %c0_7] : memref<128x256xf32, #tpu.memory_space<vmem>>, vector<128x256xf32>
    tpu.vector_store %arg7[%c0_6, %c0_7], %7 {strides = array<i32>} : memref<128x256xf32, #tpu.memory_space<vmem>>, vector<128x256xf32>,
    %c1_i32 = arith.constant 1 : i32
    %9 = arith.cmpi eq, %arg1, %c1_i32 : i32
    %10 = arith.extui %9 : i1 to i32
    %c0_i32_8 = arith.constant 0 : i32
    %11 = arith.cmpi ne, %10, %c0_i32_8 : i32
    scf.if %11 {
      %c0_9 = arith.constant 0 : index
      %c0_10 = arith.constant 0 : index
      %12 = vector.load %arg7[%c0_9, %c0_10] : memref<128x256xf32, #tpu.memory_space<vmem>>, vector<128x256xf32>
      %c0_11 = arith.constant 0 : index
      %c0_12 = arith.constant 0 : index
      %13 = vector.load %arg4[%c0_11, %c0_12] : memref<1x128xf32, #tpu.memory_space<vmem>>, vector<1x128xf32>
      %14 = vector.extract_strided_slice %12 {offsets = [0, 0], sizes = [128, 128], strides = [1, 1]} : vector<128x256xf32> to vector<128x128xf32>
      %15 = vector.broadcast %13 : vector<1x128xf32> to vector<128x128xf32>
      %16 = arith.addf %14, %15 : vector<128x128xf32>
      %cst_13 = arith.constant 0.000000e+00 : f32
      %17 = vector.broadcast %cst_13 : f32 to vector<128x128xf32>
      %18 = arith.maximumf %16, %17 : vector<128x128xf32>
      %c0_14 = arith.constant 0 : index
      %c0_15 = arith.constant 0 : index
      %19 = vector.load %arg5[%c0_14, %c0_15] : memref<128x128xf32, #tpu.memory_space<vmem>>, vector<128x128xf32>
      tpu.vector_store %arg5[%c0_14, %c0_15], %18 {strides = array<i32>} : memref<128x128xf32, #tpu.memory_space<vmem>>, vector<128x128xf32>,
      %20 = vector.extract_strided_slice %12 {offsets = [0, 128], sizes = [128, 128], strides = [1, 1]} : vector<128x256xf32> to vector<128x128xf32>
      %21 = vector.broadcast %13 : vector<1x128xf32> to vector<128x128xf32>
      %22 = arith.addf %20, %21 : vector<128x128xf32>
      %cst_16 = arith.constant 0.000000e+00 : f32
      %23 = vector.broadcast %cst_16 : f32 to vector<128x128xf32>
      %24 = arith.maximumf %22, %23 : vector<128x128xf32>
      %c0_17 = arith.constant 0 : index
      %c0_18 = arith.constant 0 : index
      %25 = vector.load %arg6[%c0_17, %c0_18] : memref<128x128xf32, #tpu.memory_space<vmem>>, vector<128x128xf32>
      tpu.vector_store %arg6[%c0_17, %c0_18], %24 {strides = array<i32>} : memref<128x128xf32, #tpu.memory_space<vmem>>, vector<128x128xf32>,
    } else {
    }
    return
  }
  func.func @transform_0(%arg0: i32, %arg1: i32) -> (i32, i32) {
    %c0_i32 = arith.constant 0 : i32
    return %arg0, %arg1 : i32, i32
  }
  func.func @transform_1(%arg0: i32, %arg1: i32) -> (i32, i32) {
    %c0_i32 = arith.constant 0 : i32
    %c0_i32_0 = arith.constant 0 : i32
    return %arg1, %c0_i32 : i32, i32
  }
  func.func @transform_2(%arg0: i32, %arg1: i32) -> (i32, i32) {
    %c0_i32 = arith.constant 0 : i32
    %c0_i32_0 = arith.constant 0 : i32
    %c0_i32_1 = arith.constant 0 : i32
    return %c0_i32, %c0_i32_0 : i32, i32
  }
  func.func @transform_3(%arg0: i32, %arg1: i32) -> (i32, i32) {
    %c0_i32 = arith.constant 0 : i32
    %c0_i32_0 = arith.constant 0 : i32
    return %arg0, %c0_i32 : i32, i32
  }
  func.func @transform_4(%arg0: i32, %arg1: i32) -> (i32, i32) {
    %c0_i32 = arith.constant 0 : i32
    %c0_i32_0 = arith.constant 0 : i32
    return %arg0, %c0_i32 : i32, i32
  }
}

module attributes {stable_mosaic.version = 11 : i64} {
  func.func @_loss_kernel(%arg0: i32, %arg1: i32, %arg2: memref<128x128xf32, #tpu.memory_space<vmem>>, %arg3: memref<128x128xf32, #tpu.memory_space<vmem>>, %arg4: memref<128x128xf32, #tpu.memory_space<vmem>>, %arg5: memref<1x1xf32, #tpu.memory_space<vmem>>, %arg6: memref<1x128xf32, #tpu.memory_space<vmem>>, %arg7: memref<1x128xf32, #tpu.memory_space<vmem>>, %arg8: memref<1x1xf32, #tpu.memory_space<vmem>>, %arg9: memref<1x1xf32, #tpu.memory_space<vmem>>) attributes {dimension_semantics = [#tpu.dimension_semantics<arbitrary>, #tpu.dimension_semantics<arbitrary>], iteration_bounds = array<i64: 2, 2>, scalar_prefetch = 0 : i64, scratch_operands = 4 : i64, tpu.core_type = #tpu.core_type<tc>, window_params = [{transform_indices = @transform_0, window_bounds = array<i64: 128, 128>}, {transform_indices = @transform_1, window_bounds = array<i64: 128, 128>}, {pipeline_mode = #tpu.pipeline_mode<synchronous>, transform_indices = @transform_2, window_bounds = array<i64: 128, 128>}, {pipeline_mode = #tpu.pipeline_mode<synchronous>, transform_indices = @transform_3, window_bounds = array<i64: 1, 1>}]} {
    %c0_i32 = arith.constant 0 : i32
    %0 = arith.cmpi eq, %arg0, %c0_i32 : i32
    %c0_i32_0 = arith.constant 0 : i32
    %1 = arith.cmpi eq, %arg1, %c0_i32_0 : i32
    %2 = arith.andi %0, %1 : i1
    %3 = arith.extui %2 : i1 to i32
    %c0_i32_1 = arith.constant 0 : i32
    %4 = arith.cmpi ne, %3, %c0_i32_1 : i32
    scf.if %4 {
      %cst = arith.constant 0.000000e+00 : f32
      %21 = vector.broadcast %cst : f32 to vector<1x128xf32>
      %c0 = arith.constant 0 : index
      %c0_11 = arith.constant 0 : index
      %22 = vector.load %arg6[%c0, %c0_11] : memref<1x128xf32, #tpu.memory_space<vmem>>, vector<1x128xf32>
      tpu.vector_store %arg6[%c0, %c0_11], %21 {strides = array<i32>} : memref<1x128xf32, #tpu.memory_space<vmem>>, vector<1x128xf32>,
    } else {
    }
    %c0_i32_2 = arith.constant 0 : i32
    %5 = arith.cmpi eq, %arg0, %c0_i32_2 : i32
    %6 = arith.extui %5 : i1 to i32
    %c0_i32_3 = arith.constant 0 : i32
    %7 = arith.cmpi ne, %6, %c0_i32_3 : i32
    scf.if %7 {
      %c128_i32 = arith.constant 128 : i32
      %21 = arith.muli %arg1, %c128_i32 : i32
      %22 = tpu.iota {dimensions = array<i32: 1>} : vector<1x128xi32>
      %23 = vector.broadcast %21 : i32 to vector<1x128xi32>
      %24 = arith.addi %23, %22 : vector<1x128xi32>
      %c200_i32 = arith.constant 200 : i32
      %25 = vector.broadcast %c200_i32 : i32 to vector<1x128xi32>
      %26 = arith.cmpi slt, %24, %25 : vector<1x128xi32>
      %27 = arith.extui %26 : vector<1x128xi1> to vector<1x128xi32>
      %28 = arith.sitofp %27 : vector<1x128xi32> to vector<1x128xf32>
      %c0 = arith.constant 0 : index
      %c0_11 = arith.constant 0 : index
      %29 = vector.load %arg6[%c0, %c0_11] : memref<1x128xf32, #tpu.memory_space<vmem>>, vector<1x128xf32>
      %c0_12 = arith.constant 0 : index
      %c0_13 = arith.constant 0 : index
      %30 = vector.load %arg2[%c0_12, %c0_13] : memref<128x128xf32, #tpu.memory_space<vmem>>, vector<128x128xf32>
      %cst = arith.constant dense<0.000000e+00> : vector<1x128xf32>
      %31 = tpu.matmul %28, %30, %cst {dimension_numbers = #tpu.dot_dimension_numbers<[1], [0], [0], [1], [0, 0, 1, 1], [], []>} : vector<1x128xf32>, vector<128x128xf32>, vector<1x128xf32> -> vector<1x128xf32>
      %32 = arith.addf %29, %31 : vector<1x128xf32>
      %c0_14 = arith.constant 0 : index
      %c0_15 = arith.constant 0 : index
      %33 = vector.load %arg6[%c0_14, %c0_15] : memref<1x128xf32, #tpu.memory_space<vmem>>, vector<1x128xf32>
      tpu.vector_store %arg6[%c0_14, %c0_15], %32 {strides = array<i32>} : memref<1x128xf32, #tpu.memory_space<vmem>>, vector<1x128xf32>,
    } else {
    }
    %c1_i32 = arith.constant 1 : i32
    %8 = arith.cmpi eq, %arg0, %c1_i32 : i32
    %c0_i32_4 = arith.constant 0 : i32
    %9 = arith.cmpi eq, %arg1, %c0_i32_4 : i32
    %10 = arith.andi %8, %9 : i1
    %11 = arith.extui %10 : i1 to i32
    %c0_i32_5 = arith.constant 0 : i32
    %12 = arith.cmpi ne, %11, %c0_i32_5 : i32
    scf.if %12 {
      %c0 = arith.constant 0 : index
      %c0_11 = arith.constant 0 : index
      %21 = vector.load %arg6[%c0, %c0_11] : memref<1x128xf32, #tpu.memory_space<vmem>>, vector<1x128xf32>
      %cst = arith.constant 5.000000e-03 : f32
      %22 = vector.broadcast %cst : f32 to vector<1x128xf32>
      %23 = arith.mulf %21, %22 : vector<1x128xf32>
      %24 = arith.negf %23 : vector<1x128xf32>
      %25 = math.exp %24 : vector<1x128xf32>
      %cst_12 = arith.constant 1.000000e+00 : f32
      %26 = vector.broadcast %cst_12 : f32 to vector<1x128xf32>
      %27 = arith.addf %26, %25 : vector<1x128xf32>
      %28 = arith.divf %26, %27 : vector<1x128xf32>
      %c0_13 = arith.constant 0 : index
      %c0_14 = arith.constant 0 : index
      %29 = vector.load %arg4[%c0_13, %c0_14] : memref<128x128xf32, #tpu.memory_space<vmem>>, vector<128x128xf32>
      %cst_15 = arith.constant dense<0.000000e+00> : vector<1x128xf32>
      %30 = tpu.matmul %28, %29, %cst_15 {dimension_numbers = #tpu.dot_dimension_numbers<[1], [1], [0], [0], [0, 0, 1, 0], [], []>} : vector<1x128xf32>, vector<128x128xf32>, vector<1x128xf32> -> vector<1x128xf32>
      %c0_16 = arith.constant 0 : index
      %c0_17 = arith.constant 0 : index
      %31 = vector.load %arg7[%c0_16, %c0_17] : memref<1x128xf32, #tpu.memory_space<vmem>>, vector<1x128xf32>
      tpu.vector_store %arg7[%c0_16, %c0_17], %30 {strides = array<i32>} : memref<1x128xf32, #tpu.memory_space<vmem>>, vector<1x128xf32>,
      %cst_18 = arith.constant 0.000000e+00 : f32
      %32 = vector.broadcast %cst_18 : f32 to vector<1x1xf32>
      %c0_19 = arith.constant 0 : index
      %c0_20 = arith.constant 0 : index
      %33 = vector.load %arg8[%c0_19, %c0_20] : memref<1x1xf32, #tpu.memory_space<vmem>>, vector<1x1xf32>
      tpu.vector_store %arg8[%c0_19, %c0_20], %32 {strides = array<i32>} : memref<1x1xf32, #tpu.memory_space<vmem>>, vector<1x1xf32>,
      %cst_21 = arith.constant 0.000000e+00 : f32
      %34 = vector.broadcast %cst_21 : f32 to vector<1x1xf32>
      %c0_22 = arith.constant 0 : index
      %c0_23 = arith.constant 0 : index
      %35 = vector.load %arg9[%c0_22, %c0_23] : memref<1x1xf32, #tpu.memory_space<vmem>>, vector<1x1xf32>
      tpu.vector_store %arg9[%c0_22, %c0_23], %34 {strides = array<i32>} : memref<1x1xf32, #tpu.memory_space<vmem>>, vector<1x1xf32>,
    } else {
    }
    %c1_i32_6 = arith.constant 1 : i32
    %13 = arith.cmpi eq, %arg0, %c1_i32_6 : i32
    %14 = arith.extui %13 : i1 to i32
    %c0_i32_7 = arith.constant 0 : i32
    %15 = arith.cmpi ne, %14, %c0_i32_7 : i32
    scf.if %15 {
      %c0 = arith.constant 0 : index
      %c0_11 = arith.constant 0 : index
      %21 = vector.load %arg7[%c0, %c0_11] : memref<1x128xf32, #tpu.memory_space<vmem>>, vector<1x128xf32>
      %c128_i32 = arith.constant 128 : i32
      %22 = arith.muli %arg1, %c128_i32 : i32
      %23 = tpu.iota {dimensions = array<i32: 0>} : vector<128x1xi32>
      %24 = vector.broadcast %22 : i32 to vector<128x1xi32>
      %25 = arith.addi %24, %23 : vector<128x1xi32>
      %c200_i32 = arith.constant 200 : i32
      %26 = vector.broadcast %c200_i32 : i32 to vector<128x1xi32>
      %27 = arith.cmpi slt, %25, %26 : vector<128x1xi32>
      %28 = arith.extui %27 : vector<128x1xi1> to vector<128x1xi32>
      %29 = arith.sitofp %28 : vector<128x1xi32> to vector<128x1xf32>
      %c0_12 = arith.constant 0 : index
      %c0_13 = arith.constant 0 : index
      %30 = vector.load %arg2[%c0_12, %c0_13] : memref<128x128xf32, #tpu.memory_space<vmem>>, vector<128x128xf32>
      %31 = vector.broadcast %21 : vector<1x128xf32> to vector<128x128xf32>
      %32 = arith.mulf %30, %31 : vector<128x128xf32>
      %cst = arith.constant dense<0.000000e+00> : vector<128xf32>
      %33 = vector.multi_reduction <add>, %32, %cst [1] : vector<128x128xf32> to vector<128xf32>
      %34 = vector.shape_cast %33 : vector<128xf32> to vector<128x1xf32>
      %c0_14 = arith.constant 0 : index
      %c0_15 = arith.constant 0 : index
      %35 = vector.load %arg3[%c0_14, %c0_15] : memref<128x128xf32, #tpu.memory_space<vmem>>, vector<128x128xf32>
      %36 = vector.broadcast %21 : vector<1x128xf32> to vector<128x128xf32>
      %37 = arith.mulf %35, %36 : vector<128x128xf32>
      %cst_16 = arith.constant dense<0.000000e+00> : vector<128xf32>
      %38 = vector.multi_reduction <add>, %37, %cst_16 [1] : vector<128x128xf32> to vector<128xf32>
      %39 = vector.shape_cast %38 : vector<128xf32> to vector<128x1xf32>
      %c0_17 = arith.constant 0 : index
      %c0_18 = arith.constant 0 : index
      %40 = vector.load %arg8[%c0_17, %c0_18] : memref<1x1xf32, #tpu.memory_space<vmem>>, vector<1x1xf32>
      %cst_19 = arith.constant 0.000000e+00 : f32
      %41 = vector.broadcast %cst_19 : f32 to vector<128x1xf32>
      %42 = arith.subf %41, %34 : vector<128x1xf32>
      %cst_20 = arith.constant 0.000000e+00 : f32
      %43 = vector.broadcast %cst_20 : f32 to vector<128x1xf32>
      %44 = arith.maximumf %42, %43 : vector<128x1xf32>
      %45 = math.absf %42 : vector<128x1xf32>
      %cst_21 = arith.constant 0.000000e+00 : f32
      %46 = vector.broadcast %cst_21 : f32 to vector<128x1xf32>
      %47 = arith.subf %46, %45 : vector<128x1xf32>
      %48 = math.exp %47 : vector<128x1xf32>
      %49 = math.log1p %48 : vector<128x1xf32>
      %50 = arith.addf %44, %49 : vector<128x1xf32>
      %51 = arith.mulf %29, %50 : vector<128x1xf32>
      %cst_22 = arith.constant dense<0.000000e+00> : vector<1xf32>
      %52 = vector.multi_reduction <add>, %51, %cst_22 [0] : vector<128x1xf32> to vector<1xf32>
      %53 = vector.shape_cast %52 : vector<1xf32> to vector<1x1xf32>
      %54 = arith.addf %40, %53 : vector<1x1xf32>
      %c0_23 = arith.constant 0 : index
      %c0_24 = arith.constant 0 : index
      %55 = vector.load %arg8[%c0_23, %c0_24] : memref<1x1xf32, #tpu.memory_space<vmem>>, vector<1x1xf32>
      tpu.vector_store %arg8[%c0_23, %c0_24], %54 {strides = array<i32>} : memref<1x1xf32, #tpu.memory_space<vmem>>, vector<1x1xf32>,
      %c0_25 = arith.constant 0 : index
      %c0_26 = arith.constant 0 : index
      %56 = vector.load %arg9[%c0_25, %c0_26] : memref<1x1xf32, #tpu.memory_space<vmem>>, vector<1x1xf32>
      %cst_27 = arith.constant 0.000000e+00 : f32
      %57 = vector.broadcast %cst_27 : f32 to vector<128x1xf32>
      %58 = arith.maximumf %39, %57 : vector<128x1xf32>
      %59 = math.absf %39 : vector<128x1xf32>
      %cst_28 = arith.constant 0.000000e+00 : f32
      %60 = vector.broadcast %cst_28 : f32 to vector<128x1xf32>
      %61 = arith.subf %60, %59 : vector<128x1xf32>
      %62 = math.exp %61 : vector<128x1xf32>
      %63 = math.log1p %62 : vector<128x1xf32>
      %64 = arith.addf %58, %63 : vector<128x1xf32>
      %65 = arith.mulf %29, %64 : vector<128x1xf32>
      %cst_29 = arith.constant dense<0.000000e+00> : vector<1xf32>
      %66 = vector.multi_reduction <add>, %65, %cst_29 [0] : vector<128x1xf32> to vector<1xf32>
      %67 = vector.shape_cast %66 : vector<1xf32> to vector<1x1xf32>
      %68 = arith.addf %56, %67 : vector<1x1xf32>
      %c0_30 = arith.constant 0 : index
      %c0_31 = arith.constant 0 : index
      %69 = vector.load %arg9[%c0_30, %c0_31] : memref<1x1xf32, #tpu.memory_space<vmem>>, vector<1x1xf32>
      tpu.vector_store %arg9[%c0_30, %c0_31], %68 {strides = array<i32>} : memref<1x1xf32, #tpu.memory_space<vmem>>, vector<1x1xf32>,
    } else {
    }
    %c1_i32_8 = arith.constant 1 : i32
    %16 = arith.cmpi eq, %arg0, %c1_i32_8 : i32
    %c1_i32_9 = arith.constant 1 : i32
    %17 = arith.cmpi eq, %arg1, %c1_i32_9 : i32
    %18 = arith.andi %16, %17 : i1
    %19 = arith.extui %18 : i1 to i32
    %c0_i32_10 = arith.constant 0 : i32
    %20 = arith.cmpi ne, %19, %c0_i32_10 : i32
    scf.if %20 {
      %c0 = arith.constant 0 : index
      %c0_11 = arith.constant 0 : index
      %21 = vector.load %arg8[%c0, %c0_11] : memref<1x1xf32, #tpu.memory_space<vmem>>, vector<1x1xf32>
      %c0_12 = arith.constant 0 : index
      %c0_13 = arith.constant 0 : index
      %22 = vector.load %arg9[%c0_12, %c0_13] : memref<1x1xf32, #tpu.memory_space<vmem>>, vector<1x1xf32>
      %23 = arith.addf %21, %22 : vector<1x1xf32>
      %cst = arith.constant 5.000000e-03 : f32
      %24 = vector.broadcast %cst : f32 to vector<1x1xf32>
      %25 = arith.mulf %23, %24 : vector<1x1xf32>
      %c0_14 = arith.constant 0 : index
      %c0_15 = arith.constant 0 : index
      %26 = vector.load %arg5[%c0_14, %c0_15] : memref<1x1xf32, #tpu.memory_space<vmem>>, vector<1x1xf32>
      tpu.vector_store %arg5[%c0_14, %c0_15], %25 {strides = array<i32>} : memref<1x1xf32, #tpu.memory_space<vmem>>, vector<1x1xf32>,
    } else {
    }
    return
  }
  func.func @transform_0(%arg0: i32, %arg1: i32) -> (i32, i32) {
    %c0_i32 = arith.constant 0 : i32
    %c0_i32_0 = arith.constant 0 : i32
    return %arg1, %c0_i32 : i32, i32
  }
  func.func @transform_1(%arg0: i32, %arg1: i32) -> (i32, i32) {
    %c0_i32 = arith.constant 0 : i32
    %c0_i32_0 = arith.constant 0 : i32
    return %arg1, %c0_i32 : i32, i32
  }
  func.func @transform_2(%arg0: i32, %arg1: i32) -> (i32, i32) {
    %c0_i32 = arith.constant 0 : i32
    %c0_i32_0 = arith.constant 0 : i32
    %c0_i32_1 = arith.constant 0 : i32
    return %c0_i32, %c0_i32_0 : i32, i32
  }
  func.func @transform_3(%arg0: i32, %arg1: i32) -> (i32, i32) {
    %c0_i32 = arith.constant 0 : i32
    %c0_i32_0 = arith.constant 0 : i32
    %c0_i32_1 = arith.constant 0 : i32
    return %c0_i32, %c0_i32_0 : i32, i32
  }
}

</mosaic_0001>

<llo_original>
// kernel: dgi_forward.5
$region0: #{dgi_forward.5}
  #allocation0 [shape = 'u32[]', space=smem, size = 0x4, offset = 0x4, fixed_abs, tag = 'smem constant byte address 0x4 - core index']
  #allocation1 [shape = 'u32[144,128]{1,0:T(1,128)}', space=vmem, size = 0x12000, scoped, tag = 'internal scratch']
  %s0 = inlined_call_operand.vmem [shape: f32[256,128], index: 0, kind: input, shape index: {}]
  %s1 = inlined_call_operand.vmem [shape: f32[256,128], index: 1, kind: input, shape index: {}]
  %s2 = inlined_call_operand.vmem [shape: f32[128,128], index: 2, kind: input, shape index: {}]
  %s3 = inlined_call_operand.vmem [shape: bf16[256,256], index: 3, kind: output, shape index: {}]
  %s4 = sld [smem:[#allocation0]]
  $region45: #{dgi_forward.5} parent=0
    _
  %s6 = ssub.s32 1, %s4
  %s7 = scalar_select 0, %s6, %s4
  loop: start=0, step=1, limit=4
  $region2: #{dgi_forward.5} parent=0 // loop_pre_header
    _
  $region3: #{dgi_forward.5} parent=0 // loop_header
    %s9 = sphi 0, %s13
    %p10 = scmp.ge.s32.totalorder %s9, 4
    %s19 = sphi 0, %s21
    %s22 = sphi 0, %s19
    %s23 = sphi 0, %s22
    %s39 = sphi 0, %s23
    %s45 = sphi 0, %s47
    %s48 = sphi 0, %s45
    %s49 = sphi 0, %s48
    %s65 = sphi 0, %s49
    %s69 = sphi 0, %s69
    %s71 = sphi 0, %s69
    %s72 = sphi 0, %s71
    %s86 = sphi 0, %s72
    %s92 = sphi 0, %s94
    %s95 = sphi 0, %s92
    %s96 = sphi 0, %s95
    %s112 = sphi 0, %s96
  $region4: #{dgi_forward.5} parent=0 // loop_header_branch
    %12 = sbr.rel (%p10) target = $region8
  $region5: #{dgi_forward.5} parent=0 // loop_body
    %s14 = ssub.s32 %s9, 1
    %s15 = ssub.s32 %s9, 2
    %s16 = sadd.s32 %s9, 1
    %s17 = ssub.s32 %s9, %s16
    %p18 = scmp.eq.s32.totalorder %s17, 0
    %s20 = sadd.s32 %s19, 1
    %s21 = scalar_select %p18, %s19, %s20
    %p24 = pneg %p18
    %p25 = scmp.eq.s32.totalorder %s9, 1
    %p26 = por %p24, %p25
    %p27 = scmp.ne.s32.totalorder %s19, %s22
    %p28 = scmp.eq.s32.totalorder %s9, 0
    %p29 = por %p27, %p28
    %p30 = scmp.ne.s32.totalorder %s19, %s22
    %p31 = scmp.eq.s32.totalorder %s14, 1
    %p32 = por %p30, %p31
    %p33 = scmp.ne.s32.totalorder %s22, %s23
    %p34 = scmp.eq.s32.totalorder %s14, 0
    %p35 = por %p33, %p34
    %p36 = scmp.ne.s32.totalorder %s22, %s23
    %p37 = scmp.eq.s32.totalorder %s15, 1
    %p38 = por %p36, %p37
    %p40 = scmp.ne.s32.totalorder %s23, %s39
    %p41 = scmp.eq.s32.totalorder %s15, 0
    %p42 = por %p40, %p41
    %s43 = ssub.s32 %s9, %s16
    %p44 = scmp.eq.s32.totalorder %s43, 0
    %s46 = sadd.s32 %s45, 1
    %s47 = scalar_select %p44, %s45, %s46
    %p50 = pneg %p44
    %p51 = scmp.eq.s32.totalorder %s9, 1
    %p52 = por %p50, %p51
    %p53 = scmp.ne.s32.totalorder %s45, %s48
    %p54 = scmp.eq.s32.totalorder %s9, 0
    %p55 = por %p53, %p54
    %p56 = scmp.ne.s32.totalorder %s45, %s48
    %p57 = scmp.eq.s32.totalorder %s14, 1
    %p58 = por %p56, %p57
    %p59 = scmp.ne.s32.totalorder %s48, %s49
    %p60 = scmp.eq.s32.totalorder %s14, 0
    %p61 = por %p59, %p60
    %p62 = scmp.ne.s32.totalorder %s48, %s49
    %p63 = scmp.eq.s32.totalorder %s15, 1
    %p64 = por %p62, %p63
    %p66 = scmp.ne.s32.totalorder %s49, %s65
    %p67 = scmp.eq.s32.totalorder %s15, 0
    %p68 = por %p66, %p67
    %s70 = sadd.s32 %s69, 1
    %p73 = scmp.eq.s32.totalorder %s9, 1
    %p74 = scmp.ne.s32.totalorder %s69, %s71
    %p75 = scmp.eq.s32.totalorder %s9, 0
    %p76 = por %p74, %p75
    %p77 = scmp.ne.s32.totalorder %s69, %s71
    %p78 = scmp.eq.s32.totalorder %s14, 1
    %p79 = por %p77, %p78
    %p80 = scmp.ne.s32.totalorder %s71, %s72
    %p81 = scmp.eq.s32.totalorder %s14, 0
    %p82 = por %p80, %p81
    %p83 = scmp.ne.s32.totalorder %s71, %s72
    %p84 = scmp.eq.s32.totalorder %s15, 1
    %p85 = por %p83, %p84
    %p87 = scmp.ne.s32.totalorder %s72, %s86
    %p88 = scmp.eq.s32.totalorder %s15, 0
    %p89 = por %p87, %p88
    %s90 = ssub.s32 %s9, %s16
    %p91 = scmp.eq.s32.totalorder %s90, 0
    %s93 = sadd.s32 %s92, 1
    %s94 = scalar_select %p91, %s92, %s93
    %p97 = pneg %p91
    %p98 = scmp.eq.s32.totalorder %s9, 1
    %p99 = por %p97, %p98
    %p100 = scmp.ne.s32.totalorder %s92, %s95
    %p101 = scmp.eq.s32.totalorder %s9, 0
    %p102 = por %p100, %p101
    %p103 = scmp.ne.s32.totalorder %s92, %s95
    %p104 = scmp.eq.s32.totalorder %s14, 1
    %p105 = por %p103, %p104
    %p106 = scmp.ne.s32.totalorder %s95, %s96
    %p107 = scmp.eq.s32.totalorder %s14, 0
    %p108 = por %p106, %p107
    %p109 = scmp.ne.s32.totalorder %s95, %s96
    %p110 = scmp.eq.s32.totalorder %s15, 1
    %p111 = por %p109, %p110
    %p113 = scmp.ne.s32.totalorder %s96, %s112
    %p114 = scmp.eq.s32.totalorder %s15, 0
    %p115 = por %p113, %p114
    %p116 = scmp.le.s32.totalorder 1, %s9
    %p117 = scmp.lt.s32.totalorder %s9, 3
    %p118 = pnand %p116, %p117
    %p119 = pneg %p118
    // Predicated region
    $region9: #{dgi_forward.5} parent=5 // pred_check
      _
    $region10: #{dgi_forward.5} parent=5 // pred_check_branch
      %121 = sbr.rel (%p118) target = $region12
    $region11: #{dgi_forward.5} parent=5 // pred_region
      %s122 = ssub.s32 %s9, 1
      // Predicated region
      $region13: #{dgi_forward.5} parent=11 // pred_check
        %p123 = pneg %p82
      $region14: #{dgi_forward.5} parent=11 // pred_check_branch
        %125 = sbr.rel (%p123) target = $region16
      $region15: #{dgi_forward.5} parent=11 // pred_region
        _
      $region16: #{dgi_forward.5} parent=11 // pred_fallthru
        _
    $region12: #{dgi_forward.5} parent=5 // pred_fallthru
      _
    %p126 = scmp.lt.s32.totalorder %s9, 2
    // Predicated region
    $region17: #{dgi_forward.5} parent=5 // pred_check
      %p127 = pneg %p126
    $region18: #{dgi_forward.5} parent=5 // pred_check_branch
      %129 = sbr.rel (%p127) target = $region20
    $region19: #{dgi_forward.5} parent=5 // pred_region
      // Predicated region
      $region21: #{dgi_forward.5} parent=19 // pred_check
        %p130 = pneg %p29
      $region22: #{dgi_forward.5} parent=19 // pred_check_branch
        %132 = sbr.rel (%p130) target = $region24
      $region23: #{dgi_forward.5} parent=19 // pred_region
        %s133 = smul.u32 16, %s9
        %p134 = scmp.lt.s32.totalorder %s133, 31
        %s135 = scalar_select %p134, %s133, 31
        %s136 = smul.addr %s135, 8
        %s137 = scalar_lea.vmem %s0, %s136
        %s138 = smul.u32 16, %s9
      $region24: #{dgi_forward.5} parent=19 // pred_fallthru
        _
      // Predicated region
      $region25: #{dgi_forward.5} parent=19 // pred_check
        %p139 = pneg %p55
      $region26: #{dgi_forward.5} parent=19 // pred_check_branch
        %141 = sbr.rel (%p139) target = $region28
      $region27: #{dgi_forward.5} parent=19 // pred_region
        %s142 = smul.u32 16, %s9
        %p143 = scmp.lt.s32.totalorder %s142, 31
        %s144 = scalar_select %p143, %s142, 31
        %s145 = smul.addr %s144, 8
        %s146 = scalar_lea.vmem %s1, %s145
        %s147 = smul.u32 16, %s9
      $region28: #{dgi_forward.5} parent=19 // pred_fallthru
        _
    $region20: #{dgi_forward.5} parent=5 // pred_fallthru
      _
    %p148 = scmp.le.s32.totalorder 1, %s9
    %p149 = scmp.lt.s32.totalorder %s9, 3
    %p150 = pnand %p148, %p149
    %p151 = pneg %p150
    // Predicated region
    $region29: #{dgi_forward.5} parent=5 // pred_check
      _
    $region30: #{dgi_forward.5} parent=5 // pred_check_branch
      %153 = sbr.rel (%p150) target = $region32
    $region31: #{dgi_forward.5} parent=5 // pred_region
      %s154 = ssub.s32 %s9, 1
      %s155 = smul.u32 16, %s14
      %p156 = scmp.lt.s32.totalorder %s155, 31
      %s157 = scalar_select %p156, %s155, 31
      %s158 = smul.addr %s157, 8
      %s159 = scalar_lea.vmem %s0, %s158
      %p160 = pneg %p35
      %p161 = pneg %p32
      %s162 = smul.u32 16, %s14
      %p163 = scmp.lt.s32.totalorder %s162, 31
      %s164 = scalar_select %p163, %s162, 31
      %s165 = smul.addr %s164, 8
      %s166 = scalar_lea.vmem %s1, %s165
      %p167 = pneg %p61
      %p168 = pneg %p58
      %p169 = pneg %p82
      %p170 = pneg %p79
      %p171 = pneg %p108
      %p172 = pneg %p105
      %s173 = smul.u32 16, %s14
      %p174 = scmp.lt.s32.totalorder %s173, 31
      %s175 = scalar_select %p174, %s173, 31
      %s176 = smul.addr %s175, 2
      %s177 = smul.addr %s176, 4
      %s178 = scalar_lea.vmem %s3, %s177
      %s179 = smul.u32 16, %s14
      %p180 = scmp.lt.s32.totalorder %s179, 31
      %s181 = scalar_select %p180, %s179, 31
      %s182 = smul.addr %s181, 8
      %s183 = scalar_lea.vmem %s0, %s182
      %s184 = smul.u32 16, %s14
      %s185 = smul.u32 16, %s14
      %p186 = scmp.lt.s32.totalorder %s185, 31
      %s187 = scalar_select %p186, %s185, 31
      %s188 = smul.addr %s187, 8
      %s189 = scalar_lea.vmem %s1, %s188
      %s190 = smul.u32 16, %s14
      %s191 = smul.u32 16, %s14
      %p192 = scmp.lt.s32.totalorder %s191, 31
      %s193 = scalar_select %p192, %s191, 31
      %s194 = smul.addr %s193, 2
      %s195 = smul.addr %s194, 4
      %s196 = scalar_lea.vmem %s3, %s195
      %s197 = smul.u32 16, %s14
      %v198 = vld [vmem:[%s2] sm:$0xff]
      %v199 = vld [vmem:[%s2 + $0x8] sm:$0xff]
      %v200 = vld [vmem:[%s2 + $0x10] sm:$0xff]
      %v201 = vld [vmem:[%s2 + $0x18] sm:$0xff]
      %v202 = vld [vmem:[%s2 + $0x20] sm:$0xff]
      %v203 = vld [vmem:[%s2 + $0x28] sm:$0xff]
      %v204 = vld [vmem:[%s2 + $0x30] sm:$0xff]
      %v205 = vld [vmem:[%s2 + $0x38] sm:$0xff]
      %v206 = vld [vmem:[%s2 + $0x40] sm:$0xff]
      %v207 = vld [vmem:[%s2 + $0x48] sm:$0xff]
      %v208 = vld [vmem:[%s2 + $0x50] sm:$0xff]
      %v209 = vld [vmem:[%s2 + $0x58] sm:$0xff]
      %v210 = vld [vmem:[%s2 + $0x60] sm:$0xff]
      %v211 = vld [vmem:[%s2 + $0x68] sm:$0xff]
      %v212 = vld [vmem:[%s2 + $0x70] sm:$0xff]
      %v213 = vld [vmem:[%s2 + $0x78] sm:$0xff]
      %v214 = vld [vmem:[%s183] sm:$0xff]
      %v215 = vld [vmem:[%s183 + $0x8] sm:$0xff]
      %v216 = vld [vmem:[%s183 + $0x10] sm:$0xff]
      %v217 = vld [vmem:[%s183 + $0x18] sm:$0xff]
      %v218 = vld [vmem:[%s183 + $0x20] sm:$0xff]
      %v219 = vld [vmem:[%s183 + $0x28] sm:$0xff]
      %v220 = vld [vmem:[%s183 + $0x30] sm:$0xff]
      %v221 = vld [vmem:[%s183 + $0x38] sm:$0xff]
      %v222 = vld [vmem:[%s183 + $0x40] sm:$0xff]
      %v223 = vld [vmem:[%s183 + $0x48] sm:$0xff]
      %v224 = vld [vmem:[%s183 + $0x50] sm:$0xff]
      %v225 = vld [vmem:[%s183 + $0x58] sm:$0xff]
      %v226 = vld [vmem:[%s183 + $0x60] sm:$0xff]
      %v227 = vld [vmem:[%s183 + $0x68] sm:$0xff]
      %v228 = vld [vmem:[%s183 + $0x70] sm:$0xff]
      %v229 = vld [vmem:[%s183 + $0x78] sm:$0xff]
      %230 = vmatprep.subr.mxu0 0.0
      %231 = vmatpush1.msra.mxu0 %v213
      %232 = vmatprep.subr.mxu0 0.0
      %233 = vmatpush1.msra.mxu0 %v212
      %234 = vmatprep.subr.mxu0 0.0
      %235 = vmatpush1.msra.mxu0 %v211
      %236 = vmatprep.subr.mxu0 0.0
      %237 = vmatpush1.msra.mxu0 %v210
      %238 = vmatprep.subr.mxu0 0.0
      %239 = vmatpush1.msra.mxu0 %v209
      %240 = vmatprep.subr.mxu0 0.0
      %241 = vmatpush1.msra.mxu0 %v208
      %242 = vmatprep.subr.mxu0 0.0
      %243 = vmatpush1.msra.mxu0 %v207
      %244 = vmatprep.subr.mxu0 0.0
      %245 = vmatpush1.msra.mxu0 %v206
      %246 = vmatprep.subr.mxu0 0.0
      %247 = vmatpush1.msra.mxu0 %v205
      %248 = vmatprep.subr.mxu0 0.0
      %249 = vmatpush1.msra.mxu0 %v204
      %250 = vmatprep.subr.mxu0 0.0
      %251 = vmatpush1.msra.mxu0 %v203
      %252 = vmatprep.subr.mxu0 0.0
      %253 = vmatpush1.msra.mxu0 %v202
      %254 = vmatprep.subr.mxu0 0.0
      %255 = vmatpush1.msra.mxu0 %v201
      %256 = vmatprep.subr.mxu0 0.0
      %257 = vmatpush1.msra.mxu0 %v200
      %258 = vmatprep.subr.mxu0 0.0
      %259 = vmatpush1.msra.mxu0 %v199
      %260 = vmatprep.subr.mxu0 0.0
      %261 = vmatpush1.msra.mxu0 %v198
      %262 = vmatprep.subr.mxu0 0.0
      %263 = vmatpush2.msra.mxu0 0.0
      %264 = vmatprep.subr.mxu0 0.0
      %265 = vmatpush2.msra.mxu0 0.0
      %266 = vmatprep.subr.mxu0 0.0
      %267 = vmatpush2.msra.mxu0 0.0
      %268 = vmatprep.subr.mxu0 0.0
      %269 = vmatpush2.msra.mxu0 0.0
      %270 = vmatprep.subr.mxu0 0.0
      %271 = vmatpush2.msra.mxu0 0.0
      %272 = vmatprep.subr.mxu0 0.0
      %273 = vmatpush2.msra.mxu0 0.0
      %274 = vmatprep.subr.mxu0 0.0
      %275 = vmatpush2.msra.mxu0 0.0
      %276 = vmatprep.subr.mxu0 0.0
      %277 = vmatpush2.msra.mxu0 0.0
      %278 = vmatprep.subr.mxu0 0.0
      %279 = vmatpush2.msra.mxu0 0.0
      %280 = vmatprep.subr.mxu0 0.0
      %281 = vmatpush2.msra.mxu0 0.0
      %282 = vmatprep.subr.mxu0 0.0
      %283 = vmatpush2.msra.mxu0 0.0
      %284 = vmatprep.subr.mxu0 0.0
      %285 = vmatpush2.msra.mxu0 0.0
      %286 = vmatprep.subr.mxu0 0.0
      %287 = vmatpush2.msra.mxu0 0.0
      %288 = vmatprep.subr.mxu0 0.0
      %289 = vmatpush2.msra.mxu0 0.0
      %290 = vmatprep.subr.mxu0 0.0
      %291 = vmatpush2.msra.mxu0 0.0
      %292 = vmatprep.subr.mxu0 0.0
      %293 = vmatpush2.msra.mxu0 0.0
      %294 = vmatprep.mubr.f32.mxu0 0.0
      %295 = vmatmul.mubr.f32.gmra.mxu0 %v214
      %v296 = vpop.f32.mrf.mxu0
      %v297 = vadd.f32 0.0, %v296
      %v298 = vpop.f32.mrf.mxu0
      %299 = vmatprep.mubr.f32.mxu0 0.0
      %300 = vmatmul.mubr.f32.gmra.mxu0 %v215
      %v301 = vpop.f32.mrf.mxu0
      %v302 = vadd.f32 0.0, %v301
      %v303 = vpop.f32.mrf.mxu0
      %304 = vmatprep.mubr.f32.mxu0 0.0
      %305 = vmatmul.mubr.f32.gmra.mxu0 %v216
      %v306 = vpop.f32.mrf.mxu0
      %v307 = vadd.f32 0.0, %v306
      %v308 = vpop.f32.mrf.mxu0
      %309 = vmatprep.mubr.f32.mxu0 0.0
      %310 = vmatmul.mubr.f32.gmra.mxu0 %v217
      %v311 = vpop.f32.mrf.mxu0
      %v312 = vadd.f32 0.0, %v311
      %v313 = vpop.f32.mrf.mxu0
      %314 = vmatprep.mubr.f32.mxu0 0.0
      %315 = vmatmul.mubr.f32.gmra.mxu0 %v218
      %v316 = vpop.f32.mrf.mxu0
      %v317 = vadd.f32 0.0, %v316
      %v318 = vpop.f32.mrf.mxu0
      %319 = vmatprep.mubr.f32.mxu0 0.0
      %320 = vmatmul.mubr.f32.gmra.mxu0 %v219
      %v321 = vpop.f32.mrf.mxu0
      %v322 = vadd.f32 0.0, %v321
      %v323 = vpop.f32.mrf.mxu0
      %324 = vmatprep.mubr.f32.mxu0 0.0
      %325 = vmatmul.mubr.f32.gmra.mxu0 %v220
      %v326 = vpop.f32.mrf.mxu0
      %v327 = vadd.f32 0.0, %v326
      %v328 = vpop.f32.mrf.mxu0
      %329 = vmatprep.mubr.f32.mxu0 0.0
      %330 = vmatmul.mubr.f32.gmra.mxu0 %v221
      %v331 = vpop.f32.mrf.mxu0
      %v332 = vadd.f32 0.0, %v331
      %v333 = vpop.f32.mrf.mxu0
      %334 = vmatprep.mubr.f32.mxu0 0.0
      %335 = vmatmul.mubr.f32.gmra.mxu0 %v222
      %v336 = vpop.f32.mrf.mxu0
      %v337 = vadd.f32 0.0, %v336
      %v338 = vpop.f32.mrf.mxu0
      %339 = vmatprep.mubr.f32.mxu0 0.0
      %340 = vmatmul.mubr.f32.gmra.mxu0 %v223
      %v341 = vpop.f32.mrf.mxu0
      %v342 = vadd.f32 0.0, %v341
      %v343 = vpop.f32.mrf.mxu0
      %344 = vmatprep.mubr.f32.mxu0 0.0
      %345 = vmatmul.mubr.f32.gmra.mxu0 %v224
      %v346 = vpop.f32.mrf.mxu0
      %v347 = vadd.f32 0.0, %v346
      %v348 = vpop.f32.mrf.mxu0
      %349 = vmatprep.mubr.f32.mxu0 0.0
      %350 = vmatmul.mubr.f32.gmra.mxu0 %v225
      %v351 = vpop.f32.mrf.mxu0
      %v352 = vadd.f32 0.0, %v351
      %v353 = vpop.f32.mrf.mxu0
      %354 = vmatprep.mubr.f32.mxu0 0.0
      %355 = vmatmul.mubr.f32.gmra.mxu0 %v226
      %v356 = vpop.f32.mrf.mxu0
      %v357 = vadd.f32 0.0, %v356
      %v358 = vpop.f32.mrf.mxu0
      %359 = vmatprep.mubr.f32.mxu0 0.0
      %360 = vmatmul.mubr.f32.gmra.mxu0 %v227
      %v361 = vpop.f32.mrf.mxu0
      %v362 = vadd.f32 0.0, %v361
      %v363 = vpop.f32.mrf.mxu0
      %364 = vmatprep.mubr.f32.mxu0 0.0
      %365 = vmatmul.mubr.f32.gmra.mxu0 %v228
      %v366 = vpop.f32.mrf.mxu0
      %v367 = vadd.f32 0.0, %v366
      %v368 = vpop.f32.mrf.mxu0
      %369 = vmatprep.mubr.f32.mxu0 0.0
      %370 = vmatmul.mubr.f32.gmra.mxu0 %v229
      %v371 = vpop.f32.mrf.mxu0
      %v372 = vadd.f32 0.0, %v371
      %v373 = vpop.f32.mrf.mxu0
      %374 = vdwg.mxu0
      %v375 = vld [vmem:[%s189] sm:$0xff]
      %v376 = vld [vmem:[%s189 + $0x8] sm:$0xff]
      %v377 = vld [vmem:[%s189 + $0x10] sm:$0xff]
      %v378 = vld [vmem:[%s189 + $0x18] sm:$0xff]
      %v379 = vld [vmem:[%s189 + $0x20] sm:$0xff]
      %v380 = vld [vmem:[%s189 + $0x28] sm:$0xff]
      %v381 = vld [vmem:[%s189 + $0x30] sm:$0xff]
      %v382 = vld [vmem:[%s189 + $0x38] sm:$0xff]
      %v383 = vld [vmem:[%s189 + $0x40] sm:$0xff]
      %v384 = vld [vmem:[%s189 + $0x48] sm:$0xff]
      %v385 = vld [vmem:[%s189 + $0x50] sm:$0xff]
      %v386 = vld [vmem:[%s189 + $0x58] sm:$0xff]
      %v387 = vld [vmem:[%s189 + $0x60] sm:$0xff]
      %v388 = vld [vmem:[%s189 + $0x68] sm:$0xff]
      %v389 = vld [vmem:[%s189 + $0x70] sm:$0xff]
      %v390 = vld [vmem:[%s189 + $0x78] sm:$0xff]
      %391 = vmatprep.subr.mxu0 0.0
      %392 = vmatpush1.msra.mxu0 %v213
      %393 = vmatprep.subr.mxu0 0.0
      %394 = vmatpush1.msra.mxu0 %v212
      %395 = vmatprep.subr.mxu0 0.0
      %396 = vmatpush1.msra.mxu0 %v211
      %397 = vmatprep.subr.mxu0 0.0
      %398 = vmatpush1.msra.mxu0 %v210
      %399 = vmatprep.subr.mxu0 0.0
      %400 = vmatpush1.msra.mxu0 %v209
      %401 = vmatprep.subr.mxu0 0.0
      %402 = vmatpush1.msra.mxu0 %v208
      %403 = vmatprep.subr.mxu0 0.0
      %404 = vmatpush1.msra.mxu0 %v207
      %405 = vmatprep.subr.mxu0 0.0
      %406 = vmatpush1.msra.mxu0 %v206
      %407 = vmatprep.subr.mxu0 0.0
      %408 = vmatpush1.msra.mxu0 %v205
      %409 = vmatprep.subr.mxu0 0.0
      %410 = vmatpush1.msra.mxu0 %v204
      %411 = vmatprep.subr.mxu0 0.0
      %412 = vmatpush1.msra.mxu0 %v203
      %413 = vmatprep.subr.mxu0 0.0
      %414 = vmatpush1.msra.mxu0 %v202
      %415 = vmatprep.subr.mxu0 0.0
      %416 = vmatpush1.msra.mxu0 %v201
      %417 = vmatprep.subr.mxu0 0.0
      %418 = vmatpush1.msra.mxu0 %v200
      %419 = vmatprep.subr.mxu0 0.0
      %420 = vmatpush1.msra.mxu0 %v199
      %421 = vmatprep.subr.mxu0 0.0
      %422 = vmatpush1.msra.mxu0 %v198
      %423 = vmatprep.subr.mxu0 0.0
      %424 = vmatpush2.msra.mxu0 0.0
      %425 = vmatprep.subr.mxu0 0.0
      %426 = vmatpush2.msra.mxu0 0.0
      %427 = vmatprep.subr.mxu0 0.0
      %428 = vmatpush2.msra.mxu0 0.0
      %429 = vmatprep.subr.mxu0 0.0
      %430 = vmatpush2.msra.mxu0 0.0
      %431 = vmatprep.subr.mxu0 0.0
      %432 = vmatpush2.msra.mxu0 0.0
      %433 = vmatprep.subr.mxu0 0.0
      %434 = vmatpush2.msra.mxu0 0.0
      %435 = vmatprep.subr.mxu0 0.0
      %436 = vmatpush2.msra.mxu0 0.0
      %437 = vmatprep.subr.mxu0 0.0
      %438 = vmatpush2.msra.mxu0 0.0
      %439 = vmatprep.subr.mxu0 0.0
      %440 = vmatpush2.msra.mxu0 0.0
      %441 = vmatprep.subr.mxu0 0.0
      %442 = vmatpush2.msra.mxu0 0.0
      %443 = vmatprep.subr.mxu0 0.0
      %444 = vmatpush2.msra.mxu0 0.0
      %445 = vmatprep.subr.mxu0 0.0
      %446 = vmatpush2.msra.mxu0 0.0
      %447 = vmatprep.subr.mxu0 0.0
      %448 = vmatpush2.msra.mxu0 0.0
      %449 = vmatprep.subr.mxu0 0.0
      %450 = vmatpush2.msra.mxu0 0.0
      %451 = vmatprep.subr.mxu0 0.0
      %452 = vmatpush2.msra.mxu0 0.0
      %453 = vmatprep.subr.mxu0 0.0
      %454 = vmatpush2.msra.mxu0 0.0
      %455 = vmatprep.mubr.f32.mxu0 0.0
      %456 = vmatmul.mubr.f32.gmra.mxu0 %v375
      %v457 = vpop.f32.mrf.mxu0
      %v458 = vadd.f32 0.0, %v457
      %v459 = vpop.f32.mrf.mxu0
      %460 = vmatprep.mubr.f32.mxu0 0.0
      %461 = vmatmul.mubr.f32.gmra.mxu0 %v376
      %v462 = vpop.f32.mrf.mxu0
      %v463 = vadd.f32 0.0, %v462
      %v464 = vpop.f32.mrf.mxu0
      %465 = vmatprep.mubr.f32.mxu0 0.0
      %466 = vmatmul.mubr.f32.gmra.mxu0 %v377
      %v467 = vpop.f32.mrf.mxu0
      %v468 = vadd.f32 0.0, %v467
      %v469 = vpop.f32.mrf.mxu0
      %470 = vmatprep.mubr.f32.mxu0 0.0
      %471 = vmatmul.mubr.f32.gmra.mxu0 %v378
      %v472 = vpop.f32.mrf.mxu0
      %v473 = vadd.f32 0.0, %v472
      %v474 = vpop.f32.mrf.mxu0
      %475 = vmatprep.mubr.f32.mxu0 0.0
      %476 = vmatmul.mubr.f32.gmra.mxu0 %v379
      %v477 = vpop.f32.mrf.mxu0
      %v478 = vadd.f32 0.0, %v477
      %v479 = vpop.f32.mrf.mxu0
      %480 = vmatprep.mubr.f32.mxu0 0.0
      %481 = vmatmul.mubr.f32.gmra.mxu0 %v380
      %v482 = vpop.f32.mrf.mxu0
      %v483 = vadd.f32 0.0, %v482
      %v484 = vpop.f32.mrf.mxu0
      %485 = vmatprep.mubr.f32.mxu0 0.0
      %486 = vmatmul.mubr.f32.gmra.mxu0 %v381
      %v487 = vpop.f32.mrf.mxu0
      %v488 = vadd.f32 0.0, %v487
      %v489 = vpop.f32.mrf.mxu0
      %490 = vmatprep.mubr.f32.mxu0 0.0
      %491 = vmatmul.mubr.f32.gmra.mxu0 %v382
      %v492 = vpop.f32.mrf.mxu0
      %v493 = vadd.f32 0.0, %v492
      %v494 = vpop.f32.mrf.mxu0
      %495 = vmatprep.mubr.f32.mxu0 0.0
      %496 = vmatmul.mubr.f32.gmra.mxu0 %v383
      %v497 = vpop.f32.mrf.mxu0
      %v498 = vadd.f32 0.0, %v497
      %v499 = vpop.f32.mrf.mxu0
      %500 = vmatprep.mubr.f32.mxu0 0.0
      %501 = vmatmul.mubr.f32.gmra.mxu0 %v384
      %v502 = vpop.f32.mrf.mxu0
      %v503 = vadd.f32 0.0, %v502
      %v504 = vpop.f32.mrf.mxu0
      %505 = vmatprep.mubr.f32.mxu0 0.0
      %506 = vmatmul.mubr.f32.gmra.mxu0 %v385
      %v507 = vpop.f32.mrf.mxu0
      %v508 = vadd.f32 0.0, %v507
      %v509 = vpop.f32.mrf.mxu0
      %510 = vmatprep.mubr.f32.mxu0 0.0
      %511 = vmatmul.mubr.f32.gmra.mxu0 %v386
      %v512 = vpop.f32.mrf.mxu0
      %v513 = vadd.f32 0.0, %v512
      %v514 = vpop.f32.mrf.mxu0
      %515 = vmatprep.mubr.f32.mxu0 0.0
      %516 = vmatmul.mubr.f32.gmra.mxu0 %v387
      %v517 = vpop.f32.mrf.mxu0
      %v518 = vadd.f32 0.0, %v517
      %v519 = vpop.f32.mrf.mxu0
      %520 = vmatprep.mubr.f32.mxu0 0.0
      %521 = vmatmul.mubr.f32.gmra.mxu0 %v388
      %v522 = vpop.f32.mrf.mxu0
      %v523 = vadd.f32 0.0, %v522
      %v524 = vpop.f32.mrf.mxu0
      %525 = vmatprep.mubr.f32.mxu0 0.0
      %526 = vmatmul.mubr.f32.gmra.mxu0 %v389
      %v527 = vpop.f32.mrf.mxu0
      %v528 = vadd.f32 0.0, %v527
      %v529 = vpop.f32.mrf.mxu0
      %530 = vmatprep.mubr.f32.mxu0 0.0
      %531 = vmatmul.mubr.f32.gmra.mxu0 %v390
      %v532 = vpop.f32.mrf.mxu0
      %v533 = vadd.f32 0.0, %v532
      %v534 = vpop.f32.mrf.mxu0
      %535 = vdwg.mxu0
      %v536 = vpack.c.bf16 %v302, %v297
      %v537 = vpack.c.bf16 %v463, %v458
      %v538 = vpack.c.bf16 %v312, %v307
      %v539 = vpack.c.bf16 %v473, %v468
      %v540 = vpack.c.bf16 %v322, %v317
      %v541 = vpack.c.bf16 %v483, %v478
      %v542 = vpack.c.bf16 %v332, %v327
      %v543 = vpack.c.bf16 %v493, %v488
      %v544 = vpack.c.bf16 %v342, %v337
      %v545 = vpack.c.bf16 %v503, %v498
      %v546 = vpack.c.bf16 %v352, %v347
      %v547 = vpack.c.bf16 %v513, %v508
      %v548 = vpack.c.bf16 %v362, %v357
      %v549 = vpack.c.bf16 %v523, %v518
      %v550 = vpack.c.bf16 %v372, %v367
      %v551 = vpack.c.bf16 %v533, %v528
      %v568 = vunpack.c.l.b16 %v536
      %v569 = vunpack.c.l.b16 %v537
      %v570 = vunpack.c.h.b16 %v536
      %v571 = vunpack.c.h.b16 %v537
      %v572 = vunpack.c.l.b16 %v538
      %v573 = vunpack.c.l.b16 %v539
      %v574 = vunpack.c.h.b16 %v538
      %v575 = vunpack.c.h.b16 %v539
      %v576 = vunpack.c.l.b16 %v540
      %v577 = vunpack.c.l.b16 %v541
      %v578 = vunpack.c.h.b16 %v540
      %v579 = vunpack.c.h.b16 %v541
      %v580 = vunpack.c.l.b16 %v542
      %v581 = vunpack.c.l.b16 %v543
      %v582 = vunpack.c.h.b16 %v542
      %v583 = vunpack.c.h.b16 %v543
      %v584 = vunpack.c.l.b16 %v544
      %v585 = vunpack.c.l.b16 %v545
      %v586 = vunpack.c.h.b16 %v544
      %v587 = vunpack.c.h.b16 %v545
      %v588 = vunpack.c.l.b16 %v546
      %v589 = vunpack.c.l.b16 %v547
      %v590 = vunpack.c.h.b16 %v546
      %v591 = vunpack.c.h.b16 %v547
      %v592 = vunpack.c.l.b16 %v548
      %v593 = vunpack.c.l.b16 %v549
      %v594 = vunpack.c.h.b16 %v548
      %v595 = vunpack.c.h.b16 %v549
      %v596 = vunpack.c.l.b16 %v550
      %v597 = vunpack.c.l.b16 %v551
      %v598 = vunpack.c.h.b16 %v550
      %v599 = vunpack.c.h.b16 %v551
      %v600 = vpack.c.b16 %v569, %v568
      %v601 = vpack.c.b16 %v571, %v570
      %v602 = vpack.c.b16 %v573, %v572
      %v603 = vpack.c.b16 %v575, %v574
      %v604 = vpack.c.b16 %v577, %v576
      %v605 = vpack.c.b16 %v579, %v578
      %v606 = vpack.c.b16 %v581, %v580
      %v607 = vpack.c.b16 %v583, %v582
      %v608 = vpack.c.b16 %v585, %v584
      %v609 = vpack.c.b16 %v587, %v586
      %v610 = vpack.c.b16 %v589, %v588
      %v611 = vpack.c.b16 %v591, %v590
      %v612 = vpack.c.b16 %v593, %v592
      %v613 = vpack.c.b16 %v595, %v594
      %v614 = vpack.c.b16 %v597, %v596
      %v615 = vpack.c.b16 %v599, %v598
      %632 = vst [vmem:[%s196] sm:$0xff] %v600
      %633 = vst [vmem:[%s196 + $0x8] sm:$0xff] %v601
      %634 = vst [vmem:[%s196 + $0x10] sm:$0xff] %v602
      %635 = vst [vmem:[%s196 + $0x18] sm:$0xff] %v603
      %636 = vst [vmem:[%s196 + $0x20] sm:$0xff] %v604
      %637 = vst [vmem:[%s196 + $0x28] sm:$0xff] %v605
      %638 = vst [vmem:[%s196 + $0x30] sm:$0xff] %v606
      %639 = vst [vmem:[%s196 + $0x38] sm:$0xff] %v607
      %640 = vst [vmem:[%s196 + $0x40] sm:$0xff] %v608
      %641 = vst [vmem:[%s196 + $0x48] sm:$0xff] %v609
      %642 = vst [vmem:[%s196 + $0x50] sm:$0xff] %v610
      %643 = vst [vmem:[%s196 + $0x58] sm:$0xff] %v611
      %644 = vst [vmem:[%s196 + $0x60] sm:$0xff] %v612
      %645 = vst [vmem:[%s196 + $0x68] sm:$0xff] %v613
      %646 = vst [vmem:[%s196 + $0x70] sm:$0xff] %v614
      %647 = vst [vmem:[%s196 + $0x78] sm:$0xff] %v615
      %s648 = smul.u32 16, %s14
      %p649 = scmp.lt.s32.totalorder %s648, 31
      %s650 = scalar_select %p649, %s648, 31
      %s651 = smul.addr %s650, 2
      %s652 = smul.addr %s651, 4
      %s653 = scalar_lea.vmem %s3, %s652
      // Predicated region
      $region33: #{dgi_forward.5} parent=31 // pred_check
        %p654 = pneg %p105
      $region34: #{dgi_forward.5} parent=31 // pred_check_branch
        %656 = sbr.rel (%p654) target = $region36
      $region35: #{dgi_forward.5} parent=31 // pred_region
        %s657 = smul.u32 16, %s14
      $region36: #{dgi_forward.5} parent=31 // pred_fallthru
        _
    $region32: #{dgi_forward.5} parent=5 // pred_fallthru
      _
    %p658 = scmp.le.s32.totalorder 2, %s9
    // Predicated region
    $region37: #{dgi_forward.5} parent=5 // pred_check
      %p659 = pneg %p658
    $region38: #{dgi_forward.5} parent=5 // pred_check_branch
      %661 = sbr.rel (%p659) target = $region40
    $region39: #{dgi_forward.5} parent=5 // pred_region
      %s662 = ssub.s32 %s9, 2
      // Predicated region
      $region41: #{dgi_forward.5} parent=39 // pred_check
        %p663 = pneg %p111
      $region42: #{dgi_forward.5} parent=39 // pred_check_branch
        %665 = sbr.rel (%p663) target = $region44
      $region43: #{dgi_forward.5} parent=39 // pred_region
        %s666 = smul.u32 16, %s15
        %p667 = scmp.lt.s32.totalorder %s666, 31
        %s668 = scalar_select %p667, %s666, 31
        %s669 = smul.addr %s668, 2
        %s670 = smul.addr %s669, 4
        %s671 = scalar_lea.vmem %s3, %s670
      $region44: #{dgi_forward.5} parent=39 // pred_fallthru
        _
    $region40: #{dgi_forward.5} parent=5 // pred_fallthru
      _
  $region6: #{dgi_forward.5} parent=0 // loop_footer
    %s13 = sadd.s32 1, %s9
  $region7: #{dgi_forward.5} parent=0 // loop_footer_branch
    %8 = sbr.rel target = $region3
  $region8: #{dgi_forward.5} parent=0 // loop_exit
    _

// kernel: dgi_forward.6
$region0: #{dgi_forward.6}
  #allocation0 [shape = 'u32[]', space=smem, size = 0x4, offset = 0x4, fixed_abs, tag = 'smem constant byte address 0x4 - core index']
  #allocation1 [shape = 'u32[144,128]{1,0:T(1,128)}', space=vmem, size = 0x12000, scoped, tag = 'internal scratch']
  #allocation2 [shape = 'f32[128,256]{1,0:T(8,128)}', space=vmem, size = 0x20000, scoped, tag = 'scratch operand']
  %s0 = inlined_call_operand.vmem [shape: bf16[256,256], index: 0, kind: input, shape index: {}]
  %s1 = inlined_call_operand.vmem [shape: bf16[256,256], index: 1, kind: input, shape index: {}]
  %s2 = inlined_call_operand.vmem [shape: f32[1,128], index: 2, kind: input, shape index: {}]
  %s3 = inlined_call_operand.vmem [shape: f32[256,128], index: 3, kind: output, shape index: {0}]
  %s4 = inlined_call_operand.vmem [shape: f32[256,128], index: 4, kind: output, shape index: {1}]
  %5 = xla_tuple %s3, %s4
  %s6 = sld [smem:[#allocation0]]
  $region102: #{dgi_forward.6} parent=0
    _
  %s8 = ssub.s32 1, %s6
  %s9 = scalar_select 0, %s8, %s6
  $region1: #{dgi_forward.6} parent=0
    #allocation3 [shape = 'u8[65536]{0}', space=vmem, size = 0x10000, scoped, tag = 'input window, operand 0']
    loop: start=0, step=1, limit=6
    $region2: #{dgi_forward.6} parent=1 // loop_pre_header
      _
    $region3: #{dgi_forward.6} parent=1 // loop_header
      %s11 = sphi 0, %s15
      %p12 = scmp.ge.s32.totalorder %s11, 6
      %s18 = sphi 0, %s30
      %s19 = sphi 0, %s26
      %s20 = sphi 0, %s18
      %s21 = sphi 0, %s19
      %s22 = sphi 0, %s20
      %s23 = sphi 0, %s21
      %s35 = sphi 0, %s37
      %s38 = sphi 0, %s35
      %s39 = sphi 0, %s38
      %s55 = sphi 0, %s39
      %s61 = sphi 0, %s63
      %s64 = sphi 0, %s61
      %s65 = sphi 0, %s64
      %s81 = sphi 0, %s65
      %s85 = sphi 0, %s85
      %s87 = sphi 0, %s85
      %s88 = sphi 0, %s87
      %s102 = sphi 0, %s88
      %s108 = sphi 0, %s110
      %s111 = sphi 0, %s108
      %s112 = sphi 0, %s111
      %s128 = sphi 0, %s112
      %s134 = sphi 0, %s136
      %s137 = sphi 0, %s134
      %s138 = sphi 0, %s137
      %s154 = sphi 0, %s138
    $region4: #{dgi_forward.6} parent=1 // loop_header_branch
      %14 = sbr.rel (%p12) target = $region8
    $region5: #{dgi_forward.6} parent=1 // loop_body
      %s16 = ssub.s32 %s11, 1
      %s17 = ssub.s32 %s11, 2
      %s24 = sadd.s32 1, %s19
      %p25 = scmp.ge.s32.totalorder %s24, 2
      %s26 = scalar_select %p25, 0, %s24
      %s27 = sadd.s32 1, %s18
      %s28 = scalar_select %p25, %s27, %s18
      %p29 = scmp.ge.s32.totalorder %s28, 2
      %s30 = scalar_select %p29, 0, %s28
      %s31 = ssub.s32 %s18, %s30
      %s32 = ssub.s32 %s19, %s26
      %s33 = sor.u32 %s31, %s32
      %p34 = scmp.eq.s32.totalorder %s33, 0
      %s36 = sadd.s32 %s35, 1
      %s37 = scalar_select %p34, %s35, %s36
      %p40 = pneg %p34
      %p41 = scmp.eq.s32.totalorder %s11, 3
      %p42 = por %p40, %p41
      %p43 = scmp.ne.s32.totalorder %s35, %s38
      %p44 = scmp.eq.s32.totalorder %s11, 0
      %p45 = por %p43, %p44
      %p46 = scmp.ne.s32.totalorder %s35, %s38
      %p47 = scmp.eq.s32.totalorder %s16, 3
      %p48 = por %p46, %p47
      %p49 = scmp.ne.s32.totalorder %s38, %s39
      %p50 = scmp.eq.s32.totalorder %s16, 0
      %p51 = por %p49, %p50
      %p52 = scmp.ne.s32.totalorder %s38, %s39
      %p53 = scmp.eq.s32.totalorder %s17, 3
      %p54 = por %p52, %p53
      %p56 = scmp.ne.s32.totalorder %s39, %s55
      %p57 = scmp.eq.s32.totalorder %s17, 0
      %p58 = por %p56, %p57
      %s59 = ssub.s32 %s19, %s26
      %p60 = scmp.eq.s32.totalorder %s59, 0
      %s62 = sadd.s32 %s61, 1
      %s63 = scalar_select %p60, %s61, %s62
      %p66 = pneg %p60
      %p67 = scmp.eq.s32.totalorder %s11, 3
      %p68 = por %p66, %p67
      %p69 = scmp.ne.s32.totalorder %s61, %s64
      %p70 = scmp.eq.s32.totalorder %s11, 0
      %p71 = por %p69, %p70
      %p72 = scmp.ne.s32.totalorder %s61, %s64
      %p73 = scmp.eq.s32.totalorder %s16, 3
      %p74 = por %p72, %p73
      %p75 = scmp.ne.s32.totalorder %s64, %s65
      %p76 = scmp.eq.s32.totalorder %s16, 0
      %p77 = por %p75, %p76
      %p78 = scmp.ne.s32.totalorder %s64, %s65
      %p79 = scmp.eq.s32.totalorder %s17, 3
      %p80 = por %p78, %p79
      %p82 = scmp.ne.s32.totalorder %s65, %s81
      %p83 = scmp.eq.s32.totalorder %s17, 0
      %p84 = por %p82, %p83
      %s86 = sadd.s32 %s85, 1
      %p89 = scmp.eq.s32.totalorder %s11, 3
      %p90 = scmp.ne.s32.totalorder %s85, %s87
      %p91 = scmp.eq.s32.totalorder %s11, 0
      %p92 = por %p90, %p91
      %p93 = scmp.ne.s32.totalorder %s85, %s87
      %p94 = scmp.eq.s32.totalorder %s16, 3
      %p95 = por %p93, %p94
      %p96 = scmp.ne.s32.totalorder %s87, %s88
      %p97 = scmp.eq.s32.totalorder %s16, 0
      %p98 = por %p96, %p97
      %p99 = scmp.ne.s32.totalorder %s87, %s88
      %p100 = scmp.eq.s32.totalorder %s17, 3
      %p101 = por %p99, %p100
      %p103 = scmp.ne.s32.totalorder %s88, %s102
      %p104 = scmp.eq.s32.totalorder %s17, 0
      %p105 = por %p103, %p104
      %s106 = ssub.s32 %s18, %s30
      %p107 = scmp.eq.s32.totalorder %s106, 0
      %s109 = sadd.s32 %s108, 1
      %s110 = scalar_select %p107, %s108, %s109
      %p113 = pneg %p107
      %p114 = scmp.eq.s32.totalorder %s11, 3
      %p115 = por %p113, %p114
      %p116 = scmp.ne.s32.totalorder %s108, %s111
      %p117 = scmp.eq.s32.totalorder %s11, 0
      %p118 = por %p116, %p117
      %p119 = scmp.ne.s32.totalorder %s108, %s111
      %p120 = scmp.eq.s32.totalorder %s16, 3
      %p121 = por %p119, %p120
      %p122 = scmp.ne.s32.totalorder %s111, %s112
      %p123 = scmp.eq.s32.totalorder %s16, 0
      %p124 = por %p122, %p123
      %p125 = scmp.ne.s32.totalorder %s111, %s112
      %p126 = scmp.eq.s32.totalorder %s17, 3
      %p127 = por %p125, %p126
      %p129 = scmp.ne.s32.totalorder %s112, %s128
      %p130 = scmp.eq.s32.totalorder %s17, 0
      %p131 = por %p129, %p130
      %s132 = ssub.s32 %s18, %s30
      %p133 = scmp.eq.s32.totalorder %s132, 0
      %s135 = sadd.s32 %s134, 1
      %s136 = scalar_select %p133, %s134, %s135
      %p139 = pneg %p133
      %p140 = scmp.eq.s32.totalorder %s11, 3
      %p141 = por %p139, %p140
      %p142 = scmp.ne.s32.totalorder %s134, %s137
      %p143 = scmp.eq.s32.totalorder %s11, 0
      %p144 = por %p142, %p143
      %p145 = scmp.ne.s32.totalorder %s134, %s137
      %p146 = scmp.eq.s32.totalorder %s16, 3
      %p147 = por %p145, %p146
      %p148 = scmp.ne.s32.totalorder %s137, %s138
      %p149 = scmp.eq.s32.totalorder %s16, 0
      %p150 = por %p148, %p149
      %p151 = scmp.ne.s32.totalorder %s137, %s138
      %p152 = scmp.eq.s32.totalorder %s17, 3
      %p153 = por %p151, %p152
      %p155 = scmp.ne.s32.totalorder %s138, %s154
      %p156 = scmp.eq.s32.totalorder %s17, 0
      %p157 = por %p155, %p156
      %p158 = scmp.le.s32.totalorder 1, %s11
      %p159 = scmp.lt.s32.totalorder %s11, 5
      %p160 = pnand %p158, %p159
      %p161 = pneg %p160
      // Predicated region
      $region9: #{dgi_forward.6} parent=5 // pred_check
        _
      $region10: #{dgi_forward.6} parent=5 // pred_check_branch
        %163 = sbr.rel (%p160) target = $region12
      $region11: #{dgi_forward.6} parent=5 // pred_region
        %s164 = ssub.s32 %s11, 1
        // Predicated region
        $region13: #{dgi_forward.6} parent=11 // pred_check
          %p165 = pneg %p98
        $region14: #{dgi_forward.6} parent=11 // pred_check_branch
          %167 = sbr.rel (%p165) target = $region16
        $region15: #{dgi_forward.6} parent=11 // pred_region
          _
        $region16: #{dgi_forward.6} parent=11 // pred_fallthru
          _
      $region12: #{dgi_forward.6} parent=5 // pred_fallthru
        _
      %p168 = scmp.lt.s32.totalorder %s11, 4
      // Predicated region
      $region17: #{dgi_forward.6} parent=5 // pred_check
        %p169 = pneg %p168
      $region18: #{dgi_forward.6} parent=5 // pred_check_branch
        %171 = sbr.rel (%p169) target = $region20
      $region19: #{dgi_forward.6} parent=5 // pred_region
        // Predicated region
        $region21: #{dgi_forward.6} parent=19 // pred_check
          %p172 = pneg %p45
        $region22: #{dgi_forward.6} parent=19 // pred_check_branch
          %174 = sbr.rel (%p172) target = $region24
        $region23: #{dgi_forward.6} parent=19 // pred_region
          %s175 = sand.u32 %s35, 1
          %s176 = sand.u32 %s35, 1
          %s177 = smul.addr %s176, 64
          %s178 = scalar_lea.vmem [#allocation3], %s177
          %s179 = smul.u32 16, %s18
          %s180 = smul.addr %s179, 2
          %s181 = sadd.s32 %s19, %s180
          %s182 = smul.addr %s181, 4
          %s183 = scalar_lea.vmem %s0, %s182
          // Predicated region
          $region25: #{dgi_forward.6} parent=23 // pred_check
            _
          $region26: #{dgi_forward.6} parent=23 // pred_check_branch
            %185 = sbr.rel (0) target = $region28
          $region27: #{dgi_forward.6} parent=23 // pred_region
            // Predicated region
            $region29: #{dgi_forward.6} parent=27 // pred_check
              _
            $region30: #{dgi_forward.6} parent=27 // pred_check_branch
              %187 = sbr.rel target = $region32
            $region31: #{dgi_forward.6} parent=27 // pred_region
              // Predicated region
              $region44: #{dgi_forward.6} parent=31 // pred_check
                _
              $region45: #{dgi_forward.6} parent=31 // pred_check_branch
                %233 = sbr.rel (0) target = $region47
              $region46: #{dgi_forward.6} parent=31 // pred_region
                loop: start=0, step=1, limit=1
                $region48: #{dgi_forward.6} parent=46 // loop_pre_header
                  _
                $region49: #{dgi_forward.6} parent=46 // loop_header
                  %s235 = sphi 0, %s239
                  %p236 = scmp.ge.s32.totalorder %s235, 1
                  %s240 = sphi %s183, %s183
                  %s241 = sphi %s178, %s178
                $region50: #{dgi_forward.6} parent=46 // loop_header_branch
                  %238 = sbr.rel (%p236) target = $region54
                $region51: #{dgi_forward.6} parent=46 // loop_body
                  _
                $region52: #{dgi_forward.6} parent=46 // loop_footer
                  %s239 = sadd.s32 1, %s235
                $region53: #{dgi_forward.6} parent=46 // loop_footer_branch
                  %234 = sbr.rel target = $region49
                $region54: #{dgi_forward.6} parent=46 // loop_exit
                  _
                %s243 = ssub.s32 16, 1
                loop: start=0, step=1, limit=1
                $region55: #{dgi_forward.6} parent=46 // loop_pre_header
                  _
                $region56: #{dgi_forward.6} parent=46 // loop_header
                  %s245 = sphi 0, %s249
                  %p246 = scmp.ge.s32.totalorder %s245, 1
                  %s250 = sphi %s183, %s183
                  %s251 = sphi %s178, %s178
                $region57: #{dgi_forward.6} parent=46 // loop_header_branch
                  %248 = sbr.rel (%p246) target = $region61
                $region58: #{dgi_forward.6} parent=46 // loop_body
                  %v252 = vld [vmem:[%s250] sm:%s243]
                  %253 = vst [vmem:[%s251] sm:%s243] %v252
                  %v254 = vld [vmem:[%s250 + $0x8] sm:%s243]
                  %255 = vst [vmem:[%s251 + $0x4] sm:%s243] %v254
                  %v256 = vld [vmem:[%s250 + $0x10] sm:%s243]
                  %257 = vst [vmem:[%s251 + $0x8] sm:%s243] %v256
                  %v258 = vld [vmem:[%s250 + $0x18] sm:%s243]
                  %259 = vst [vmem:[%s251 + $0xc] sm:%s243] %v258
                  %v260 = vld [vmem:[%s250 + $0x20] sm:%s243]
                  %261 = vst [vmem:[%s251 + $0x10] sm:%s243] %v260
                  %v262 = vld [vmem:[%s250 + $0x28] sm:%s243]
                  %263 = vst [vmem:[%s251 + $0x14] sm:%s243] %v262
                  %v264 = vld [vmem:[%s250 + $0x30] sm:%s243]
                  %265 = vst [vmem:[%s251 + $0x18] sm:%s243] %v264
                  %v266 = vld [vmem:[%s250 + $0x38] sm:%s243]
                  %267 = vst [vmem:[%s251 + $0x1c] sm:%s243] %v266
                  %v268 = vld [vmem:[%s250 + $0x40] sm:%s243]
                  %269 = vst [vmem:[%s251 + $0x20] sm:%s243] %v268
                  %v270 = vld [vmem:[%s250 + $0x48] sm:%s243]
                  %271 = vst [vmem:[%s251 + $0x24] sm:%s243] %v270
                  %v272 = vld [vmem:[%s250 + $0x50] sm:%s243]
                  %273 = vst [vmem:[%s251 + $0x28] sm:%s243] %v272
                  %v274 = vld [vmem:[%s250 + $0x58] sm:%s243]
                  %275 = vst [vmem:[%s251 + $0x2c] sm:%s243] %v274
                  %v276 = vld [vmem:[%s250 + $0x60] sm:%s243]
                  %277 = vst [vmem:[%s251 + $0x30] sm:%s243] %v276
                  %v278 = vld [vmem:[%s250 + $0x68] sm:%s243]
                  %279 = vst [vmem:[%s251 + $0x34] sm:%s243] %v278
                  %v280 = vld [vmem:[%s250 + $0x70] sm:%s243]
                  %281 = vst [vmem:[%s251 + $0x38] sm:%s243] %v280
                  %v282 = vld [vmem:[%s250 + $0x78] sm:%s243]
                  %283 = vst [vmem:[%s251 + $0x3c] sm:%s243] %v282
                $region59: #{dgi_forward.6} parent=46 // loop_footer
                  %s249 = sadd.s32 1, %s245
                $region60: #{dgi_forward.6} parent=46 // loop_footer_branch
                  %244 = sbr.rel target = $region56
                $region61: #{dgi_forward.6} parent=46 // loop_exit
                  _
              $region47: #{dgi_forward.6} parent=31 // pred_fallthru
                _
            $region32: #{dgi_forward.6} parent=27 // pred_fallthru
              _
            // Predicated region
            $region33: #{dgi_forward.6} parent=27 // pred_check
              _
            $region34: #{dgi_forward.6} parent=27 // pred_check_branch
              %189 = sbr.rel (0) target = $region36
            $region35: #{dgi_forward.6} parent=27 // pred_region
              %s191 = ssub.s32 16, 1
              loop: start=0, step=1, limit=1
              $region37: #{dgi_forward.6} parent=35 // loop_pre_header
                _
              $region38: #{dgi_forward.6} parent=35 // loop_header
                %s193 = sphi 0, %s197
                %p194 = scmp.ge.s32.totalorder %s193, 1
                %s198 = sphi %s183, %s183
                %s199 = sphi %s178, %s178
              $region39: #{dgi_forward.6} parent=35 // loop_header_branch
                %196 = sbr.rel (%p194) target = $region43
              $region40: #{dgi_forward.6} parent=35 // loop_body
                %v200 = vld [vmem:[%s198] sm:%s191]
                %201 = vst [vmem:[%s199] sm:%s191] %v200
                %v202 = vld [vmem:[%s198 + $0x8] sm:%s191]
                %203 = vst [vmem:[%s199 + $0x4] sm:%s191] %v202
                %v204 = vld [vmem:[%s198 + $0x10] sm:%s191]
                %205 = vst [vmem:[%s199 + $0x8] sm:%s191] %v204
                %v206 = vld [vmem:[%s198 + $0x18] sm:%s191]
                %207 = vst [vmem:[%s199 + $0xc] sm:%s191] %v206
                %v208 = vld [vmem:[%s198 + $0x20] sm:%s191]
                %209 = vst [vmem:[%s199 + $0x10] sm:%s191] %v208
                %v210 = vld [vmem:[%s198 + $0x28] sm:%s191]
                %211 = vst [vmem:[%s199 + $0x14] sm:%s191] %v210
                %v212 = vld [vmem:[%s198 + $0x30] sm:%s191]
                %213 = vst [vmem:[%s199 + $0x18] sm:%s191] %v212
                %v214 = vld [vmem:[%s198 + $0x38] sm:%s191]
                %215 = vst [vmem:[%s199 + $0x1c] sm:%s191] %v214
                %v216 = vld [vmem:[%s198 + $0x40] sm:%s191]
                %217 = vst [vmem:[%s199 + $0x20] sm:%s191] %v216
                %v218 = vld [vmem:[%s198 + $0x48] sm:%s191]
                %219 = vst [vmem:[%s199 + $0x24] sm:%s191] %v218
                %v220 = vld [vmem:[%s198 + $0x50] sm:%s191]
                %221 = vst [vmem:[%s199 + $0x28] sm:%s191] %v220
                %v222 = vld [vmem:[%s198 + $0x58] sm:%s191]
                %223 = vst [vmem:[%s199 + $0x2c] sm:%s191] %v222
                %v224 = vld [vmem:[%s198 + $0x60] sm:%s191]
                %225 = vst [vmem:[%s199 + $0x30] sm:%s191] %v224
                %v226 = vld [vmem:[%s198 + $0x68] sm:%s191]
                %227 = vst [vmem:[%s199 + $0x34] sm:%s191] %v226
                %v228 = vld [vmem:[%s198 + $0x70] sm:%s191]
                %229 = vst [vmem:[%s199 + $0x38] sm:%s191] %v228
                %v230 = vld [vmem:[%s198 + $0x78] sm:%s191]
                %231 = vst [vmem:[%s199 + $0x3c] sm:%s191] %v230
              $region41: #{dgi_forward.6} parent=35 // loop_footer
                %s197 = sadd.s32 1, %s193
              $region42: #{dgi_forward.6} parent=35 // loop_footer_branch
                %192 = sbr.rel target = $region38
              $region43: #{dgi_forward.6} parent=35 // loop_exit
                _
            $region36: #{dgi_forward.6} parent=27 // pred_fallthru
              _
          $region28: #{dgi_forward.6} parent=23 // pred_fallthru
            _
          %284 = vnop
        $region24: #{dgi_forward.6} parent=19 // pred_fallthru
          _
        // Predicated region
        $region62: #{dgi_forward.6} parent=19 // pred_check
          %p285 = pneg %p71
        $region63: #{dgi_forward.6} parent=19 // pred_check_branch
          %287 = sbr.rel (%p285) target = $region65
        $region64: #{dgi_forward.6} parent=19 // pred_region
          %s288 = smul.u32 16, %s19
          %p289 = scmp.lt.s32.totalorder %s288, 31
          %s290 = scalar_select %p289, %s288, 31
          %s291 = smul.addr %s290, 2
          %s292 = smul.addr %s291, 4
          %s293 = scalar_lea.vmem %s1, %s292
          %s294 = smul.u32 16, %s19
        $region65: #{dgi_forward.6} parent=19 // pred_fallthru
          _
      $region20: #{dgi_forward.6} parent=5 // pred_fallthru
        _
      %p295 = scmp.le.s32.totalorder 1, %s11
      %p296 = scmp.lt.s32.totalorder %s11, 5
      %p297 = pnand %p295, %p296
      %p298 = pneg %p297
      // Predicated region
      $region66: #{dgi_forward.6} parent=5 // pred_check
        _
      $region67: #{dgi_forward.6} parent=5 // pred_check_branch
        %300 = sbr.rel (%p297) target = $region69
      $region68: #{dgi_forward.6} parent=5 // pred_region
        %s301 = ssub.s32 %s11, 1
        %s302 = sand.u32 %s38, 1
        %s303 = sand.u32 %s38, 1
        %s304 = smul.addr %s303, 64
        %s305 = scalar_lea.vmem [#allocation3], %s304
        // Predicated region
        $region70: #{dgi_forward.6} parent=68 // pred_check
          %p306 = pneg %p51
        $region71: #{dgi_forward.6} parent=68 // pred_check_branch
          %308 = sbr.rel (%p306) target = $region73
        $region72: #{dgi_forward.6} parent=68 // pred_region
          _
        $region73: #{dgi_forward.6} parent=68 // pred_fallthru
          _
        %s309 = sand.u32 %s38, 1
        %s310 = sand.u32 %s38, 1
        %s311 = smul.addr %s310, 64
        %s312 = scalar_lea.vmem [#allocation3], %s311
        %p313 = pneg %p51
        %p314 = pneg %p48
        %s315 = smul.u32 16, %s21
        %p316 = scmp.lt.s32.totalorder %s315, 31
        %s317 = scalar_select %p316, %s315, 31
        %s318 = smul.addr %s317, 2
        %s319 = smul.addr %s318, 4
        %s320 = scalar_lea.vmem %s1, %s319
        %p321 = pneg %p77
        %p322 = pneg %p74
        %p323 = pneg %p98
        %p324 = pneg %p95
        %p325 = pneg %p124
        %p326 = pneg %p121
        %s327 = smul.u32 16, %s20
        %p328 = scmp.lt.s32.totalorder %s327, 31
        %s329 = scalar_select %p328, %s327, 31
        %s330 = smul.addr %s329, 8
        %s331 = scalar_lea.vmem %s3, %s330
        %p332 = pneg %p150
        %p333 = pneg %p147
        %s334 = smul.u32 16, %s20
        %p335 = scmp.lt.s32.totalorder %s334, 31
        %s336 = scalar_select %p335, %s334, 31
        %s337 = smul.addr %s336, 8
        %s338 = scalar_lea.vmem %s4, %s337
        %s339 = smul.u32 16, %s20
        %s340 = smul.u32 16, %s21
        %p341 = scmp.lt.s32.totalorder %s340, 31
        %s342 = scalar_select %p341, %s340, 31
        %s343 = smul.addr %s342, 2
        %s344 = smul.addr %s343, 4
        %s345 = scalar_lea.vmem %s1, %s344
        %s346 = smul.u32 16, %s21
        %s347 = smul.u32 16, %s20
        %p348 = scmp.lt.s32.totalorder %s347, 31
        %s349 = scalar_select %p348, %s347, 31
        %s350 = smul.addr %s349, 8
        %s351 = scalar_lea.vmem %s3, %s350
        %s352 = smul.u32 16, %s20
        %s353 = smul.u32 16, %s20
        %p354 = scmp.lt.s32.totalorder %s353, 31
        %s355 = scalar_select %p354, %s353, 31
        %s356 = smul.addr %s355, 8
        %s357 = scalar_lea.vmem %s4, %s356
        %s358 = smul.u32 16, %s20
        %p360 = scmp.eq.s32.totalorder %s21, 0
        // Predicated region
        $region74: #{dgi_forward.6} parent=68 // pred_check
          %p361 = pneg %p360
        $region75: #{dgi_forward.6} parent=68 // pred_check_branch
          %363 = sbr.rel (%p361) target = $region77
        $region76: #{dgi_forward.6} parent=68 // pred_region
          %364 = vst [vmem:[#allocation2] sm:$0xff] 0.0
          %365 = vst [vmem:[#allocation2 + $0x8] sm:$0xff] 0.0
          %366 = vst [vmem:[#allocation2 + $0x10] sm:$0xff] 0.0
          %367 = vst [vmem:[#allocation2 + $0x18] sm:$0xff] 0.0
          %368 = vst [vmem:[#allocation2 + $0x20] sm:$0xff] 0.0
          %369 = vst [vmem:[#allocation2 + $0x28] sm:$0xff] 0.0
          %370 = vst [vmem:[#allocation2 + $0x30] sm:$0xff] 0.0
          %371 = vst [vmem:[#allocation2 + $0x38] sm:$0xff] 0.0
          %372 = vst [vmem:[#allocation2 + $0x40] sm:$0xff] 0.0
          %373 = vst [vmem:[#allocation2 + $0x48] sm:$0xff] 0.0
          %374 = vst [vmem:[#allocation2 + $0x50] sm:$0xff] 0.0
          %375 = vst [vmem:[#allocation2 + $0x58] sm:$0xff] 0.0
          %376 = vst [vmem:[#allocation2 + $0x60] sm:$0xff] 0.0
          %377 = vst [vmem:[#allocation2 + $0x68] sm:$0xff] 0.0
          %378 = vst [vmem:[#allocation2 + $0x70] sm:$0xff] 0.0
          %379 = vst [vmem:[#allocation2 + $0x78] sm:$0xff] 0.0
          %380 = vst [vmem:[#allocation2 + $0x80] sm:$0xff] 0.0
          %381 = vst [vmem:[#allocation2 + $0x88] sm:$0xff] 0.0
          %382 = vst [vmem:[#allocation2 + $0x90] sm:$0xff] 0.0
          %383 = vst [vmem:[#allocation2 + $0x98] sm:$0xff] 0.0
          %384 = vst [vmem:[#allocation2 + $0xa0] sm:$0xff] 0.0
          %385 = vst [vmem:[#allocation2 + $0xa8] sm:$0xff] 0.0
          %386 = vst [vmem:[#allocation2 + $0xb0] sm:$0xff] 0.0
          %387 = vst [vmem:[#allocation2 + $0xb8] sm:$0xff] 0.0
          %388 = vst [vmem:[#allocation2 + $0xc0] sm:$0xff] 0.0
          %389 = vst [vmem:[#allocation2 + $0xc8] sm:$0xff] 0.0
          %390 = vst [vmem:[#allocation2 + $0xd0] sm:$0xff] 0.0
          %391 = vst [vmem:[#allocation2 + $0xd8] sm:$0xff] 0.0
          %392 = vst [vmem:[#allocation2 + $0xe0] sm:$0xff] 0.0
          %393 = vst [vmem:[#allocation2 + $0xe8] sm:$0xff] 0.0
          %394 = vst [vmem:[#allocation2 + $0xf0] sm:$0xff] 0.0
          %395 = vst [vmem:[#allocation2 + $0xf8] sm:$0xff] 0.0
        $region77: #{dgi_forward.6} parent=68 // pred_fallthru
          _
        %v396 = vld [vmem:[#allocation2] sm:$0xff]
        %v397 = vld [vmem:[#allocation2 + $0x8] sm:$0xff]
        %v398 = vld [vmem:[#allocation2 + $0x10] sm:$0xff]
        %v399 = vld [vmem:[#allocation2 + $0x18] sm:$0xff]
        %v400 = vld [vmem:[#allocation2 + $0x20] sm:$0xff]
        %v401 = vld [vmem:[#allocation2 + $0x28] sm:$0xff]
        %v402 = vld [vmem:[#allocation2 + $0x30] sm:$0xff]
        %v403 = vld [vmem:[#allocation2 + $0x38] sm:$0xff]
        %v404 = vld [vmem:[#allocation2 + $0x40] sm:$0xff]
        %v405 = vld [vmem:[#allocation2 + $0x48] sm:$0xff]
        %v406 = vld [vmem:[#allocation2 + $0x50] sm:$0xff]
        %v407 = vld [vmem:[#allocation2 + $0x58] sm:$0xff]
        %v408 = vld [vmem:[#allocation2 + $0x60] sm:$0xff]
        %v409 = vld [vmem:[#allocation2 + $0x68] sm:$0xff]
        %v410 = vld [vmem:[#allocation2 + $0x70] sm:$0xff]
        %v411 = vld [vmem:[#allocation2 + $0x78] sm:$0xff]
        %v412 = vld [vmem:[#allocation2 + $0x80] sm:$0xff]
        %v413 = vld [vmem:[#allocation2 + $0x88] sm:$0xff]
        %v414 = vld [vmem:[#allocation2 + $0x90] sm:$0xff]
        %v415 = vld [vmem:[#allocation2 + $0x98] sm:$0xff]
        %v416 = vld [vmem:[#allocation2 + $0xa0] sm:$0xff]
        %v417 = vld [vmem:[#allocation2 + $0xa8] sm:$0xff]
        %v418 = vld [vmem:[#allocation2 + $0xb0] sm:$0xff]
        %v419 = vld [vmem:[#allocation2 + $0xb8] sm:$0xff]
        %v420 = vld [vmem:[#allocation2 + $0xc0] sm:$0xff]
        %v421 = vld [vmem:[#allocation2 + $0xc8] sm:$0xff]
        %v422 = vld [vmem:[#allocation2 + $0xd0] sm:$0xff]
        %v423 = vld [vmem:[#allocation2 + $0xd8] sm:$0xff]
        %v424 = vld [vmem:[#allocation2 + $0xe0] sm:$0xff]
        %v425 = vld [vmem:[#allocation2 + $0xe8] sm:$0xff]
        %v426 = vld [vmem:[#allocation2 + $0xf0] sm:$0xff]
        %v427 = vld [vmem:[#allocation2 + $0xf8] sm:$0xff]
        %v428 = vld [vmem:[%s305] sm:$0xf]
        %v429 = vld [vmem:[%s305 + $0x4] sm:$0xf]
        %v430 = vld [vmem:[%s305 + $0x8] sm:$0xf]
        %v431 = vld [vmem:[%s305 + $0xc] sm:$0xf]
        %v432 = vld [vmem:[%s305 + $0x10] sm:$0xf]
        %v433 = vld [vmem:[%s305 + $0x14] sm:$0xf]
        %v434 = vld [vmem:[%s305 + $0x18] sm:$0xf]
        %v435 = vld [vmem:[%s305 + $0x1c] sm:$0xf]
        %v436 = vld [vmem:[%s305 + $0x20] sm:$0xf]
        %v437 = vld [vmem:[%s305 + $0x24] sm:$0xf]
        %v438 = vld [vmem:[%s305 + $0x28] sm:$0xf]
        %v439 = vld [vmem:[%s305 + $0x2c] sm:$0xf]
        %v440 = vld [vmem:[%s305 + $0x30] sm:$0xf]
        %v441 = vld [vmem:[%s305 + $0x34] sm:$0xf]
        %v442 = vld [vmem:[%s305 + $0x38] sm:$0xf]
        %v443 = vld [vmem:[%s305 + $0x3c] sm:$0xf]
        %v444 = vld [vmem:[%s345] sm:$0xff]
        %v445 = vld [vmem:[%s345 + $0x8] sm:$0xff]
        %v446 = vld [vmem:[%s345 + $0x10] sm:$0xff]
        %v447 = vld [vmem:[%s345 + $0x18] sm:$0xff]
        %v448 = vld [vmem:[%s345 + $0x20] sm:$0xff]
        %v449 = vld [vmem:[%s345 + $0x28] sm:$0xff]
        %v450 = vld [vmem:[%s345 + $0x30] sm:$0xff]
        %v451 = vld [vmem:[%s345 + $0x38] sm:$0xff]
        %v452 = vld [vmem:[%s345 + $0x40] sm:$0xff]
        %v453 = vld [vmem:[%s345 + $0x48] sm:$0xff]
        %v454 = vld [vmem:[%s345 + $0x50] sm:$0xff]
        %v455 = vld [vmem:[%s345 + $0x58] sm:$0xff]
        %v456 = vld [vmem:[%s345 + $0x60] sm:$0xff]
        %v457 = vld [vmem:[%s345 + $0x68] sm:$0xff]
        %v458 = vld [vmem:[%s345 + $0x70] sm:$0xff]
        %v459 = vld [vmem:[%s345 + $0x78] sm:$0xff]
        %v476 = vunpack.c.l.b16 %v428
        %v477 = vunpack.c.l.b16 %v429
        %v478 = vunpack.c.l.b16 %v430
        %v479 = vunpack.c.l.b16 %v431
        %v480 = vunpack.c.l.b16 %v432
        %v481 = vunpack.c.l.b16 %v433
        %v482 = vunpack.c.l.b16 %v434
        %v483 = vunpack.c.l.b16 %v435
        %v484 = vunpack.c.l.b16 %v436
        %v485 = vunpack.c.l.b16 %v437
        %v486 = vunpack.c.l.b16 %v438
        %v487 = vunpack.c.l.b16 %v439
        %v488 = vunpack.c.l.b16 %v440
        %v489 = vunpack.c.l.b16 %v441
        %v490 = vunpack.c.l.b16 %v442
        %v491 = vunpack.c.l.b16 %v443
        %v492 = vpack.c.b16 %v477, %v476
        %v493 = vpack.c.b16 %v479, %v478
        %v494 = vpack.c.b16 %v481, %v480
        %v495 = vpack.c.b16 %v483, %v482
        %v496 = vpack.c.b16 %v485, %v484
        %v497 = vpack.c.b16 %v487, %v486
        %v498 = vpack.c.b16 %v489, %v488
        %v499 = vpack.c.b16 %v491, %v490
        %v524 = vunpack.c.l.b16 %v444
        %v525 = vunpack.c.h.b16 %v444
        %v526 = vunpack.c.l.b16 %v445
        %v527 = vunpack.c.h.b16 %v445
        %v528 = vunpack.c.l.b16 %v446
        %v529 = vunpack.c.h.b16 %v446
        %v530 = vunpack.c.l.b16 %v447
        %v531 = vunpack.c.h.b16 %v447
        %v532 = vunpack.c.l.b16 %v448
        %v533 = vunpack.c.h.b16 %v448
        %v534 = vunpack.c.l.b16 %v449
        %v535 = vunpack.c.h.b16 %v449
        %v536 = vunpack.c.l.b16 %v450
        %v537 = vunpack.c.h.b16 %v450
        %v538 = vunpack.c.l.b16 %v451
        %v539 = vunpack.c.h.b16 %v451
        %v540 = vunpack.c.l.b16 %v452
        %v541 = vunpack.c.h.b16 %v452
        %v542 = vunpack.c.l.b16 %v453
        %v543 = vunpack.c.h.b16 %v453
        %v544 = vunpack.c.l.b16 %v454
        %v545 = vunpack.c.h.b16 %v454
        %v546 = vunpack.c.l.b16 %v455
        %v547 = vunpack.c.h.b16 %v455
        %v548 = vunpack.c.l.b16 %v456
        %v549 = vunpack.c.h.b16 %v456
        %v550 = vunpack.c.l.b16 %v457
        %v551 = vunpack.c.h.b16 %v457
        %v552 = vunpack.c.l.b16 %v458
        %v553 = vunpack.c.h.b16 %v458
        %v554 = vunpack.c.l.b16 %v459
        %v555 = vunpack.c.h.b16 %v459
        %v556 = vpack.c.b16 %v526, %v524
        %v557 = vpack.c.b16 %v527, %v525
        %v558 = vpack.c.b16 %v530, %v528
        %v559 = vpack.c.b16 %v531, %v529
        %v560 = vpack.c.b16 %v534, %v532
        %v561 = vpack.c.b16 %v535, %v533
        %v562 = vpack.c.b16 %v538, %v536
        %v563 = vpack.c.b16 %v539, %v537
        %v564 = vpack.c.b16 %v542, %v540
        %v565 = vpack.c.b16 %v543, %v541
        %v566 = vpack.c.b16 %v546, %v544
        %v567 = vpack.c.b16 %v547, %v545
        %v568 = vpack.c.b16 %v550, %v548
        %v569 = vpack.c.b16 %v551, %v549
        %v570 = vpack.c.b16 %v554, %v552
        %v571 = vpack.c.b16 %v555, %v553
        %588 = vmatprep.subr.bf16.mxu0 %v571
        %589 = vmatpush1.bf16.msra.mxu0 %v570
        %590 = vmatprep.subr.bf16.mxu0 %v569
        %591 = vmatpush1.bf16.msra.mxu0 %v568
        %592 = vmatprep.subr.bf16.mxu0 %v567
        %593 = vmatpush1.bf16.msra.mxu0 %v566
        %594 = vmatprep.subr.bf16.mxu0 %v565
        %595 = vmatpush1.bf16.msra.mxu0 %v564
        %596 = vmatprep.subr.bf16.mxu0 %v563
        %597 = vmatpush1.bf16.msra.mxu0 %v562
        %598 = vmatprep.subr.bf16.mxu0 %v561
        %599 = vmatpush1.bf16.msra.mxu0 %v560
        %600 = vmatprep.subr.bf16.mxu0 %v559
        %601 = vmatpush1.bf16.msra.mxu0 %v558
        %602 = vmatprep.subr.bf16.mxu0 %v557
        %603 = vmatpush1.bf16.msra.mxu0 %v556
        %604 = vmatprep.subr.bf16.mxu0 0
        %605 = vmatpush2.bf16.msra.mxu0 0
        %606 = vmatprep.subr.bf16.mxu0 0
        %607 = vmatpush2.bf16.msra.mxu0 0
        %608 = vmatprep.subr.bf16.mxu0 0
        %609 = vmatpush2.bf16.msra.mxu0 0
        %610 = vmatprep.subr.bf16.mxu0 0
        %611 = vmatpush2.bf16.msra.mxu0 0
        %612 = vmatprep.subr.bf16.mxu0 0
        %613 = vmatpush2.bf16.msra.mxu0 0
        %614 = vmatprep.subr.bf16.mxu0 0
        %615 = vmatpush2.bf16.msra.mxu0 0
        %616 = vmatprep.subr.bf16.mxu0 0
        %617 = vmatpush2.bf16.msra.mxu0 0
        %618 = vmatprep.subr.bf16.mxu0 0
        %619 = vmatpush2.bf16.msra.mxu0 0
        %620 = vmatprep.mubr.bf16.mxu0 0
        %621 = vmatmul.mubr.bf16.gmra.mxu0 %v492
        %v622 = vpop.f32.mrf.mxu0
        %v623 = vadd.f32 0.0, %v622
        %v624 = vpop.f32.mrf.mxu0
        %v625 = vadd.f32 0.0, %v624
        %v626 = vpop.f32.mrf.mxu0
        %v627 = vadd.f32 0.0, %v626
        %v628 = vpop.f32.mrf.mxu0
        %v629 = vadd.f32 0.0, %v628
        %630 = vmatprep.mubr.bf16.mxu0 0
        %631 = vmatmul.mubr.bf16.gmra.mxu0 %v493
        %v632 = vpop.f32.mrf.mxu0
        %v633 = vadd.f32 0.0, %v632
        %v634 = vpop.f32.mrf.mxu0
        %v635 = vadd.f32 0.0, %v634
        %v636 = vpop.f32.mrf.mxu0
        %v637 = vadd.f32 0.0, %v636
        %v638 = vpop.f32.mrf.mxu0
        %v639 = vadd.f32 0.0, %v638
        %640 = vmatprep.mubr.bf16.mxu0 0
        %641 = vmatmul.mubr.bf16.gmra.mxu0 %v494
        %v642 = vpop.f32.mrf.mxu0
        %v643 = vadd.f32 0.0, %v642
        %v644 = vpop.f32.mrf.mxu0
        %v645 = vadd.f32 0.0, %v644
        %v646 = vpop.f32.mrf.mxu0
        %v647 = vadd.f32 0.0, %v646
        %v648 = vpop.f32.mrf.mxu0
        %v649 = vadd.f32 0.0, %v648
        %650 = vmatprep.mubr.bf16.mxu0 0
        %651 = vmatmul.mubr.bf16.gmra.mxu0 %v495
        %v652 = vpop.f32.mrf.mxu0
        %v653 = vadd.f32 0.0, %v652
        %v654 = vpop.f32.mrf.mxu0
        %v655 = vadd.f32 0.0, %v654
        %v656 = vpop.f32.mrf.mxu0
        %v657 = vadd.f32 0.0, %v656
        %v658 = vpop.f32.mrf.mxu0
        %v659 = vadd.f32 0.0, %v658
        %660 = vmatprep.mubr.bf16.mxu0 0
        %661 = vmatmul.mubr.bf16.gmra.mxu0 %v496
        %v662 = vpop.f32.mrf.mxu0
        %v663 = vadd.f32 0.0, %v662
        %v664 = vpop.f32.mrf.mxu0
        %v665 = vadd.f32 0.0, %v664
        %v666 = vpop.f32.mrf.mxu0
        %v667 = vadd.f32 0.0, %v666
        %v668 = vpop.f32.mrf.mxu0
        %v669 = vadd.f32 0.0, %v668
        %670 = vmatprep.mubr.bf16.mxu0 0
        %671 = vmatmul.mubr.bf16.gmra.mxu0 %v497
        %v672 = vpop.f32.mrf.mxu0
        %v673 = vadd.f32 0.0, %v672
        %v674 = vpop.f32.mrf.mxu0
        %v675 = vadd.f32 0.0, %v674
        %v676 = vpop.f32.mrf.mxu0
        %v677 = vadd.f32 0.0, %v676
        %v678 = vpop.f32.mrf.mxu0
        %v679 = vadd.f32 0.0, %v678
        %680 = vmatprep.mubr.bf16.mxu0 0
        %681 = vmatmul.mubr.bf16.gmra.mxu0 %v498
        %v682 = vpop.f32.mrf.mxu0
        %v683 = vadd.f32 0.0, %v682
        %v684 = vpop.f32.mrf.mxu0
        %v685 = vadd.f32 0.0, %v684
        %v686 = vpop.f32.mrf.mxu0
        %v687 = vadd.f32 0.0, %v686
        %v688 = vpop.f32.mrf.mxu0
        %v689 = vadd.f32 0.0, %v688
        %690 = vmatprep.mubr.bf16.mxu0 0
        %691 = vmatmul.mubr.bf16.gmra.mxu0 %v499
        %v692 = vpop.f32.mrf.mxu0
        %v693 = vadd.f32 0.0, %v692
        %v694 = vpop.f32.mrf.mxu0
        %v695 = vadd.f32 0.0, %v694
        %v696 = vpop.f32.mrf.mxu0
        %v697 = vadd.f32 0.0, %v696
        %v698 = vpop.f32.mrf.mxu0
        %v699 = vadd.f32 0.0, %v698
        %700 = vdwg.mxu0
        %v701 = vadd.f32 %v396, %v623
        %v702 = vadd.f32 %v397, %v625
        %v703 = vadd.f32 %v398, %v627
        %v704 = vadd.f32 %v399, %v629
        %v705 = vadd.f32 %v400, %v633
        %v706 = vadd.f32 %v401, %v635
        %v707 = vadd.f32 %v402, %v637
        %v708 = vadd.f32 %v403, %v639
        %v709 = vadd.f32 %v404, %v643
        %v710 = vadd.f32 %v405, %v645
        %v711 = vadd.f32 %v406, %v647
        %v712 = vadd.f32 %v407, %v649
        %v713 = vadd.f32 %v408, %v653
        %v714 = vadd.f32 %v409, %v655
        %v715 = vadd.f32 %v410, %v657
        %v716 = vadd.f32 %v411, %v659
        %v717 = vadd.f32 %v412, %v663
        %v718 = vadd.f32 %v413, %v665
        %v719 = vadd.f32 %v414, %v667
        %v720 = vadd.f32 %v415, %v669
        %v721 = vadd.f32 %v416, %v673
        %v722 = vadd.f32 %v417, %v675
        %v723 = vadd.f32 %v418, %v677
        %v724 = vadd.f32 %v419, %v679
        %v725 = vadd.f32 %v420, %v683
        %v726 = vadd.f32 %v421, %v685
        %v727 = vadd.f32 %v422, %v687
        %v728 = vadd.f32 %v423, %v689
        %v729 = vadd.f32 %v424, %v693
        %v730 = vadd.f32 %v425, %v695
        %v731 = vadd.f32 %v426, %v697
        %v732 = vadd.f32 %v427, %v699
        %733 = vst [vmem:[#allocation2] sm:$0xff] %v701
        %734 = vst [vmem:[#allocation2 + $0x8] sm:$0xff] %v702
        %735 = vst [vmem:[#allocation2 + $0x10] sm:$0xff] %v703
        %736 = vst [vmem:[#allocation2 + $0x18] sm:$0xff] %v704
        %737 = vst [vmem:[#allocation2 + $0x20] sm:$0xff] %v705
        %738 = vst [vmem:[#allocation2 + $0x28] sm:$0xff] %v706
        %739 = vst [vmem:[#allocation2 + $0x30] sm:$0xff] %v707
        %740 = vst [vmem:[#allocation2 + $0x38] sm:$0xff] %v708
        %741 = vst [vmem:[#allocation2 + $0x40] sm:$0xff] %v709
        %742 = vst [vmem:[#allocation2 + $0x48] sm:$0xff] %v710
        %743 = vst [vmem:[#allocation2 + $0x50] sm:$0xff] %v711
        %744 = vst [vmem:[#allocation2 + $0x58] sm:$0xff] %v712
        %745 = vst [vmem:[#allocation2 + $0x60] sm:$0xff] %v713
        %746 = vst [vmem:[#allocation2 + $0x68] sm:$0xff] %v714
        %747 = vst [vmem:[#allocation2 + $0x70] sm:$0xff] %v715
        %748 = vst [vmem:[#allocation2 + $0x78] sm:$0xff] %v716
        %749 = vst [vmem:[#allocation2 + $0x80] sm:$0xff] %v717
        %750 = vst [vmem:[#allocation2 + $0x88] sm:$0xff] %v718
        %751 = vst [vmem:[#allocation2 + $0x90] sm:$0xff] %v719
        %752 = vst [vmem:[#allocation2 + $0x98] sm:$0xff] %v720
        %753 = vst [vmem:[#allocation2 + $0xa0] sm:$0xff] %v721
        %754 = vst [vmem:[#allocation2 + $0xa8] sm:$0xff] %v722
        %755 = vst [vmem:[#allocation2 + $0xb0] sm:$0xff] %v723
        %756 = vst [vmem:[#allocation2 + $0xb8] sm:$0xff] %v724
        %757 = vst [vmem:[#allocation2 + $0xc0] sm:$0xff] %v725
        %758 = vst [vmem:[#allocation2 + $0xc8] sm:$0xff] %v726
        %759 = vst [vmem:[#allocation2 + $0xd0] sm:$0xff] %v727
        %760 = vst [vmem:[#allocation2 + $0xd8] sm:$0xff] %v728
        %761 = vst [vmem:[#allocation2 + $0xe0] sm:$0xff] %v729
        %762 = vst [vmem:[#allocation2 + $0xe8] sm:$0xff] %v730
        %763 = vst [vmem:[#allocation2 + $0xf0] sm:$0xff] %v731
        %764 = vst [vmem:[#allocation2 + $0xf8] sm:$0xff] %v732
        %p765 = scmp.eq.s32.totalorder %s21, 1
        // Predicated region
        $region78: #{dgi_forward.6} parent=68 // pred_check
          %p766 = pneg %p765
        $region79: #{dgi_forward.6} parent=68 // pred_check_branch
          %768 = sbr.rel (%p766) target = $region81
        $region80: #{dgi_forward.6} parent=68 // pred_region
          %v769 = vld [vmem:[#allocation2] sm:$0xff]
          %v770 = vld [vmem:[#allocation2 + $0x8] sm:$0xff]
          %v771 = vld [vmem:[#allocation2 + $0x10] sm:$0xff]
          %v772 = vld [vmem:[#allocation2 + $0x18] sm:$0xff]
          %v773 = vld [vmem:[#allocation2 + $0x20] sm:$0xff]
          %v774 = vld [vmem:[#allocation2 + $0x28] sm:$0xff]
          %v775 = vld [vmem:[#allocation2 + $0x30] sm:$0xff]
          %v776 = vld [vmem:[#allocation2 + $0x38] sm:$0xff]
          %v777 = vld [vmem:[#allocation2 + $0x40] sm:$0xff]
          %v778 = vld [vmem:[#allocation2 + $0x48] sm:$0xff]
          %v779 = vld [vmem:[#allocation2 + $0x50] sm:$0xff]
          %v780 = vld [vmem:[#allocation2 + $0x58] sm:$0xff]
          %v781 = vld [vmem:[#allocation2 + $0x60] sm:$0xff]
          %v782 = vld [vmem:[#allocation2 + $0x68] sm:$0xff]
          %v783 = vld [vmem:[#allocation2 + $0x70] sm:$0xff]
          %v784 = vld [vmem:[#allocation2 + $0x78] sm:$0xff]
          %v785 = vld [vmem:[#allocation2 + $0x80] sm:$0xff]
          %v786 = vld [vmem:[#allocation2 + $0x88] sm:$0xff]
          %v787 = vld [vmem:[#allocation2 + $0x90] sm:$0xff]
          %v788 = vld [vmem:[#allocation2 + $0x98] sm:$0xff]
          %v789 = vld [vmem:[#allocation2 + $0xa0] sm:$0xff]
          %v790 = vld [vmem:[#allocation2 + $0xa8] sm:$0xff]
          %v791 = vld [vmem:[#allocation2 + $0xb0] sm:$0xff]
          %v792 = vld [vmem:[#allocation2 + $0xb8] sm:$0xff]
          %v793 = vld [vmem:[#allocation2 + $0xc0] sm:$0xff]
          %v794 = vld [vmem:[#allocation2 + $0xc8] sm:$0xff]
          %v795 = vld [vmem:[#allocation2 + $0xd0] sm:$0xff]
          %v796 = vld [vmem:[#allocation2 + $0xd8] sm:$0xff]
          %v797 = vld [vmem:[#allocation2 + $0xe0] sm:$0xff]
          %v798 = vld [vmem:[#allocation2 + $0xe8] sm:$0xff]
          %v799 = vld [vmem:[#allocation2 + $0xf0] sm:$0xff]
          %v800 = vld [vmem:[#allocation2 + $0xf8] sm:$0xff]
          %v801 = vld [vmem:[%s2] sm:$0x1]
          %v803 = vlaneseq
          %v804 = vshrl.u32 %v803, 7
          %v805 = vsub.s32 0, %v804
          %v806 = vrot.slane %v801, %v805
          %v808 = vadd.f32 %v769, %v806
          %v809 = vadd.f32 %v771, %v806
          %v810 = vadd.f32 %v773, %v806
          %v811 = vadd.f32 %v775, %v806
          %v812 = vadd.f32 %v777, %v806
          %v813 = vadd.f32 %v779, %v806
          %v814 = vadd.f32 %v781, %v806
          %v815 = vadd.f32 %v783, %v806
          %v816 = vadd.f32 %v785, %v806
          %v817 = vadd.f32 %v787, %v806
          %v818 = vadd.f32 %v789, %v806
          %v819 = vadd.f32 %v791, %v806
          %v820 = vadd.f32 %v793, %v806
          %v821 = vadd.f32 %v795, %v806
          %v822 = vadd.f32 %v797, %v806
          %v823 = vadd.f32 %v799, %v806
          %v824 = vmax.f32 %v808, 0.0
          %v825 = vmax.f32 %v809, 0.0
          %v826 = vmax.f32 %v810, 0.0
          %v827 = vmax.f32 %v811, 0.0
          %v828 = vmax.f32 %v812, 0.0
          %v829 = vmax.f32 %v813, 0.0
          %v830 = vmax.f32 %v814, 0.0
          %v831 = vmax.f32 %v815, 0.0
          %v832 = vmax.f32 %v816, 0.0
          %v833 = vmax.f32 %v817, 0.0
          %v834 = vmax.f32 %v818, 0.0
          %v835 = vmax.f32 %v819, 0.0
          %v836 = vmax.f32 %v820, 0.0
          %v837 = vmax.f32 %v821, 0.0
          %v838 = vmax.f32 %v822, 0.0
          %v839 = vmax.f32 %v823, 0.0
          %840 = vst [vmem:[%s351] sm:$0xff] %v824
          %841 = vst [vmem:[%s351 + $0x8] sm:$0xff] %v825
          %842 = vst [vmem:[%s351 + $0x10] sm:$0xff] %v826
          %843 = vst [vmem:[%s351 + $0x18] sm:$0xff] %v827
          %844 = vst [vmem:[%s351 + $0x20] sm:$0xff] %v828
          %845 = vst [vmem:[%s351 + $0x28] sm:$0xff] %v829
          %846 = vst [vmem:[%s351 + $0x30] sm:$0xff] %v830
          %847 = vst [vmem:[%s351 + $0x38] sm:$0xff] %v831
          %848 = vst [vmem:[%s351 + $0x40] sm:$0xff] %v832
          %849 = vst [vmem:[%s351 + $0x48] sm:$0xff] %v833
          %850 = vst [vmem:[%s351 + $0x50] sm:$0xff] %v834
          %851 = vst [vmem:[%s351 + $0x58] sm:$0xff] %v835
          %852 = vst [vmem:[%s351 + $0x60] sm:$0xff] %v836
          %853 = vst [vmem:[%s351 + $0x68] sm:$0xff] %v837
          %854 = vst [vmem:[%s351 + $0x70] sm:$0xff] %v838
          %855 = vst [vmem:[%s351 + $0x78] sm:$0xff] %v839
          %v856 = vadd.f32 %v770, %v806
          %v857 = vadd.f32 %v772, %v806
          %v858 = vadd.f32 %v774, %v806
          %v859 = vadd.f32 %v776, %v806
          %v860 = vadd.f32 %v778, %v806
          %v861 = vadd.f32 %v780, %v806
          %v862 = vadd.f32 %v782, %v806
          %v863 = vadd.f32 %v784, %v806
          %v864 = vadd.f32 %v786, %v806
          %v865 = vadd.f32 %v788, %v806
          %v866 = vadd.f32 %v790, %v806
          %v867 = vadd.f32 %v792, %v806
          %v868 = vadd.f32 %v794, %v806
          %v869 = vadd.f32 %v796, %v806
          %v870 = vadd.f32 %v798, %v806
          %v871 = vadd.f32 %v800, %v806
          %v872 = vmax.f32 %v856, 0.0
          %v873 = vmax.f32 %v857, 0.0
          %v874 = vmax.f32 %v858, 0.0
          %v875 = vmax.f32 %v859, 0.0
          %v876 = vmax.f32 %v860, 0.0
          %v877 = vmax.f32 %v861, 0.0
          %v878 = vmax.f32 %v862, 0.0
          %v879 = vmax.f32 %v863, 0.0
          %v880 = vmax.f32 %v864, 0.0
          %v881 = vmax.f32 %v865, 0.0
          %v882 = vmax.f32 %v866, 0.0
          %v883 = vmax.f32 %v867, 0.0
          %v884 = vmax.f32 %v868, 0.0
          %v885 = vmax.f32 %v869, 0.0
          %v886 = vmax.f32 %v870, 0.0
          %v887 = vmax.f32 %v871, 0.0
          %888 = vst [vmem:[%s357] sm:$0xff] %v872
          %889 = vst [vmem:[%s357 + $0x8] sm:$0xff] %v873
          %890 = vst [vmem:[%s357 + $0x10] sm:$0xff] %v874
          %891 = vst [vmem:[%s357 + $0x18] sm:$0xff] %v875
          %892 = vst [vmem:[%s357 + $0x20] sm:$0xff] %v876
          %893 = vst [vmem:[%s357 + $0x28] sm:$0xff] %v877
          %894 = vst [vmem:[%s357 + $0x30] sm:$0xff] %v878
          %895 = vst [vmem:[%s357 + $0x38] sm:$0xff] %v879
          %896 = vst [vmem:[%s357 + $0x40] sm:$0xff] %v880
          %897 = vst [vmem:[%s357 + $0x48] sm:$0xff] %v881
          %898 = vst [vmem:[%s357 + $0x50] sm:$0xff] %v882
          %899 = vst [vmem:[%s357 + $0x58] sm:$0xff] %v883
          %900 = vst [vmem:[%s357 + $0x60] sm:$0xff] %v884
          %901 = vst [vmem:[%s357 + $0x68] sm:$0xff] %v885
          %902 = vst [vmem:[%s357 + $0x70] sm:$0xff] %v886
          %903 = vst [vmem:[%s357 + $0x78] sm:$0xff] %v887
        $region81: #{dgi_forward.6} parent=68 // pred_fallthru
          _
        %s904 = smul.u32 16, %s20
        %p905 = scmp.lt.s32.totalorder %s904, 31
        %s906 = scalar_select %p905, %s904, 31
        %s907 = smul.addr %s906, 8
        %s908 = scalar_lea.vmem %s3, %s907
        %s909 = smul.u32 16, %s20
        %p910 = scmp.lt.s32.totalorder %s909, 31
        %s911 = scalar_select %p910, %s909, 31
        %s912 = smul.addr %s911, 8
        %s913 = scalar_lea.vmem %s4, %s912
        // Predicated region
        $region82: #{dgi_forward.6} parent=68 // pred_check
          %p914 = pneg %p121
        $region83: #{dgi_forward.6} parent=68 // pred_check_branch
          %916 = sbr.rel (%p914) target = $region85
        $region84: #{dgi_forward.6} parent=68 // pred_region
          %s917 = smul.u32 16, %s20
        $region85: #{dgi_forward.6} parent=68 // pred_fallthru
          _
        // Predicated region
        $region86: #{dgi_forward.6} parent=68 // pred_check
          %p918 = pneg %p147
        $region87: #{dgi_forward.6} parent=68 // pred_check_branch
          %920 = sbr.rel (%p918) target = $region89
        $region88: #{dgi_forward.6} parent=68 // pred_region
          %s921 = smul.u32 16, %s20
        $region89: #{dgi_forward.6} parent=68 // pred_fallthru
          _
      $region69: #{dgi_forward.6} parent=5 // pred_fallthru
        _
      %p922 = scmp.le.s32.totalorder 2, %s11
      // Predicated region
      $region90: #{dgi_forward.6} parent=5 // pred_check
        %p923 = pneg %p922
      $region91: #{dgi_forward.6} parent=5 // pred_check_branch
        %925 = sbr.rel (%p923) target = $region93
      $region92: #{dgi_forward.6} parent=5 // pred_region
        %s926 = ssub.s32 %s11, 2
        // Predicated region
        $region94: #{dgi_forward.6} parent=92 // pred_check
          %p927 = pneg %p127
        $region95: #{dgi_forward.6} parent=92 // pred_check_branch
          %929 = sbr.rel (%p927) target = $region97
        $region96: #{dgi_forward.6} parent=92 // pred_region
          %s930 = smul.u32 16, %s22
          %p931 = scmp.lt.s32.totalorder %s930, 31
          %s932 = scalar_select %p931, %s930, 31
          %s933 = smul.addr %s932, 8
          %s934 = scalar_lea.vmem %s3, %s933
        $region97: #{dgi_forward.6} parent=92 // pred_fallthru
          _
        // Predicated region
        $region98: #{dgi_forward.6} parent=92 // pred_check
          %p935 = pneg %p153
        $region99: #{dgi_forward.6} parent=92 // pred_check_branch
          %937 = sbr.rel (%p935) target = $region101
        $region100: #{dgi_forward.6} parent=92 // pred_region
          %s938 = smul.u32 16, %s22
          %p939 = scmp.lt.s32.totalorder %s938, 31
          %s940 = scalar_select %p939, %s938, 31
          %s941 = smul.addr %s940, 8
          %s942 = scalar_lea.vmem %s4, %s941
        $region101: #{dgi_forward.6} parent=92 // pred_fallthru
          _
      $region93: #{dgi_forward.6} parent=5 // pred_fallthru
        _
    $region6: #{dgi_forward.6} parent=1 // loop_footer
      %s15 = sadd.s32 1, %s11
    $region7: #{dgi_forward.6} parent=1 // loop_footer_branch
      %10 = sbr.rel target = $region3
    $region8: #{dgi_forward.6} parent=1 // loop_exit
      _

// kernel: dgi_forward.9
$region0: #{dgi_forward.9}
  #allocation0 [shape = 'u32[]', space=smem, size = 0x4, offset = 0x4, fixed_abs, tag = 'smem constant byte address 0x4 - core index']
  #allocation1 [shape = 'u32[144,128]{1,0:T(1,128)}', space=vmem, size = 0x12000, scoped, tag = 'internal scratch']
  #allocation2 [shape = 'f32[1,128]{1,0:T(1,128)}', space=vmem, size = 0x200, scoped, tag = 'scratch operand']
  #allocation3 [shape = 'f32[1,128]{1,0:T(1,128)}', space=vmem, size = 0x200, scoped, tag = 'scratch operand']
  #allocation4 [shape = 'f32[1,1]{1,0:T(1,128)}', space=vmem, size = 0x200, scoped, tag = 'scratch operand']
  #allocation5 [shape = 'f32[1,1]{1,0:T(1,128)}', space=vmem, size = 0x200, scoped, tag = 'scratch operand']
  %s0 = inlined_call_operand.vmem [shape: f32[256,128], index: 0, kind: input, shape index: {}]
  %s1 = inlined_call_operand.vmem [shape: f32[256,128], index: 1, kind: input, shape index: {}]
  %s2 = inlined_call_operand.vmem [shape: f32[128,128], index: 2, kind: input, shape index: {}]
  %s3 = inlined_call_operand.hbm [shape: f32[1,1], index: 3, kind: output, shape index: {}]
  %s4 = sld [smem:[#allocation0]]
  $region65: #{dgi_forward.9} parent=0
    _
  %s6 = ssub.s32 1, %s4
  %s7 = scalar_select 0, %s6, %s4
  $region1: #{dgi_forward.9} parent=0
    #allocation6 [shape = 'u8[512]{0}', space=vmem, size = 0x400, scoped, tag = 'output window, operand 0, single buffered']
    #allocation7 [shape = 's32[2]{0}', space=sflag, size = 0x8, scoped, tag = 'scoped memory for dgi_forward.9']
    %8 = vsyncpa [#allocation7], 0
    loop: start=0, step=1, limit=6
    $region2: #{dgi_forward.9} parent=1 // loop_pre_header
      _
    $region3: #{dgi_forward.9} parent=1 // loop_header
      %s10 = sphi 0, %s14
      %p11 = scmp.ge.s32.totalorder %s10, 6
      %s17 = sphi 0, %s29
      %s18 = sphi 0, %s25
      %s19 = sphi 0, %s17
      %s20 = sphi 0, %s18
      %s21 = sphi 0, %s19
      %s22 = sphi 0, %s20
      %s32 = sphi 0, %s34
      %s35 = sphi 0, %s32
      %s36 = sphi 0, %s35
      %s52 = sphi 0, %s36
      %s58 = sphi 0, %s60
      %s61 = sphi 0, %s58
      %s62 = sphi 0, %s61
      %s78 = sphi 0, %s62
      %s82 = sphi 0, %s82
      %s84 = sphi 0, %s82
      %s85 = sphi 0, %s84
      %s99 = sphi 0, %s85
      %s103 = sphi 0, %s103
      %s105 = sphi 0, %s103
      %s106 = sphi 0, %s105
      %s120 = sphi 0, %s106
    $region4: #{dgi_forward.9} parent=1 // loop_header_branch
      %13 = sbr.rel (%p11) target = $region8
    $region5: #{dgi_forward.9} parent=1 // loop_body
      %s15 = ssub.s32 %s10, 1
      %s16 = ssub.s32 %s10, 2
      %s23 = sadd.s32 1, %s18
      %p24 = scmp.ge.s32.totalorder %s23, 2
      %s25 = scalar_select %p24, 0, %s23
      %s26 = sadd.s32 1, %s17
      %s27 = scalar_select %p24, %s26, %s17
      %p28 = scmp.ge.s32.totalorder %s27, 2
      %s29 = scalar_select %p28, 0, %s27
      %s30 = ssub.s32 %s18, %s25
      %p31 = scmp.eq.s32.totalorder %s30, 0
      %s33 = sadd.s32 %s32, 1
      %s34 = scalar_select %p31, %s32, %s33
      %p37 = pneg %p31
      %p38 = scmp.eq.s32.totalorder %s10, 3
      %p39 = por %p37, %p38
      %p40 = scmp.ne.s32.totalorder %s32, %s35
      %p41 = scmp.eq.s32.totalorder %s10, 0
      %p42 = por %p40, %p41
      %p43 = scmp.ne.s32.totalorder %s32, %s35
      %p44 = scmp.eq.s32.totalorder %s15, 3
      %p45 = por %p43, %p44
      %p46 = scmp.ne.s32.totalorder %s35, %s36
      %p47 = scmp.eq.s32.totalorder %s15, 0
      %p48 = por %p46, %p47
      %p49 = scmp.ne.s32.totalorder %s35, %s36
      %p50 = scmp.eq.s32.totalorder %s16, 3
      %p51 = por %p49, %p50
      %p53 = scmp.ne.s32.totalorder %s36, %s52
      %p54 = scmp.eq.s32.totalorder %s16, 0
      %p55 = por %p53, %p54
      %s56 = ssub.s32 %s18, %s25
      %p57 = scmp.eq.s32.totalorder %s56, 0
      %s59 = sadd.s32 %s58, 1
      %s60 = scalar_select %p57, %s58, %s59
      %p63 = pneg %p57
      %p64 = scmp.eq.s32.totalorder %s10, 3
      %p65 = por %p63, %p64
      %p66 = scmp.ne.s32.totalorder %s58, %s61
      %p67 = scmp.eq.s32.totalorder %s10, 0
      %p68 = por %p66, %p67
      %p69 = scmp.ne.s32.totalorder %s58, %s61
      %p70 = scmp.eq.s32.totalorder %s15, 3
      %p71 = por %p69, %p70
      %p72 = scmp.ne.s32.totalorder %s61, %s62
      %p73 = scmp.eq.s32.totalorder %s15, 0
      %p74 = por %p72, %p73
      %p75 = scmp.ne.s32.totalorder %s61, %s62
      %p76 = scmp.eq.s32.totalorder %s16, 3
      %p77 = por %p75, %p76
      %p79 = scmp.ne.s32.totalorder %s62, %s78
      %p80 = scmp.eq.s32.totalorder %s16, 0
      %p81 = por %p79, %p80
      %s83 = sadd.s32 %s82, 1
      %p86 = scmp.eq.s32.totalorder %s10, 3
      %p87 = scmp.ne.s32.totalorder %s82, %s84
      %p88 = scmp.eq.s32.totalorder %s10, 0
      %p89 = por %p87, %p88
      %p90 = scmp.ne.s32.totalorder %s82, %s84
      %p91 = scmp.eq.s32.totalorder %s15, 3
      %p92 = por %p90, %p91
      %p93 = scmp.ne.s32.totalorder %s84, %s85
      %p94 = scmp.eq.s32.totalorder %s15, 0
      %p95 = por %p93, %p94
      %p96 = scmp.ne.s32.totalorder %s84, %s85
      %p97 = scmp.eq.s32.totalorder %s16, 3
      %p98 = por %p96, %p97
      %p100 = scmp.ne.s32.totalorder %s85, %s99
      %p101 = scmp.eq.s32.totalorder %s16, 0
      %p102 = por %p100, %p101
      %s104 = sadd.s32 %s103, 1
      %p107 = scmp.eq.s32.totalorder %s10, 3
      %p108 = scmp.ne.s32.totalorder %s103, %s105
      %p109 = scmp.eq.s32.totalorder %s10, 0
      %p110 = por %p108, %p109
      %p111 = scmp.ne.s32.totalorder %s103, %s105
      %p112 = scmp.eq.s32.totalorder %s15, 3
      %p113 = por %p111, %p112
      %p114 = scmp.ne.s32.totalorder %s105, %s106
      %p115 = scmp.eq.s32.totalorder %s15, 0
      %p116 = por %p114, %p115
      %p117 = scmp.ne.s32.totalorder %s105, %s106
      %p118 = scmp.eq.s32.totalorder %s16, 3
      %p119 = por %p117, %p118
      %p121 = scmp.ne.s32.totalorder %s106, %s120
      %p122 = scmp.eq.s32.totalorder %s16, 0
      %p123 = por %p121, %p122
      %p124 = scmp.le.s32.totalorder 1, %s10
      %p125 = scmp.lt.s32.totalorder %s10, 5
      %p126 = pnand %p124, %p125
      %p127 = pneg %p126
      // Predicated region
      $region9: #{dgi_forward.9} parent=5 // pred_check
        _
      $region10: #{dgi_forward.9} parent=5 // pred_check_branch
        %129 = sbr.rel (%p126) target = $region12
      $region11: #{dgi_forward.9} parent=5 // pred_region
        %s130 = ssub.s32 %s10, 1
        // Predicated region
        $region13: #{dgi_forward.9} parent=11 // pred_check
          %p131 = pneg %p95
        $region14: #{dgi_forward.9} parent=11 // pred_check_branch
          %133 = sbr.rel (%p131) target = $region16
        $region15: #{dgi_forward.9} parent=11 // pred_region
          _
        $region16: #{dgi_forward.9} parent=11 // pred_fallthru
          _
      $region12: #{dgi_forward.9} parent=5 // pred_fallthru
        _
      %p134 = scmp.lt.s32.totalorder %s10, 4
      // Predicated region
      $region17: #{dgi_forward.9} parent=5 // pred_check
        %p135 = pneg %p134
      $region18: #{dgi_forward.9} parent=5 // pred_check_branch
        %137 = sbr.rel (%p135) target = $region20
      $region19: #{dgi_forward.9} parent=5 // pred_region
        // Predicated region
        $region21: #{dgi_forward.9} parent=19 // pred_check
          %p138 = pneg %p42
        $region22: #{dgi_forward.9} parent=19 // pred_check_branch
          %140 = sbr.rel (%p138) target = $region24
        $region23: #{dgi_forward.9} parent=19 // pred_region
          %s141 = smul.u32 16, %s18
          %p142 = scmp.lt.s32.totalorder %s141, 31
          %s143 = scalar_select %p142, %s141, 31
          %s144 = smul.addr %s143, 8
          %s145 = scalar_lea.vmem %s0, %s144
          %s146 = smul.u32 16, %s18
        $region24: #{dgi_forward.9} parent=19 // pred_fallthru
          _
        // Predicated region
        $region25: #{dgi_forward.9} parent=19 // pred_check
          %p147 = pneg %p68
        $region26: #{dgi_forward.9} parent=19 // pred_check_branch
          %149 = sbr.rel (%p147) target = $region28
        $region27: #{dgi_forward.9} parent=19 // pred_region
          %s150 = smul.u32 16, %s18
          %p151 = scmp.lt.s32.totalorder %s150, 31
          %s152 = scalar_select %p151, %s150, 31
          %s153 = smul.addr %s152, 8
          %s154 = scalar_lea.vmem %s1, %s153
          %s155 = smul.u32 16, %s18
        $region28: #{dgi_forward.9} parent=19 // pred_fallthru
          _
      $region20: #{dgi_forward.9} parent=5 // pred_fallthru
        _
      %p156 = scmp.le.s32.totalorder 1, %s10
      %p157 = scmp.lt.s32.totalorder %s10, 5
      %p158 = pnand %p156, %p157
      %p159 = pneg %p158
      // Predicated region
      $region29: #{dgi_forward.9} parent=5 // pred_check
        _
      $region30: #{dgi_forward.9} parent=5 // pred_check_branch
        %161 = sbr.rel (%p158) target = $region32
      $region31: #{dgi_forward.9} parent=5 // pred_region
        %s162 = ssub.s32 %s10, 1
        %s163 = smul.u32 16, %s20
        %p164 = scmp.lt.s32.totalorder %s163, 31
        %s165 = scalar_select %p164, %s163, 31
        %s166 = smul.addr %s165, 8
        %s167 = scalar_lea.vmem %s0, %s166
        %p168 = pneg %p48
        %p169 = pneg %p45
        %s170 = smul.u32 16, %s20
        %p171 = scmp.lt.s32.totalorder %s170, 31
        %s172 = scalar_select %p171, %s170, 31
        %s173 = smul.addr %s172, 8
        %s174 = scalar_lea.vmem %s1, %s173
        %p175 = pneg %p74
        %p176 = pneg %p71
        %p177 = pneg %p95
        %p178 = pneg %p92
        %p179 = pneg %p116
        %p180 = pneg %p113
        %s181 = smul.u32 16, %s20
        %p182 = scmp.lt.s32.totalorder %s181, 31
        %s183 = scalar_select %p182, %s181, 31
        %s184 = smul.addr %s183, 8
        %s185 = scalar_lea.vmem %s0, %s184
        %s186 = smul.u32 16, %s20
        %s187 = smul.u32 16, %s20
        %p188 = scmp.lt.s32.totalorder %s187, 31
        %s189 = scalar_select %p188, %s187, 31
        %s190 = smul.addr %s189, 8
        %s191 = scalar_lea.vmem %s1, %s190
        %s192 = smul.u32 16, %s20
        %p193 = scmp.eq.s32.totalorder %s19, 0
        %p194 = scmp.eq.s32.totalorder %s20, 0
        %p195 = pnand %p193, %p194
        %p196 = pneg %p195
        // Predicated region
        $region33: #{dgi_forward.9} parent=31 // pred_check
          _
        $region34: #{dgi_forward.9} parent=31 // pred_check_branch
          %198 = sbr.rel (%p195) target = $region36
        $region35: #{dgi_forward.9} parent=31 // pred_region
          %199 = vst [vmem:[#allocation2] sm:$0x1] 0.0
        $region36: #{dgi_forward.9} parent=31 // pred_fallthru
          _
        // Predicated region
        $region37: #{dgi_forward.9} parent=31 // pred_check
          %p200 = pneg %p193
        $region38: #{dgi_forward.9} parent=31 // pred_check_branch
          %202 = sbr.rel (%p200) target = $region40
        $region39: #{dgi_forward.9} parent=31 // pred_region
          %s203 = smul.u32 %s20, 128
          %v204 = vlaneseq
          %v205 = vand.u32 %v204, 127
          %v206 = vstv %s203
          %v207 = vadd.s32 %v206, %v205
          %vm208 = vcmp.lt.s32.totalorder %v207, 200
          %v209 = vsel %vm208, 1, 0
          %v210 = vcvt.s32.f32 %v209
          %v211 = vld [vmem:[#allocation2] sm:$0x1]
          %v212 = vld [vmem:[%s185] sm:$0xff]
          %v213 = vld [vmem:[%s185 + $0x8] sm:$0xff]
          %v214 = vld [vmem:[%s185 + $0x10] sm:$0xff]
          %v215 = vld [vmem:[%s185 + $0x18] sm:$0xff]
          %v216 = vld [vmem:[%s185 + $0x20] sm:$0xff]
          %v217 = vld [vmem:[%s185 + $0x28] sm:$0xff]
          %v218 = vld [vmem:[%s185 + $0x30] sm:$0xff]
          %v219 = vld [vmem:[%s185 + $0x38] sm:$0xff]
          %v220 = vld [vmem:[%s185 + $0x40] sm:$0xff]
          %v221 = vld [vmem:[%s185 + $0x48] sm:$0xff]
          %v222 = vld [vmem:[%s185 + $0x50] sm:$0xff]
          %v223 = vld [vmem:[%s185 + $0x58] sm:$0xff]
          %v224 = vld [vmem:[%s185 + $0x60] sm:$0xff]
          %v225 = vld [vmem:[%s185 + $0x68] sm:$0xff]
          %v226 = vld [vmem:[%s185 + $0x70] sm:$0xff]
          %v227 = vld [vmem:[%s185 + $0x78] sm:$0xff]
          %228 = vmatprep.subr.mxu0 0.0
          %229 = vmatpush1.msra.mxu0 %v227
          %230 = vmatprep.subr.mxu0 0.0
          %231 = vmatpush1.msra.mxu0 %v226
          %232 = vmatprep.subr.mxu0 0.0
          %233 = vmatpush1.msra.mxu0 %v225
          %234 = vmatprep.subr.mxu0 0.0
          %235 = vmatpush1.msra.mxu0 %v224
          %236 = vmatprep.subr.mxu0 0.0
          %237 = vmatpush1.msra.mxu0 %v223
          %238 = vmatprep.subr.mxu0 0.0
          %239 = vmatpush1.msra.mxu0 %v222
          %240 = vmatprep.subr.mxu0 0.0
          %241 = vmatpush1.msra.mxu0 %v221
          %242 = vmatprep.subr.mxu0 0.0
          %243 = vmatpush1.msra.mxu0 %v220
          %244 = vmatprep.subr.mxu0 0.0
          %245 = vmatpush1.msra.mxu0 %v219
          %246 = vmatprep.subr.mxu0 0.0
          %247 = vmatpush1.msra.mxu0 %v218
          %248 = vmatprep.subr.mxu0 0.0
          %249 = vmatpush1.msra.mxu0 %v217
          %250 = vmatprep.subr.mxu0 0.0
          %251 = vmatpush1.msra.mxu0 %v216
          %252 = vmatprep.subr.mxu0 0.0
          %253 = vmatpush1.msra.mxu0 %v215
          %254 = vmatprep.subr.mxu0 0.0
          %255 = vmatpush1.msra.mxu0 %v214
          %256 = vmatprep.subr.mxu0 0.0
          %257 = vmatpush1.msra.mxu0 %v213
          %258 = vmatprep.subr.mxu0 0.0
          %259 = vmatpush1.msra.mxu0 %v212
          %260 = vmatprep.subr.mxu0 0.0
          %261 = vmatpush2.msra.mxu0 0.0
          %262 = vmatprep.subr.mxu0 0.0
          %263 = vmatpush2.msra.mxu0 0.0
          %264 = vmatprep.subr.mxu0 0.0
          %265 = vmatpush2.msra.mxu0 0.0
          %266 = vmatprep.subr.mxu0 0.0
          %267 = vmatpush2.msra.mxu0 0.0
          %268 = vmatprep.subr.mxu0 0.0
          %269 = vmatpush2.msra.mxu0 0.0
          %270 = vmatprep.subr.mxu0 0.0
          %271 = vmatpush2.msra.mxu0 0.0
          %272 = vmatprep.subr.mxu0 0.0
          %273 = vmatpush2.msra.mxu0 0.0
          %274 = vmatprep.subr.mxu0 0.0
          %275 = vmatpush2.msra.mxu0 0.0
          %276 = vmatprep.subr.mxu0 0.0
          %277 = vmatpush2.msra.mxu0 0.0
          %278 = vmatprep.subr.mxu0 0.0
          %279 = vmatpush2.msra.mxu0 0.0
          %280 = vmatprep.subr.mxu0 0.0
          %281 = vmatpush2.msra.mxu0 0.0
          %282 = vmatprep.subr.mxu0 0.0
          %283 = vmatpush2.msra.mxu0 0.0
          %284 = vmatprep.subr.mxu0 0.0
          %285 = vmatpush2.msra.mxu0 0.0
          %286 = vmatprep.subr.mxu0 0.0
          %287 = vmatpush2.msra.mxu0 0.0
          %288 = vmatprep.subr.mxu0 0.0
          %289 = vmatpush2.msra.mxu0 0.0
          %290 = vmatprep.subr.mxu0 0.0
          %291 = vmatpush2.msra.mxu0 0.0
          %292 = vmatprep.mubr.f32.mxu0 0.0
          %293 = vmatmul.mubr.f32.gmra.mxu0 %v210
          %v294 = vpop.f32.mrf.mxu0
          %v295 = vadd.f32 0.0, %v294
          %v296 = vpop.f32.mrf.mxu0
          %297 = vdwg.mxu0
          %v298 = vadd.f32 %v211, %v295
          %299 = vst [vmem:[#allocation2] sm:$0x1] %v298
        $region40: #{dgi_forward.9} parent=31 // pred_fallthru
          _
        %p300 = scmp.eq.s32.totalorder %s19, 1
        %p301 = pnand %p300, %p194
        %p302 = pneg %p301
        // Predicated region
        $region41: #{dgi_forward.9} parent=31 // pred_check
          _
        $region42: #{dgi_forward.9} parent=31 // pred_check_branch
          %304 = sbr.rel (%p301) target = $region44
        $region43: #{dgi_forward.9} parent=31 // pred_region
          %v305 = vld [vmem:[#allocation2] sm:$0x1]
          %v306 = vmul.f32 %v305, 0.005
          %v307 = vxor.u32 %v306, 2147483648
          %v308 = vmul.f32 %v307, 1.442695
          %v309 = vpow.pop %v308
          %v310 = vadd.f32 %v309, 1.0
          %v311 = vrcp.pop %v310
          %v312 = vmul.f32 1.0, %v311
          %v313 = vld [vmem:[%s2] sm:$0xff]
          %v314 = vld [vmem:[%s2 + $0x8] sm:$0xff]
          %v315 = vld [vmem:[%s2 + $0x10] sm:$0xff]
          %v316 = vld [vmem:[%s2 + $0x18] sm:$0xff]
          %v317 = vld [vmem:[%s2 + $0x20] sm:$0xff]
          %v318 = vld [vmem:[%s2 + $0x28] sm:$0xff]
          %v319 = vld [vmem:[%s2 + $0x30] sm:$0xff]
          %v320 = vld [vmem:[%s2 + $0x38] sm:$0xff]
          %v321 = vld [vmem:[%s2 + $0x40] sm:$0xff]
          %v322 = vld [vmem:[%s2 + $0x48] sm:$0xff]
          %v323 = vld [vmem:[%s2 + $0x50] sm:$0xff]
          %v324 = vld [vmem:[%s2 + $0x58] sm:$0xff]
          %v325 = vld [vmem:[%s2 + $0x60] sm:$0xff]
          %v326 = vld [vmem:[%s2 + $0x68] sm:$0xff]
          %v327 = vld [vmem:[%s2 + $0x70] sm:$0xff]
          %v328 = vld [vmem:[%s2 + $0x78] sm:$0xff]
          %329 = vmatprep.subr.mxu0 0.0
          %330 = vmatpush1.xpose.msra.mxu0 %v328
          %331 = vmatprep.subr.mxu0 0.0
          %332 = vmatpush1.xpose.msra.mxu0 %v327
          %333 = vmatprep.subr.mxu0 0.0
          %334 = vmatpush1.xpose.msra.mxu0 %v326
          %335 = vmatprep.subr.mxu0 0.0
          %336 = vmatpush1.xpose.msra.mxu0 %v325
          %337 = vmatprep.subr.mxu0 0.0
          %338 = vmatpush1.xpose.msra.mxu0 %v324
          %339 = vmatprep.subr.mxu0 0.0
          %340 = vmatpush1.xpose.msra.mxu0 %v323
          %341 = vmatprep.subr.mxu0 0.0
          %342 = vmatpush1.xpose.msra.mxu0 %v322
          %343 = vmatprep.subr.mxu0 0.0
          %344 = vmatpush1.xpose.msra.mxu0 %v321
          %345 = vmatprep.subr.mxu0 0.0
          %346 = vmatpush1.xpose.msra.mxu0 %v320
          %347 = vmatprep.subr.mxu0 0.0
          %348 = vmatpush1.xpose.msra.mxu0 %v319
          %349 = vmatprep.subr.mxu0 0.0
          %350 = vmatpush1.xpose.msra.mxu0 %v318
          %351 = vmatprep.subr.mxu0 0.0
          %352 = vmatpush1.xpose.msra.mxu0 %v317
          %353 = vmatprep.subr.mxu0 0.0
          %354 = vmatpush1.xpose.msra.mxu0 %v316
          %355 = vmatprep.subr.mxu0 0.0
          %356 = vmatpush1.xpose.msra.mxu0 %v315
          %357 = vmatprep.subr.mxu0 0.0
          %358 = vmatpush1.xpose.msra.mxu0 %v314
          %359 = vmatprep.subr.mxu0 0.0
          %360 = vmatpush1.xpose.msra.mxu0 %v313
          %361 = vmatprep.subr.mxu0 0.0
          %362 = vmatpush2.xpose.msra.mxu0 0.0
          %363 = vmatprep.subr.mxu0 0.0
          %364 = vmatpush2.xpose.msra.mxu0 0.0
          %365 = vmatprep.subr.mxu0 0.0
          %366 = vmatpush2.xpose.msra.mxu0 0.0
          %367 = vmatprep.subr.mxu0 0.0
          %368 = vmatpush2.xpose.msra.mxu0 0.0
          %369 = vmatprep.subr.mxu0 0.0
          %370 = vmatpush2.xpose.msra.mxu0 0.0
          %371 = vmatprep.subr.mxu0 0.0
          %372 = vmatpush2.xpose.msra.mxu0 0.0
          %373 = vmatprep.subr.mxu0 0.0
          %374 = vmatpush2.xpose.msra.mxu0 0.0
          %375 = vmatprep.subr.mxu0 0.0
          %376 = vmatpush2.xpose.msra.mxu0 0.0
          %377 = vmatprep.subr.mxu0 0.0
          %378 = vmatpush2.xpose.msra.mxu0 0.0
          %379 = vmatprep.subr.mxu0 0.0
          %380 = vmatpush2.xpose.msra.mxu0 0.0
          %381 = vmatprep.subr.mxu0 0.0
          %382 = vmatpush2.xpose.msra.mxu0 0.0
          %383 = vmatprep.subr.mxu0 0.0
          %384 = vmatpush2.xpose.msra.mxu0 0.0
          %385 = vmatprep.subr.mxu0 0.0
          %386 = vmatpush2.xpose.msra.mxu0 0.0
          %387 = vmatprep.subr.mxu0 0.0
          %388 = vmatpush2.xpose.msra.mxu0 0.0
          %389 = vmatprep.subr.mxu0 0.0
          %390 = vmatpush2.xpose.msra.mxu0 0.0
          %391 = vmatprep.subr.mxu0 0.0
          %392 = vmatpush2.xpose.msra.mxu0 0.0
          %393 = vmatprep.mubr.f32.mxu0 0.0
          %394 = vmatmul.mubr.f32.gmra.mxu0 %v312
          %v395 = vpop.f32.mrf.mxu0
          %v396 = vadd.f32 0.0, %v395
          %v397 = vpop.f32.mrf.mxu0
          %398 = vdwg.mxu0
          %399 = vst [vmem:[#allocation3] sm:$0x1] %v396
          %vm400 = vcmask 0
          %401 = vst.msk [vmem:[#allocation4] sm:$0x1] %vm400, 0.0
          %402 = vst.msk [vmem:[#allocation5] sm:$0x1] %vm400, 0.0
        $region44: #{dgi_forward.9} parent=31 // pred_fallthru
          _
        // Predicated region
        $region45: #{dgi_forward.9} parent=31 // pred_check
          %p403 = pneg %p300
        $region46: #{dgi_forward.9} parent=31 // pred_check_branch
          %405 = sbr.rel (%p403) target = $region48
        $region47: #{dgi_forward.9} parent=31 // pred_region
          %v406 = vld [vmem:[#allocation3] sm:$0x1]
          %s407 = smul.u32 %s20, 128
          %v408 = vlaneseq
          %v409 = vshrl.u32 %v408, 7
          %v410 = vadd.s32 %v409, 8
          %v411 = vadd.s32 %v409, 16
          %v412 = vadd.s32 %v409, 24
          %v413 = vadd.s32 %v409, 32
          %v414 = vadd.s32 %v409, 40
          %v415 = vadd.s32 %v409, 48
          %v416 = vadd.s32 %v409, 56
          %v417 = vadd.s32 %v409, 64
          %v418 = vadd.s32 %v409, 72
          %v419 = vadd.s32 %v409, 80
          %v420 = vadd.s32 %v409, 88
          %v421 = vadd.s32 %v409, 96
          %v422 = vadd.s32 %v409, 104
          %v423 = vadd.s32 %v409, 112
          %v424 = vadd.s32 %v409, 120
          %v425 = vstv %s407
          %v426 = vadd.s32 %v425, %v409
          %v427 = vadd.s32 %v425, %v410
          %v428 = vadd.s32 %v425, %v411
          %v429 = vadd.s32 %v425, %v412
          %v430 = vadd.s32 %v425, %v413
          %v431 = vadd.s32 %v425, %v414
          %v432 = vadd.s32 %v425, %v415
          %v433 = vadd.s32 %v425, %v416
          %v434 = vadd.s32 %v425, %v417
          %v435 = vadd.s32 %v425, %v418
          %v436 = vadd.s32 %v425, %v419
          %v437 = vadd.s32 %v425, %v420
          %v438 = vadd.s32 %v425, %v421
          %v439 = vadd.s32 %v425, %v422
          %v440 = vadd.s32 %v425, %v423
          %v441 = vadd.s32 %v425, %v424
          %vm442 = vcmp.lt.s32.totalorder %v426, 200
          %vm443 = vcmp.lt.s32.totalorder %v427, 200
          %vm444 = vcmp.lt.s32.totalorder %v428, 200
          %vm445 = vcmp.lt.s32.totalorder %v429, 200
          %vm446 = vcmp.lt.s32.totalorder %v430, 200
          %vm447 = vcmp.lt.s32.totalorder %v431, 200
          %vm448 = vcmp.lt.s32.totalorder %v432, 200
          %vm449 = vcmp.lt.s32.totalorder %v433, 200
          %vm450 = vcmp.lt.s32.totalorder %v434, 200
          %vm451 = vcmp.lt.s32.totalorder %v435, 200
          %vm452 = vcmp.lt.s32.totalorder %v436, 200
          %vm453 = vcmp.lt.s32.totalorder %v437, 200
          %vm454 = vcmp.lt.s32.totalorder %v438, 200
          %vm455 = vcmp.lt.s32.totalorder %v439, 200
          %vm456 = vcmp.lt.s32.totalorder %v440, 200
          %vm457 = vcmp.lt.s32.totalorder %v441, 200
          %v458 = vsel %vm442, 1, 0
          %v459 = vsel %vm443, 1, 0
          %v460 = vsel %vm444, 1, 0
          %v461 = vsel %vm445, 1, 0
          %v462 = vsel %vm446, 1, 0
          %v463 = vsel %vm447, 1, 0
          %v464 = vsel %vm448, 1, 0
          %v465 = vsel %vm449, 1, 0
          %v466 = vsel %vm450, 1, 0
          %v467 = vsel %vm451, 1, 0
          %v468 = vsel %vm452, 1, 0
          %v469 = vsel %vm453, 1, 0
          %v470 = vsel %vm454, 1, 0
          %v471 = vsel %vm455, 1, 0
          %v472 = vsel %vm456, 1, 0
          %v473 = vsel %vm457, 1, 0
          %v474 = vcvt.s32.f32 %v458
          %v475 = vcvt.s32.f32 %v459
          %v476 = vcvt.s32.f32 %v460
          %v477 = vcvt.s32.f32 %v461
          %v478 = vcvt.s32.f32 %v462
          %v479 = vcvt.s32.f32 %v463
          %v480 = vcvt.s32.f32 %v464
          %v481 = vcvt.s32.f32 %v465
          %v482 = vcvt.s32.f32 %v466
          %v483 = vcvt.s32.f32 %v467
          %v484 = vcvt.s32.f32 %v468
          %v485 = vcvt.s32.f32 %v469
          %v486 = vcvt.s32.f32 %v470
          %v487 = vcvt.s32.f32 %v471
          %v488 = vcvt.s32.f32 %v472
          %v489 = vcvt.s32.f32 %v473
          %v490 = vld [vmem:[%s185] sm:$0xff]
          %v491 = vld [vmem:[%s185 + $0x8] sm:$0xff]
          %v492 = vld [vmem:[%s185 + $0x10] sm:$0xff]
          %v493 = vld [vmem:[%s185 + $0x18] sm:$0xff]
          %v494 = vld [vmem:[%s185 + $0x20] sm:$0xff]
          %v495 = vld [vmem:[%s185 + $0x28] sm:$0xff]
          %v496 = vld [vmem:[%s185 + $0x30] sm:$0xff]
          %v497 = vld [vmem:[%s185 + $0x38] sm:$0xff]
          %v498 = vld [vmem:[%s185 + $0x40] sm:$0xff]
          %v499 = vld [vmem:[%s185 + $0x48] sm:$0xff]
          %v500 = vld [vmem:[%s185 + $0x50] sm:$0xff]
          %v501 = vld [vmem:[%s185 + $0x58] sm:$0xff]
          %v502 = vld [vmem:[%s185 + $0x60] sm:$0xff]
          %v503 = vld [vmem:[%s185 + $0x68] sm:$0xff]
          %v504 = vld [vmem:[%s185 + $0x70] sm:$0xff]
          %v505 = vld [vmem:[%s185 + $0x78] sm:$0xff]
          %v507 = vlaneseq
          %v508 = vshrl.u32 %v507, 7
          %v509 = vsub.s32 0, %v508
          %v510 = vrot.slane %v406, %v509
          %v512 = vmul.f32 %v490, %v510
          %v513 = vmul.f32 %v491, %v510
          %v514 = vmul.f32 %v492, %v510
          %v515 = vmul.f32 %v493, %v510
          %v516 = vmul.f32 %v494, %v510
          %v517 = vmul.f32 %v495, %v510
          %v518 = vmul.f32 %v496, %v510
          %v519 = vmul.f32 %v497, %v510
          %v520 = vmul.f32 %v498, %v510
          %v521 = vmul.f32 %v499, %v510
          %v522 = vmul.f32 %v500, %v510
          %v523 = vmul.f32 %v501, %v510
          %v524 = vmul.f32 %v502, %v510
          %v525 = vmul.f32 %v503, %v510
          %v526 = vmul.f32 %v504, %v510
          %v527 = vmul.f32 %v505, %v510
          %528 = vadd.xlane.f32.xlu0 %v512
          %v529 = vpop.xlane.xlu0 %528
          %530 = vadd.xlane.f32.xlu0 %v513
          %v531 = vpop.xlane.xlu0 %530
          %532 = vadd.xlane.f32.xlu0 %v514
          %v533 = vpop.xlane.xlu0 %532
          %534 = vadd.xlane.f32.xlu0 %v515
          %v535 = vpop.xlane.xlu0 %534
          %536 = vadd.xlane.f32.xlu0 %v516
          %v537 = vpop.xlane.xlu0 %536
          %538 = vadd.xlane.f32.xlu0 %v517
          %v539 = vpop.xlane.xlu0 %538
          %540 = vadd.xlane.f32.xlu0 %v518
          %v541 = vpop.xlane.xlu0 %540
          %542 = vadd.xlane.f32.xlu0 %v519
          %v543 = vpop.xlane.xlu0 %542
          %544 = vadd.xlane.f32.xlu0 %v520
          %v545 = vpop.xlane.xlu0 %544
          %546 = vadd.xlane.f32.xlu0 %v521
          %v547 = vpop.xlane.xlu0 %546
          %548 = vadd.xlane.f32.xlu0 %v522
          %v549 = vpop.xlane.xlu0 %548
          %550 = vadd.xlane.f32.xlu0 %v523
          %v551 = vpop.xlane.xlu0 %550
          %552 = vadd.xlane.f32.xlu0 %v524
          %v553 = vpop.xlane.xlu0 %552
          %554 = vadd.xlane.f32.xlu0 %v525
          %v555 = vpop.xlane.xlu0 %554
          %556 = vadd.xlane.f32.xlu0 %v526
          %v557 = vpop.xlane.xlu0 %556
          %558 = vadd.xlane.f32.xlu0 %v527
          %v559 = vpop.xlane.xlu0 %558
          %v560 = vld [vmem:[%s191] sm:$0xff]
          %v561 = vld [vmem:[%s191 + $0x8] sm:$0xff]
          %v562 = vld [vmem:[%s191 + $0x10] sm:$0xff]
          %v563 = vld [vmem:[%s191 + $0x18] sm:$0xff]
          %v564 = vld [vmem:[%s191 + $0x20] sm:$0xff]
          %v565 = vld [vmem:[%s191 + $0x28] sm:$0xff]
          %v566 = vld [vmem:[%s191 + $0x30] sm:$0xff]
          %v567 = vld [vmem:[%s191 + $0x38] sm:$0xff]
          %v568 = vld [vmem:[%s191 + $0x40] sm:$0xff]
          %v569 = vld [vmem:[%s191 + $0x48] sm:$0xff]
          %v570 = vld [vmem:[%s191 + $0x50] sm:$0xff]
          %v571 = vld [vmem:[%s191 + $0x58] sm:$0xff]
          %v572 = vld [vmem:[%s191 + $0x60] sm:$0xff]
          %v573 = vld [vmem:[%s191 + $0x68] sm:$0xff]
          %v574 = vld [vmem:[%s191 + $0x70] sm:$0xff]
          %v575 = vld [vmem:[%s191 + $0x78] sm:$0xff]
          %v576 = vmul.f32 %v560, %v510
          %v577 = vmul.f32 %v561, %v510
          %v578 = vmul.f32 %v562, %v510
          %v579 = vmul.f32 %v563, %v510
          %v580 = vmul.f32 %v564, %v510
          %v581 = vmul.f32 %v565, %v510
          %v582 = vmul.f32 %v566, %v510
          %v583 = vmul.f32 %v567, %v510
          %v584 = vmul.f32 %v568, %v510
          %v585 = vmul.f32 %v569, %v510
          %v586 = vmul.f32 %v570, %v510
          %v587 = vmul.f32 %v571, %v510
          %v588 = vmul.f32 %v572, %v510
          %v589 = vmul.f32 %v573, %v510
          %v590 = vmul.f32 %v574, %v510
          %v591 = vmul.f32 %v575, %v510
          %592 = vadd.xlane.f32.xlu0 %v576
          %v593 = vpop.xlane.xlu0 %592
          %594 = vadd.xlane.f32.xlu0 %v577
          %v595 = vpop.xlane.xlu0 %594
          %596 = vadd.xlane.f32.xlu0 %v578
          %v597 = vpop.xlane.xlu0 %596
          %598 = vadd.xlane.f32.xlu0 %v579
          %v599 = vpop.xlane.xlu0 %598
          %600 = vadd.xlane.f32.xlu0 %v580
          %v601 = vpop.xlane.xlu0 %600
          %602 = vadd.xlane.f32.xlu0 %v581
          %v603 = vpop.xlane.xlu0 %602
          %604 = vadd.xlane.f32.xlu0 %v582
          %v605 = vpop.xlane.xlu0 %604
          %606 = vadd.xlane.f32.xlu0 %v583
          %v607 = vpop.xlane.xlu0 %606
          %608 = vadd.xlane.f32.xlu0 %v584
          %v609 = vpop.xlane.xlu0 %608
          %610 = vadd.xlane.f32.xlu0 %v585
          %v611 = vpop.xlane.xlu0 %610
          %612 = vadd.xlane.f32.xlu0 %v586
          %v613 = vpop.xlane.xlu0 %612
          %614 = vadd.xlane.f32.xlu0 %v587
          %v615 = vpop.xlane.xlu0 %614
          %616 = vadd.xlane.f32.xlu0 %v588
          %v617 = vpop.xlane.xlu0 %616
          %618 = vadd.xlane.f32.xlu0 %v589
          %v619 = vpop.xlane.xlu0 %618
          %620 = vadd.xlane.f32.xlu0 %v590
          %v621 = vpop.xlane.xlu0 %620
          %622 = vadd.xlane.f32.xlu0 %v591
          %v623 = vpop.xlane.xlu0 %622
          %v624 = vld [vmem:[#allocation4] sm:$0x1]
          %v625 = vsub.f32 0.0, %v529
          %v626 = vsub.f32 0.0, %v531
          %v627 = vsub.f32 0.0, %v533
          %v628 = vsub.f32 0.0, %v535
          %v629 = vsub.f32 0.0, %v537
          %v630 = vsub.f32 0.0, %v539
          %v631 = vsub.f32 0.0, %v541
          %v632 = vsub.f32 0.0, %v543
          %v633 = vsub.f32 0.0, %v545
          %v634 = vsub.f32 0.0, %v547
          %v635 = vsub.f32 0.0, %v549
          %v636 = vsub.f32 0.0, %v551
          %v637 = vsub.f32 0.0, %v553
          %v638 = vsub.f32 0.0, %v555
          %v639 = vsub.f32 0.0, %v557
          %v640 = vsub.f32 0.0, %v559
          %v641 = vmax.f32 %v625, 0.0
          %v642 = vmax.f32 %v626, 0.0
          %v643 = vmax.f32 %v627, 0.0
          %v644 = vmax.f32 %v628, 0.0
          %v645 = vmax.f32 %v629, 0.0
          %v646 = vmax.f32 %v630, 0.0
          %v647 = vmax.f32 %v631, 0.0
          %v648 = vmax.f32 %v632, 0.0
          %v649 = vmax.f32 %v633, 0.0
          %v650 = vmax.f32 %v634, 0.0
          %v651 = vmax.f32 %v635, 0.0
          %v652 = vmax.f32 %v636, 0.0
          %v653 = vmax.f32 %v637, 0.0
          %v654 = vmax.f32 %v638, 0.0
          %v655 = vmax.f32 %v639, 0.0
          %v656 = vmax.f32 %v640, 0.0
          %v657 = vand.u32 2147483647, %v625
          %v658 = vand.u32 2147483647, %v626
          %v659 = vand.u32 2147483647, %v627
          %v660 = vand.u32 2147483647, %v628
          %v661 = vand.u32 2147483647, %v629
          %v662 = vand.u32 2147483647, %v630
          %v663 = vand.u32 2147483647, %v631
          %v664 = vand.u32 2147483647, %v632
          %v665 = vand.u32 2147483647, %v633
          %v666 = vand.u32 2147483647, %v634
          %v667 = vand.u32 2147483647, %v635
          %v668 = vand.u32 2147483647, %v636
          %v669 = vand.u32 2147483647, %v637
          %v670 = vand.u32 2147483647, %v638
          %v671 = vand.u32 2147483647, %v639
          %v672 = vand.u32 2147483647, %v640
          %v673 = vsub.f32 0.0, %v657
          %v674 = vsub.f32 0.0, %v658
          %v675 = vsub.f32 0.0, %v659
          %v676 = vsub.f32 0.0, %v660
          %v677 = vsub.f32 0.0, %v661
          %v678 = vsub.f32 0.0, %v662
          %v679 = vsub.f32 0.0, %v663
          %v680 = vsub.f32 0.0, %v664
          %v681 = vsub.f32 0.0, %v665
          %v682 = vsub.f32 0.0, %v666
          %v683 = vsub.f32 0.0, %v667
          %v684 = vsub.f32 0.0, %v668
          %v685 = vsub.f32 0.0, %v669
          %v686 = vsub.f32 0.0, %v670
          %v687 = vsub.f32 0.0, %v671
          %v688 = vsub.f32 0.0, %v672
          %v689 = vmul.f32 %v673, 1.442695
          %v690 = vpow.pop %v689
          %v691 = vmul.f32 %v674, 1.442695
          %v692 = vpow.pop %v691
          %v693 = vmul.f32 %v675, 1.442695
          %v694 = vpow.pop %v693
          %v695 = vmul.f32 %v676, 1.442695
          %v696 = vpow.pop %v695
          %v697 = vmul.f32 %v677, 1.442695
          %v698 = vpow.pop %v697
          %v699 = vmul.f32 %v678, 1.442695
          %v700 = vpow.pop %v699
          %v701 = vmul.f32 %v679, 1.442695
          %v702 = vpow.pop %v701
          %v703 = vmul.f32 %v680, 1.442695
          %v704 = vpow.pop %v703
          %v705 = vmul.f32 %v681, 1.442695
          %v706 = vpow.pop %v705
          %v707 = vmul.f32 %v682, 1.442695
          %v708 = vpow.pop %v707
          %v709 = vmul.f32 %v683, 1.442695
          %v710 = vpow.pop %v709
          %v711 = vmul.f32 %v684, 1.442695
          %v712 = vpow.pop %v711
          %v713 = vmul.f32 %v685, 1.442695
          %v714 = vpow.pop %v713
          %v715 = vmul.f32 %v686, 1.442695
          %v716 = vpow.pop %v715
          %v717 = vmul.f32 %v687, 1.442695
          %v718 = vpow.pop %v717
          %v719 = vmul.f32 %v688, 1.442695
          %v720 = vpow.pop %v719
          %v721 = vadd.f32 %v690, 1.0
          %v722 = vlog2.pop %v721
          %v723 = vmul.f32 %v722, 0.6931472
          %v724 = vmul.f32 -0.5, %v690
          %v725 = vadd.f32 %v724, 1.0
          %v726 = vmul.f32 %v725, %v690
          %v727 = vand.u32 2147483647, %v690
          %vm728 = vcmp.lt.f32.partialorder %v727, 0.0004427343
          %v729 = vsel %vm728, %v726, %v723
          %v730 = vadd.f32 %v692, 1.0
          %v731 = vlog2.pop %v730
          %v732 = vmul.f32 %v731, 0.6931472
          %v733 = vmul.f32 -0.5, %v692
          %v734 = vadd.f32 %v733, 1.0
          %v735 = vmul.f32 %v734, %v692
          %v736 = vand.u32 2147483647, %v692
          %vm737 = vcmp.lt.f32.partialorder %v736, 0.0004427343
          %v738 = vsel %vm737, %v735, %v732
          %v739 = vadd.f32 %v694, 1.0
          %v740 = vlog2.pop %v739
          %v741 = vmul.f32 %v740, 0.6931472
          %v742 = vmul.f32 -0.5, %v694
          %v743 = vadd.f32 %v742, 1.0
          %v744 = vmul.f32 %v743, %v694
          %v745 = vand.u32 2147483647, %v694
          %vm746 = vcmp.lt.f32.partialorder %v745, 0.0004427343
          %v747 = vsel %vm746, %v744, %v741
          %v748 = vadd.f32 %v696, 1.0
          %v749 = vlog2.pop %v748
          %v750 = vmul.f32 %v749, 0.6931472
          %v751 = vmul.f32 -0.5, %v696
          %v752 = vadd.f32 %v751, 1.0
          %v753 = vmul.f32 %v752, %v696
          %v754 = vand.u32 2147483647, %v696
          %vm755 = vcmp.lt.f32.partialorder %v754, 0.0004427343
          %v756 = vsel %vm755, %v753, %v750
          %v757 = vadd.f32 %v698, 1.0
          %v758 = vlog2.pop %v757
          %v759 = vmul.f32 %v758, 0.6931472
          %v760 = vmul.f32 -0.5, %v698
          %v761 = vadd.f32 %v760, 1.0
          %v762 = vmul.f32 %v761, %v698
          %v763 = vand.u32 2147483647, %v698
          %vm764 = vcmp.lt.f32.partialorder %v763, 0.0004427343
          %v765 = vsel %vm764, %v762, %v759
          %v766 = vadd.f32 %v700, 1.0
          %v767 = vlog2.pop %v766
          %v768 = vmul.f32 %v767, 0.6931472
          %v769 = vmul.f32 -0.5, %v700
          %v770 = vadd.f32 %v769, 1.0
          %v771 = vmul.f32 %v770, %v700
          %v772 = vand.u32 2147483647, %v700
          %vm773 = vcmp.lt.f32.partialorder %v772, 0.0004427343
          %v774 = vsel %vm773, %v771, %v768
          %v775 = vadd.f32 %v702, 1.0
          %v776 = vlog2.pop %v775
          %v777 = vmul.f32 %v776, 0.6931472
          %v778 = vmul.f32 -0.5, %v702
          %v779 = vadd.f32 %v778, 1.0
          %v780 = vmul.f32 %v779, %v702
          %v781 = vand.u32 2147483647, %v702
          %vm782 = vcmp.lt.f32.partialorder %v781, 0.0004427343
          %v783 = vsel %vm782, %v780, %v777
          %v784 = vadd.f32 %v704, 1.0
          %v785 = vlog2.pop %v784
          %v786 = vmul.f32 %v785, 0.6931472
          %v787 = vmul.f32 -0.5, %v704
          %v788 = vadd.f32 %v787, 1.0
          %v789 = vmul.f32 %v788, %v704
          %v790 = vand.u32 2147483647, %v704
          %vm791 = vcmp.lt.f32.partialorder %v790, 0.0004427343
          %v792 = vsel %vm791, %v789, %v786
          %v793 = vadd.f32 %v706, 1.0
          %v794 = vlog2.pop %v793
          %v795 = vmul.f32 %v794, 0.6931472
          %v796 = vmul.f32 -0.5, %v706
          %v797 = vadd.f32 %v796, 1.0
          %v798 = vmul.f32 %v797, %v706
          %v799 = vand.u32 2147483647, %v706
          %vm800 = vcmp.lt.f32.partialorder %v799, 0.0004427343
          %v801 = vsel %vm800, %v798, %v795
          %v802 = vadd.f32 %v708, 1.0
          %v803 = vlog2.pop %v802
          %v804 = vmul.f32 %v803, 0.6931472
          %v805 = vmul.f32 -0.5, %v708
          %v806 = vadd.f32 %v805, 1.0
          %v807 = vmul.f32 %v806, %v708
          %v808 = vand.u32 2147483647, %v708
          %vm809 = vcmp.lt.f32.partialorder %v808, 0.0004427343
          %v810 = vsel %vm809, %v807, %v804
          %v811 = vadd.f32 %v710, 1.0
          %v812 = vlog2.pop %v811
          %v813 = vmul.f32 %v812, 0.6931472
          %v814 = vmul.f32 -0.5, %v710
          %v815 = vadd.f32 %v814, 1.0
          %v816 = vmul.f32 %v815, %v710
          %v817 = vand.u32 2147483647, %v710
          %vm818 = vcmp.lt.f32.partialorder %v817, 0.0004427343
          %v819 = vsel %vm818, %v816, %v813
          %v820 = vadd.f32 %v712, 1.0
          %v821 = vlog2.pop %v820
          %v822 = vmul.f32 %v821, 0.6931472
          %v823 = vmul.f32 -0.5, %v712
          %v824 = vadd.f32 %v823, 1.0
          %v825 = vmul.f32 %v824, %v712
          %v826 = vand.u32 2147483647, %v712
          %vm827 = vcmp.lt.f32.partialorder %v826, 0.0004427343
          %v828 = vsel %vm827, %v825, %v822
          %v829 = vadd.f32 %v714, 1.0
          %v830 = vlog2.pop %v829
          %v831 = vmul.f32 %v830, 0.6931472
          %v832 = vmul.f32 -0.5, %v714
          %v833 = vadd.f32 %v832, 1.0
          %v834 = vmul.f32 %v833, %v714
          %v835 = vand.u32 2147483647, %v714
          %vm836 = vcmp.lt.f32.partialorder %v835, 0.0004427343
          %v837 = vsel %vm836, %v834, %v831
          %v838 = vadd.f32 %v716, 1.0
          %v839 = vlog2.pop %v838
          %v840 = vmul.f32 %v839, 0.6931472
          %v841 = vmul.f32 -0.5, %v716
          %v842 = vadd.f32 %v841, 1.0
          %v843 = vmul.f32 %v842, %v716
          %v844 = vand.u32 2147483647, %v716
          %vm845 = vcmp.lt.f32.partialorder %v844, 0.0004427343
          %v846 = vsel %vm845, %v843, %v840
          %v847 = vadd.f32 %v718, 1.0
          %v848 = vlog2.pop %v847
          %v849 = vmul.f32 %v848, 0.6931472
          %v850 = vmul.f32 -0.5, %v718
          %v851 = vadd.f32 %v850, 1.0
          %v852 = vmul.f32 %v851, %v718
          %v853 = vand.u32 2147483647, %v718
          %vm854 = vcmp.lt.f32.partialorder %v853, 0.0004427343
          %v855 = vsel %vm854, %v852, %v849
          %v856 = vadd.f32 %v720, 1.0
          %v857 = vlog2.pop %v856
          %v858 = vmul.f32 %v857, 0.6931472
          %v859 = vmul.f32 -0.5, %v720
          %v860 = vadd.f32 %v859, 1.0
          %v861 = vmul.f32 %v860, %v720
          %v862 = vand.u32 2147483647, %v720
          %vm863 = vcmp.lt.f32.partialorder %v862, 0.0004427343
          %v864 = vsel %vm863, %v861, %v858
          %v865 = vadd.f32 %v641, %v729
          %v866 = vadd.f32 %v642, %v738
          %v867 = vadd.f32 %v643, %v747
          %v868 = vadd.f32 %v644, %v756
          %v869 = vadd.f32 %v645, %v765
          %v870 = vadd.f32 %v646, %v774
          %v871 = vadd.f32 %v647, %v783
          %v872 = vadd.f32 %v648, %v792
          %v873 = vadd.f32 %v649, %v801
          %v874 = vadd.f32 %v650, %v810
          %v875 = vadd.f32 %v651, %v819
          %v876 = vadd.f32 %v652, %v828
          %v877 = vadd.f32 %v653, %v837
          %v878 = vadd.f32 %v654, %v846
          %v879 = vadd.f32 %v655, %v855
          %v880 = vadd.f32 %v656, %v864
          %v881 = vmul.f32 %v474, %v865
          %v882 = vmul.f32 %v475, %v866
          %v883 = vmul.f32 %v476, %v867
          %v884 = vmul.f32 %v477, %v868
          %v885 = vmul.f32 %v478, %v869
          %v886 = vmul.f32 %v479, %v870
          %v887 = vmul.f32 %v480, %v871
          %v888 = vmul.f32 %v481, %v872
          %v889 = vmul.f32 %v482, %v873
          %v890 = vmul.f32 %v483, %v874
          %v891 = vmul.f32 %v484, %v875
          %v892 = vmul.f32 %v485, %v876
          %v893 = vmul.f32 %v486, %v877
          %v894 = vmul.f32 %v487, %v878
          %v895 = vmul.f32 %v488, %v879
          %v896 = vmul.f32 %v489, %v880
          %v897 = vadd.f32 %v881, %v882
          %v898 = vadd.f32 %v897, %v883
          %v899 = vadd.f32 %v898, %v884
          %v900 = vadd.f32 %v899, %v885
          %v901 = vadd.f32 %v900, %v886
          %v902 = vadd.f32 %v901, %v887
          %v903 = vadd.f32 %v902, %v888
          %v904 = vadd.f32 %v903, %v889
          %v905 = vadd.f32 %v904, %v890
          %v906 = vadd.f32 %v905, %v891
          %v907 = vadd.f32 %v906, %v892
          %v908 = vadd.f32 %v907, %v893
          %v909 = vadd.f32 %v908, %v894
          %v910 = vadd.f32 %v909, %v895
          %v911 = vadd.f32 %v910, %v896
          %v912 = vrot.slane %v911, 4
          %v913 = vadd.f32 %v911, %v912
          %v914 = vrot.slane %v913, 2
          %v915 = vadd.f32 %v913, %v914
          %v916 = vrot.slane %v915, 1
          %v917 = vadd.f32 %v915, %v916
          %v918 = vadd.f32 %v624, %v917
          %vm919 = vcmask 0
          %920 = vst.msk [vmem:[#allocation4] sm:$0x1] %vm919, %v918
          %v921 = vld [vmem:[#allocation5] sm:$0x1]
          %v922 = vmax.f32 %v593, 0.0
          %v923 = vmax.f32 %v595, 0.0
          %v924 = vmax.f32 %v597, 0.0
          %v925 = vmax.f32 %v599, 0.0
          %v926 = vmax.f32 %v601, 0.0
          %v927 = vmax.f32 %v603, 0.0
          %v928 = vmax.f32 %v605, 0.0
          %v929 = vmax.f32 %v607, 0.0
          %v930 = vmax.f32 %v609, 0.0
          %v931 = vmax.f32 %v611, 0.0
          %v932 = vmax.f32 %v613, 0.0
          %v933 = vmax.f32 %v615, 0.0
          %v934 = vmax.f32 %v617, 0.0
          %v935 = vmax.f32 %v619, 0.0
          %v936 = vmax.f32 %v621, 0.0
          %v937 = vmax.f32 %v623, 0.0
          %v938 = vand.u32 2147483647, %v593
          %v939 = vand.u32 2147483647, %v595
          %v940 = vand.u32 2147483647, %v597
          %v941 = vand.u32 2147483647, %v599
          %v942 = vand.u32 2147483647, %v601
          %v943 = vand.u32 2147483647, %v603
          %v944 = vand.u32 2147483647, %v605
          %v945 = vand.u32 2147483647, %v607
          %v946 = vand.u32 2147483647, %v609
          %v947 = vand.u32 2147483647, %v611
          %v948 = vand.u32 2147483647, %v613
          %v949 = vand.u32 2147483647, %v615
          %v950 = vand.u32 2147483647, %v617
          %v951 = vand.u32 2147483647, %v619
          %v952 = vand.u32 2147483647, %v621
          %v953 = vand.u32 2147483647, %v623
          %v954 = vsub.f32 0.0, %v938
          %v955 = vsub.f32 0.0, %v939
          %v956 = vsub.f32 0.0, %v940
          %v957 = vsub.f32 0.0, %v941
          %v958 = vsub.f32 0.0, %v942
          %v959 = vsub.f32 0.0, %v943
          %v960 = vsub.f32 0.0, %v944
          %v961 = vsub.f32 0.0, %v945
          %v962 = vsub.f32 0.0, %v946
          %v963 = vsub.f32 0.0, %v947
          %v964 = vsub.f32 0.0, %v948
          %v965 = vsub.f32 0.0, %v949
          %v966 = vsub.f32 0.0, %v950
          %v967 = vsub.f32 0.0, %v951
          %v968 = vsub.f32 0.0, %v952
          %v969 = vsub.f32 0.0, %v953
          %v970 = vmul.f32 %v954, 1.442695
          %v971 = vpow.pop %v970
          %v972 = vmul.f32 %v955, 1.442695
          %v973 = vpow.pop %v972
          %v974 = vmul.f32 %v956, 1.442695
          %v975 = vpow.pop %v974
          %v976 = vmul.f32 %v957, 1.442695
          %v977 = vpow.pop %v976
          %v978 = vmul.f32 %v958, 1.442695
          %v979 = vpow.pop %v978
          %v980 = vmul.f32 %v959, 1.442695
          %v981 = vpow.pop %v980
          %v982 = vmul.f32 %v960, 1.442695
          %v983 = vpow.pop %v982
          %v984 = vmul.f32 %v961, 1.442695
          %v985 = vpow.pop %v984
          %v986 = vmul.f32 %v962, 1.442695
          %v987 = vpow.pop %v986
          %v988 = vmul.f32 %v963, 1.442695
          %v989 = vpow.pop %v988
          %v990 = vmul.f32 %v964, 1.442695
          %v991 = vpow.pop %v990
          %v992 = vmul.f32 %v965, 1.442695
          %v993 = vpow.pop %v992
          %v994 = vmul.f32 %v966, 1.442695
          %v995 = vpow.pop %v994
          %v996 = vmul.f32 %v967, 1.442695
          %v997 = vpow.pop %v996
          %v998 = vmul.f32 %v968, 1.442695
          %v999 = vpow.pop %v998
          %v1000 = vmul.f32 %v969, 1.442695
          %v1001 = vpow.pop %v1000
          %v1002 = vadd.f32 %v971, 1.0
          %v1003 = vlog2.pop %v1002
          %v1004 = vmul.f32 %v1003, 0.6931472
          %v1005 = vmul.f32 -0.5, %v971
          %v1006 = vadd.f32 %v1005, 1.0
          %v1007 = vmul.f32 %v1006, %v971
          %v1008 = vand.u32 2147483647, %v971
          %vm1009 = vcmp.lt.f32.partialorder %v1008, 0.0004427343
          %v1010 = vsel %vm1009, %v1007, %v1004
          %v1011 = vadd.f32 %v973, 1.0
          %v1012 = vlog2.pop %v1011
          %v1013 = vmul.f32 %v1012, 0.6931472
          %v1014 = vmul.f32 -0.5, %v973
          %v1015 = vadd.f32 %v1014, 1.0
          %v1016 = vmul.f32 %v1015, %v973
          %v1017 = vand.u32 2147483647, %v973
          %vm1018 = vcmp.lt.f32.partialorder %v1017, 0.0004427343
          %v1019 = vsel %vm1018, %v1016, %v1013
          %v1020 = vadd.f32 %v975, 1.0
          %v1021 = vlog2.pop %v1020
          %v1022 = vmul.f32 %v1021, 0.6931472
          %v1023 = vmul.f32 -0.5, %v975
          %v1024 = vadd.f32 %v1023, 1.0
          %v1025 = vmul.f32 %v1024, %v975
          %v1026 = vand.u32 2147483647, %v975
          %vm1027 = vcmp.lt.f32.partialorder %v1026, 0.0004427343
          %v1028 = vsel %vm1027, %v1025, %v1022
          %v1029 = vadd.f32 %v977, 1.0
          %v1030 = vlog2.pop %v1029
          %v1031 = vmul.f32 %v1030, 0.6931472
          %v1032 = vmul.f32 -0.5, %v977
          %v1033 = vadd.f32 %v1032, 1.0
          %v1034 = vmul.f32 %v1033, %v977
          %v1035 = vand.u32 2147483647, %v977
          %vm1036 = vcmp.lt.f32.partialorder %v1035, 0.0004427343
          %v1037 = vsel %vm1036, %v1034, %v1031
          %v1038 = vadd.f32 %v979, 1.0
          %v1039 = vlog2.pop %v1038
          %v1040 = vmul.f32 %v1039, 0.6931472
          %v1041 = vmul.f32 -0.5, %v979
          %v1042 = vadd.f32 %v1041, 1.0
          %v1043 = vmul.f32 %v1042, %v979
          %v1044 = vand.u32 2147483647, %v979
          %vm1045 = vcmp.lt.f32.partialorder %v1044, 0.0004427343
          %v1046 = vsel %vm1045, %v1043, %v1040
          %v1047 = vadd.f32 %v981, 1.0
          %v1048 = vlog2.pop %v1047
          %v1049 = vmul.f32 %v1048, 0.6931472
          %v1050 = vmul.f32 -0.5, %v981
          %v1051 = vadd.f32 %v1050, 1.0
          %v1052 = vmul.f32 %v1051, %v981
          %v1053 = vand.u32 2147483647, %v981
          %vm1054 = vcmp.lt.f32.partialorder %v1053, 0.0004427343
          %v1055 = vsel %vm1054, %v1052, %v1049
          %v1056 = vadd.f32 %v983, 1.0
          %v1057 = vlog2.pop %v1056
          %v1058 = vmul.f32 %v1057, 0.6931472
          %v1059 = vmul.f32 -0.5, %v983
          %v1060 = vadd.f32 %v1059, 1.0
          %v1061 = vmul.f32 %v1060, %v983
          %v1062 = vand.u32 2147483647, %v983
          %vm1063 = vcmp.lt.f32.partialorder %v1062, 0.0004427343
          %v1064 = vsel %vm1063, %v1061, %v1058
          %v1065 = vadd.f32 %v985, 1.0
          %v1066 = vlog2.pop %v1065
          %v1067 = vmul.f32 %v1066, 0.6931472
          %v1068 = vmul.f32 -0.5, %v985
          %v1069 = vadd.f32 %v1068, 1.0
          %v1070 = vmul.f32 %v1069, %v985
          %v1071 = vand.u32 2147483647, %v985
          %vm1072 = vcmp.lt.f32.partialorder %v1071, 0.0004427343
          %v1073 = vsel %vm1072, %v1070, %v1067
          %v1074 = vadd.f32 %v987, 1.0
          %v1075 = vlog2.pop %v1074
          %v1076 = vmul.f32 %v1075, 0.6931472
          %v1077 = vmul.f32 -0.5, %v987
          %v1078 = vadd.f32 %v1077, 1.0
          %v1079 = vmul.f32 %v1078, %v987
          %v1080 = vand.u32 2147483647, %v987
          %vm1081 = vcmp.lt.f32.partialorder %v1080, 0.0004427343
          %v1082 = vsel %vm1081, %v1079, %v1076
          %v1083 = vadd.f32 %v989, 1.0
          %v1084 = vlog2.pop %v1083
          %v1085 = vmul.f32 %v1084, 0.6931472
          %v1086 = vmul.f32 -0.5, %v989
          %v1087 = vadd.f32 %v1086, 1.0
          %v1088 = vmul.f32 %v1087, %v989
          %v1089 = vand.u32 2147483647, %v989
          %vm1090 = vcmp.lt.f32.partialorder %v1089, 0.0004427343
          %v1091 = vsel %vm1090, %v1088, %v1085
          %v1092 = vadd.f32 %v991, 1.0
          %v1093 = vlog2.pop %v1092
          %v1094 = vmul.f32 %v1093, 0.6931472
          %v1095 = vmul.f32 -0.5, %v991
          %v1096 = vadd.f32 %v1095, 1.0
          %v1097 = vmul.f32 %v1096, %v991
          %v1098 = vand.u32 2147483647, %v991
          %vm1099 = vcmp.lt.f32.partialorder %v1098, 0.0004427343
          %v1100 = vsel %vm1099, %v1097, %v1094
          %v1101 = vadd.f32 %v993, 1.0
          %v1102 = vlog2.pop %v1101
          %v1103 = vmul.f32 %v1102, 0.6931472
          %v1104 = vmul.f32 -0.5, %v993
          %v1105 = vadd.f32 %v1104, 1.0
          %v1106 = vmul.f32 %v1105, %v993
          %v1107 = vand.u32 2147483647, %v993
          %vm1108 = vcmp.lt.f32.partialorder %v1107, 0.0004427343
          %v1109 = vsel %vm1108, %v1106, %v1103
          %v1110 = vadd.f32 %v995, 1.0
          %v1111 = vlog2.pop %v1110
          %v1112 = vmul.f32 %v1111, 0.6931472
          %v1113 = vmul.f32 -0.5, %v995
          %v1114 = vadd.f32 %v1113, 1.0
          %v1115 = vmul.f32 %v1114, %v995
          %v1116 = vand.u32 2147483647, %v995
          %vm1117 = vcmp.lt.f32.partialorder %v1116, 0.0004427343
          %v1118 = vsel %vm1117, %v1115, %v1112
          %v1119 = vadd.f32 %v997, 1.0
          %v1120 = vlog2.pop %v1119
          %v1121 = vmul.f32 %v1120, 0.6931472
          %v1122 = vmul.f32 -0.5, %v997
          %v1123 = vadd.f32 %v1122, 1.0
          %v1124 = vmul.f32 %v1123, %v997
          %v1125 = vand.u32 2147483647, %v997
          %vm1126 = vcmp.lt.f32.partialorder %v1125, 0.0004427343
          %v1127 = vsel %vm1126, %v1124, %v1121
          %v1128 = vadd.f32 %v999, 1.0
          %v1129 = vlog2.pop %v1128
          %v1130 = vmul.f32 %v1129, 0.6931472
          %v1131 = vmul.f32 -0.5, %v999
          %v1132 = vadd.f32 %v1131, 1.0
          %v1133 = vmul.f32 %v1132, %v999
          %v1134 = vand.u32 2147483647, %v999
          %vm1135 = vcmp.lt.f32.partialorder %v1134, 0.0004427343
          %v1136 = vsel %vm1135, %v1133, %v1130
          %v1137 = vadd.f32 %v1001, 1.0
          %v1138 = vlog2.pop %v1137
          %v1139 = vmul.f32 %v1138, 0.6931472
          %v1140 = vmul.f32 -0.5, %v1001
          %v1141 = vadd.f32 %v1140, 1.0
          %v1142 = vmul.f32 %v1141, %v1001
          %v1143 = vand.u32 2147483647, %v1001
          %vm1144 = vcmp.lt.f32.partialorder %v1143, 0.0004427343
          %v1145 = vsel %vm1144, %v1142, %v1139
          %v1146 = vadd.f32 %v922, %v1010
          %v1147 = vadd.f32 %v923, %v1019
          %v1148 = vadd.f32 %v924, %v1028
          %v1149 = vadd.f32 %v925, %v1037
          %v1150 = vadd.f32 %v926, %v1046
          %v1151 = vadd.f32 %v927, %v1055
          %v1152 = vadd.f32 %v928, %v1064
          %v1153 = vadd.f32 %v929, %v1073
          %v1154 = vadd.f32 %v930, %v1082
          %v1155 = vadd.f32 %v931, %v1091
          %v1156 = vadd.f32 %v932, %v1100
          %v1157 = vadd.f32 %v933, %v1109
          %v1158 = vadd.f32 %v934, %v1118
          %v1159 = vadd.f32 %v935, %v1127
          %v1160 = vadd.f32 %v936, %v1136
          %v1161 = vadd.f32 %v937, %v1145
          %v1162 = vmul.f32 %v474, %v1146
          %v1163 = vmul.f32 %v475, %v1147
          %v1164 = vmul.f32 %v476, %v1148
          %v1165 = vmul.f32 %v477, %v1149
          %v1166 = vmul.f32 %v478, %v1150
          %v1167 = vmul.f32 %v479, %v1151
          %v1168 = vmul.f32 %v480, %v1152
          %v1169 = vmul.f32 %v481, %v1153
          %v1170 = vmul.f32 %v482, %v1154
          %v1171 = vmul.f32 %v483, %v1155
          %v1172 = vmul.f32 %v484, %v1156
          %v1173 = vmul.f32 %v485, %v1157
          %v1174 = vmul.f32 %v486, %v1158
          %v1175 = vmul.f32 %v487, %v1159
          %v1176 = vmul.f32 %v488, %v1160
          %v1177 = vmul.f32 %v489, %v1161
          %v1178 = vadd.f32 %v1162, %v1163
          %v1179 = vadd.f32 %v1178, %v1164
          %v1180 = vadd.f32 %v1179, %v1165
          %v1181 = vadd.f32 %v1180, %v1166
          %v1182 = vadd.f32 %v1181, %v1167
          %v1183 = vadd.f32 %v1182, %v1168
          %v1184 = vadd.f32 %v1183, %v1169
          %v1185 = vadd.f32 %v1184, %v1170
          %v1186 = vadd.f32 %v1185, %v1171
          %v1187 = vadd.f32 %v1186, %v1172
          %v1188 = vadd.f32 %v1187, %v1173
          %v1189 = vadd.f32 %v1188, %v1174
          %v1190 = vadd.f32 %v1189, %v1175
          %v1191 = vadd.f32 %v1190, %v1176
          %v1192 = vadd.f32 %v1191, %v1177
          %v1193 = vrot.slane %v1192, 4
          %v1194 = vadd.f32 %v1192, %v1193
          %v1195 = vrot.slane %v1194, 2
          %v1196 = vadd.f32 %v1194, %v1195
          %v1197 = vrot.slane %v1196, 1
          %v1198 = vadd.f32 %v1196, %v1197
          %v1199 = vadd.f32 %v921, %v1198
          %1200 = vst.msk [vmem:[#allocation5] sm:$0x1] %vm919, %v1199
        $region48: #{dgi_forward.9} parent=31 // pred_fallthru
          _
        %p1201 = scmp.eq.s32.totalorder %s20, 1
        %p1202 = pnand %p300, %p1201
        %p1203 = pneg %p1202
        // Predicated region
        $region49: #{dgi_forward.9} parent=31 // pred_check
          _
        $region50: #{dgi_forward.9} parent=31 // pred_check_branch
          %1205 = sbr.rel (%p1202) target = $region52
        $region51: #{dgi_forward.9} parent=31 // pred_region
          %v1206 = vld [vmem:[#allocation4] sm:$0x1]
          %v1207 = vld [vmem:[#allocation5] sm:$0x1]
          %v1208 = vadd.f32 %v1206, %v1207
          %v1209 = vmul.f32 %v1208, 0.005
          %vm1210 = vcmask 0
          %1211 = vst.msk [vmem:[#allocation6] sm:$0x1] %vm1210, %v1209
        $region52: #{dgi_forward.9} parent=31 // pred_fallthru
          _
        // Predicated region
        $region53: #{dgi_forward.9} parent=31 // pred_check
          %p1212 = pneg %p113
        $region54: #{dgi_forward.9} parent=31 // pred_check_branch
          %1214 = sbr.rel (%p1212) target = $region56
        $region55: #{dgi_forward.9} parent=31 // pred_region
          %s1216 = ssub.s32 16, 16
          %1217 = vsyncadd [#allocation7], %s1216
          %s1219 = sshll.u32 [#allocation6], 4
          %s1220 = int_to_ptr.vmem [resolvable:$true] %s1219
          %1222 = dma.vmem_to_hbm [thread:$0]  %s1220, 16, %s3, [#allocation7]
        $region56: #{dgi_forward.9} parent=31 // pred_fallthru
          _
        // Predicated region
        $region57: #{dgi_forward.9} parent=31 // pred_check
          %p1223 = pneg %p113
        $region58: #{dgi_forward.9} parent=31 // pred_check_branch
          %1225 = sbr.rel (%p1223) target = $region60
        $region59: #{dgi_forward.9} parent=31 // pred_region
          %1226 = dma.done [#allocation7], 16
        $region60: #{dgi_forward.9} parent=31 // pred_fallthru
          _
      $region32: #{dgi_forward.9} parent=5 // pred_fallthru
        _
      %p1227 = scmp.le.s32.totalorder 2, %s10
      // Predicated region
      $region61: #{dgi_forward.9} parent=5 // pred_check
        %p1228 = pneg %p1227
      $region62: #{dgi_forward.9} parent=5 // pred_check_branch
        %1230 = sbr.rel (%p1228) target = $region64
      $region63: #{dgi_forward.9} parent=5 // pred_region
        %s1231 = ssub.s32 %s10, 2
      $region64: #{dgi_forward.9} parent=5 // pred_fallthru
        _
    $region6: #{dgi_forward.9} parent=1 // loop_footer
      %s14 = sadd.s32 1, %s10
    $region7: #{dgi_forward.9} parent=1 // loop_footer_branch
      %9 = sbr.rel target = $region3
    $region8: #{dgi_forward.9} parent=1 // loop_exit
      _
    %1232 = vsyncpa [#allocation7], 1
    %s1233 = scalar_lea.sflag [#allocation7], 1
    %1234 = vsyncpa %s1233, 1

</llo_original>
